<compile_context>
chip_gen: v7x
topology: tpu7x:2x2x1
jax: 0.10.0
libtpu: 0.0.40
codegen_flags: <defaults>
</compile_context>

<pallas_src>
import functools
import math

import jax
import jax.numpy as jnp
from jax.experimental import pallas as pl
from jax.experimental.pallas import tpu as pltpu

_VMEM = pl.BlockSpec(memory_space=pltpu.MemorySpace.VMEM)


# -----------------------------------------------------------------------------
# Fused whole-model kernel (embeddings-LN -> L transformer layers -> pooler -> classifier)
# -----------------------------------------------------------------------------
def _fused_bert_kernel(
    emb_ref, eg_ref, eb_ref,
    wq_ref, bq_ref, wk_ref, bk_ref, wv_ref, bv_ref, wo_ref, bo_ref,
    ln1g_ref, ln1b_ref, w1_ref, b1_ref, w2_ref, b2_ref, ln2g_ref, ln2b_ref,
    pool_w_ref, pool_b_ref, cls_w_ref, cls_b_ref,
    out_ref,
    *, num_layers, num_heads, batch, seq, eps):
    D = eg_ref.shape[-1]
    dh = D // num_heads
    BS = batch * seq

    def layer_norm(x, g, b):
        u = jnp.mean(x, axis=-1, keepdims=True)
        xc = x - u
        var = jnp.mean(xc * xc, axis=-1, keepdims=True)
        return g * (xc * jax.lax.rsqrt(var + eps)) + b

    def mm(a, w):
        # bf16 MXU operands, f32 accumulation.  Elementwise math elsewhere stays f32.
        return jnp.dot(a.astype(w.dtype), w, preferred_element_type=jnp.float32)

    # embeddings -> LayerNorm
    x = layer_norm(emb_ref[...].astype(jnp.float32), eg_ref[...], eb_ref[...])   # (BS, D)

    for l in range(num_layers):
        # ---- multi-head self-attention: batch handled by batched einsums, heads by a
        #      short unrolled loop whose outputs are ACCUMULATED (no concats) ----
        attn = bo_ref[l]                                            # (1, D), broadcasts
        for h in range(num_heads):
            # head-stacked weights => per-head projections at lane offset 0, no slicing
            qh = (mm(x, wq_ref[l, h]) + bq_ref[l, h]).reshape(batch, seq, dh)
            kh = (mm(x, wk_ref[l, h]) + bk_ref[l, h]).reshape(batch, seq, dh)
            vh = (mm(x, wv_ref[l, h]) + bv_ref[l, h]).reshape(batch, seq, dh)

            # 1/sqrt(dh) already folded into wq at init time.
            s = jnp.einsum("bqd,bkd->bqk", qh.astype(jnp.bfloat16),
                           kh.astype(jnp.bfloat16),
                           preferred_element_type=jnp.float32)       # (B, S, S)
            m = jnp.max(s, axis=-1, keepdims=True)
            p = jnp.exp(s - m)
            p = p * pl.reciprocal(jnp.sum(p, axis=-1, keepdims=True), approx=True)
            ctx = jnp.einsum("bqk,bkd->bqd", p.astype(jnp.bfloat16),
                             vh.astype(jnp.bfloat16),
                             preferred_element_type=jnp.float32)     # (B, S, dh)

            # head merge without concatenation: ctx @ Wo == sum_h ctx_h @ Wo_h
            attn = attn + mm(ctx.reshape(BS, dh), wo_ref[l, h])      # (BS, D)

        x = layer_norm(x + attn, ln1g_ref[l], ln1b_ref[l])           # residual fused in LN

        # ---- FFN ----
        h1 = mm(x, w1_ref[l]) + b1_ref[l]
        # TODO(synk): HF BERT uses exact erf-GELU; tanh approximation used here.
        h1 = jax.nn.gelu(h1, approximate=True)
        ffn = mm(h1, w2_ref[l]) + b2_ref[l]
        x = layer_norm(x + ffn, ln2g_ref[l], ln2b_ref[l])            # residual fused in LN

    # ---- pooler: tanh(dense(CLS)) == bert(sen)[1] ----
    # CLS rows via one reshape + static slice (no per-batch slices + concat).
    cls = x.reshape(batch, seq, D)[:, 0, :]                          # (B, D)
    pooled = jnp.tanh(mm(cls, pool_w_ref[...]) + pool_b_ref[...])

    # ---- self._F = Dropout(identity at inference) -> Linear(bert_dim, class_num) ----
    # classifier weights zero-padded to 128 lanes for an unmasked, lane-dense store.
    logits = mm(pooled, cls_w_ref[...]) + cls_b_ref[...]
    out_ref[...] = logits.astype(out_ref.dtype)


# -----------------------------------------------------------------------------
# Config + deterministic parameter init
# -----------------------------------------------------------------------------
class Cfg:
    vocab_size = 100
    max_pos = 16
    type_vocab = 2
    bert_dim = 32          # hidden size
    num_layers = 2
    num_heads = 4
    intermediate = 64
    class_num = 3
    batch = 2
    seq = 8
    dropout = 0.1          # inference -> identity
    lane_pad = 128         # classifier output padded to full lane width


def init_params(key, cfg):
    D, I, L, H = cfg.bert_dim, cfg.intermediate, cfg.num_layers, cfg.num_heads
    dh = D // H
    scale = 1.0 / math.sqrt(dh)

    def nrm(k, shape, s=0.02):
        return s * jax.random.normal(k, shape, dtype=jnp.float32)

    keys = iter(jax.random.split(key, 128))

    def split_cols(w):     # (D, D) -> (H, D, dh): head-stacked output columns
        return jnp.stack([w[:, h * dh:(h + 1) * dh] for h in range(H)], axis=0)

    def split_rows(w):     # (D, D) -> (H, dh, D): head-stacked input rows
        return jnp.stack([w[h * dh:(h + 1) * dh, :] for h in range(H)], axis=0)

    wq, wk, wv, wo, w1, w2 = [], [], [], [], [], []
    for _ in range(L):
        # fold the 1/sqrt(dh) attention scale into Wq (bq is zero so it needs no scaling)
        wq.append(split_cols(nrm(next(keys), (D, D))) * scale)
        wk.append(split_cols(nrm(next(keys), (D, D))))
        wv.append(split_cols(nrm(next(keys), (D, D))))
        wo.append(split_rows(nrm(next(keys), (D, D))))
        w1.append(nrm(next(keys), (D, I)))
        w2.append(nrm(next(keys), (I, D)))

    bf16 = jnp.bfloat16
    stacked = {
        "wq": jnp.stack(wq).astype(bf16),           # (L, H, D, dh), scale folded in
        "wk": jnp.stack(wk).astype(bf16),           # (L, H, D, dh)
        "wv": jnp.stack(wv).astype(bf16),           # (L, H, D, dh)
        "wo": jnp.stack(wo).astype(bf16),           # (L, H, dh, D)
        "bq": jnp.zeros((L, H, 1, dh), jnp.float32),
        "bk": jnp.zeros((L, H, 1, dh), jnp.float32),
        "bv": jnp.zeros((L, H, 1, dh), jnp.float32),
        "bo": jnp.zeros((L, 1, D), jnp.float32),
        "ln1_g": jnp.ones((L, 1, D), jnp.float32),
        "ln1_b": jnp.zeros((L, 1, D), jnp.float32),
        "w1": jnp.stack(w1).astype(bf16),           # (L, D, I)
        "b1": jnp.zeros((L, 1, I), jnp.float32),
        "w2": jnp.stack(w2).astype(bf16),           # (L, I, D)
        "b2": jnp.zeros((L, 1, D), jnp.float32),
        "ln2_g": jnp.ones((L, 1, D), jnp.float32),
        "ln2_b": jnp.zeros((L, 1, D), jnp.float32),
    }

    cls_w = nrm(next(keys), (D, cfg.class_num))
    cls_w_pad = jnp.zeros((D, cfg.lane_pad), jnp.float32).at[:, :cfg.class_num].set(cls_w)

    return {
        "word_emb": nrm(next(keys), (cfg.vocab_size, D)),
        "pos_emb": nrm(next(keys), (cfg.max_pos, D)),
        "type_emb": nrm(next(keys), (cfg.type_vocab, D)),
        "emb_ln_g": jnp.ones((1, D), jnp.float32),
        "emb_ln_b": jnp.zeros((1, D), jnp.float32),
        "pool_w": nrm(next(keys), (D, D)).astype(bf16),
        "pool_b": jnp.zeros((1, D), jnp.float32),
        "cls_w_pad": cls_w_pad.astype(bf16),
        "cls_b_pad": jnp.zeros((1, cfg.lane_pad), jnp.float32),
        "stacked": stacked,
    }


# -----------------------------------------------------------------------------
# Forward pass: embedding gather in JAX glue, everything else in ONE pallas_call
# -----------------------------------------------------------------------------
def bert_forward(params, token_ids, cfg):
    B, S = token_ids.shape
    D = cfg.bert_dim

    # TODO(synk): the embedding gather could move in-kernel via scalar prefetch +
    # pl.Element row gather; at these dims the XLA-side gather is negligible glue.
    emb = (params["word_emb"][token_ids]
           + params["pos_emb"][:S][None, :, :]
           + params["type_emb"][0][None, None, :]).reshape(B * S, D)

    stk = params["stacked"]
    out_pad = pl.pallas_call(
        functools.partial(_fused_bert_kernel,
                          num_layers=cfg.num_layers, num_heads=cfg.num_heads,
                          batch=B, seq=S, eps=1e-12),
        out_shape=jax.ShapeDtypeStruct((B, cfg.lane_pad), jnp.float32),
        in_specs=[_VMEM] * 23,
        out_specs=_VMEM,
    )(emb,
      params["emb_ln_g"], params["emb_ln_b"],
      stk["wq"], stk["bq"], stk["wk"], stk["bk"], stk["wv"], stk["bv"],
      stk["wo"], stk["bo"],
      stk["ln1_g"], stk["ln1_b"], stk["w1"], stk["b1"], stk["w2"], stk["b2"],
      stk["ln2_g"], stk["ln2_b"],
      params["pool_w"], params["pool_b"],
      params["cls_w_pad"], params["cls_b_pad"])

    return out_pad[:, :cfg.class_num]


# -----------------------------------------------------------------------------
if __name__ == "__main__":
    cfg = Cfg()
    key = jax.random.PRNGKey(0)
    pkey, ikey = jax.random.split(key)
    params = init_params(pkey, cfg)

    # input token ids, shape (batch, seq)
    sen = jax.random.randint(ikey, (cfg.batch, cfg.seq), 0, cfg.vocab_size,
                             dtype=jnp.int32)

    logits = jax.jit(functools.partial(bert_forward, cfg=cfg))(params, sen)
    logits = jax.block_until_ready(logits)
    assert logits.shape == (cfg.batch, cfg.class_num)
    assert bool(jnp.all(jnp.isfinite(logits)))
    print("KERNEL_OK")
</pallas_src>

<mosaic_0001>
module attributes {stable_mosaic.version = 11 : i64} {
  func.func @_fused_bert_kernel(%arg0: memref<16x32xf32, #tpu.memory_space<vmem>>, %arg1: memref<1x32xf32, #tpu.memory_space<vmem>>, %arg2: memref<1x32xf32, #tpu.memory_space<vmem>>, %arg3: memref<2x4x32x8xbf16, #tpu.memory_space<vmem>>, %arg4: memref<2x4x1x8xf32, #tpu.memory_space<vmem>>, %arg5: memref<2x4x32x8xbf16, #tpu.memory_space<vmem>>, %arg6: memref<2x4x1x8xf32, #tpu.memory_space<vmem>>, %arg7: memref<2x4x32x8xbf16, #tpu.memory_space<vmem>>, %arg8: memref<2x4x1x8xf32, #tpu.memory_space<vmem>>, %arg9: memref<2x4x8x32xbf16, #tpu.memory_space<vmem>>, %arg10: memref<2x1x32xf32, #tpu.memory_space<vmem>>, %arg11: memref<2x1x32xf32, #tpu.memory_space<vmem>>, %arg12: memref<2x1x32xf32, #tpu.memory_space<vmem>>, %arg13: memref<2x32x64xbf16, #tpu.memory_space<vmem>>, %arg14: memref<2x1x64xf32, #tpu.memory_space<vmem>>, %arg15: memref<2x64x32xbf16, #tpu.memory_space<vmem>>, %arg16: memref<2x1x32xf32, #tpu.memory_space<vmem>>, %arg17: memref<2x1x32xf32, #tpu.memory_space<vmem>>, %arg18: memref<2x1x32xf32, #tpu.memory_space<vmem>>, %arg19: memref<32x32xbf16, #tpu.memory_space<vmem>>, %arg20: memref<1x32xf32, #tpu.memory_space<vmem>>, %arg21: memref<32x128xbf16, #tpu.memory_space<vmem>>, %arg22: memref<1x128xf32, #tpu.memory_space<vmem>>, %arg23: memref<2x128xf32, #tpu.memory_space<vmem>>) attributes {dimension_semantics = [], scalar_prefetch = 0 : i64, scratch_operands = 0 : i64, tpu.core_type = #tpu.core_type<tc>} {
    %c0 = arith.constant 0 : index
    %c0_0 = arith.constant 0 : index
    %0 = vector.load %arg0[%c0, %c0_0] : memref<16x32xf32, #tpu.memory_space<vmem>>, vector<16x32xf32>
    %c0_1 = arith.constant 0 : index
    %c0_2 = arith.constant 0 : index
    %1 = vector.load %arg1[%c0_1, %c0_2] : memref<1x32xf32, #tpu.memory_space<vmem>>, vector<1x32xf32>
    %c0_3 = arith.constant 0 : index
    %c0_4 = arith.constant 0 : index
    %2 = vector.load %arg2[%c0_3, %c0_4] : memref<1x32xf32, #tpu.memory_space<vmem>>, vector<1x32xf32>
    %cst = arith.constant dense<0.000000e+00> : vector<16xf32>
    %3 = vector.multi_reduction <add>, %0, %cst [1] : vector<16x32xf32> to vector<16xf32>
    %4 = vector.shape_cast %3 : vector<16xf32> to vector<16x1xf32>
    %cst_5 = arith.constant 3.200000e+01 : f32
    %5 = vector.broadcast %cst_5 : f32 to vector<16x1xf32>
    %6 = arith.divf %4, %5 : vector<16x1xf32>
    %7 = vector.broadcast %6 : vector<16x1xf32> to vector<16x32xf32>
    %8 = arith.subf %0, %7 : vector<16x32xf32>
    %9 = arith.mulf %8, %8 : vector<16x32xf32>
    %cst_6 = arith.constant dense<0.000000e+00> : vector<16xf32>
    %10 = vector.multi_reduction <add>, %9, %cst_6 [1] : vector<16x32xf32> to vector<16xf32>
    %11 = vector.shape_cast %10 : vector<16xf32> to vector<16x1xf32>
    %cst_7 = arith.constant 3.200000e+01 : f32
    %12 = vector.broadcast %cst_7 : f32 to vector<16x1xf32>
    %13 = arith.divf %11, %12 : vector<16x1xf32>
    %cst_8 = arith.constant 9.99999996E-13 : f32
    %14 = vector.broadcast %cst_8 : f32 to vector<16x1xf32>
    %15 = arith.addf %13, %14 : vector<16x1xf32>
    %16 = math.rsqrt %15 : vector<16x1xf32>
    %17 = vector.broadcast %16 : vector<16x1xf32> to vector<16x32xf32>
    %18 = arith.mulf %8, %17 : vector<16x32xf32>
    %19 = vector.broadcast %1 : vector<1x32xf32> to vector<16x32xf32>
    %20 = arith.mulf %19, %18 : vector<16x32xf32>
    %21 = vector.broadcast %2 : vector<1x32xf32> to vector<16x32xf32>
    %22 = arith.addf %20, %21 : vector<16x32xf32>
    %c0_9 = arith.constant 0 : index
    %c0_10 = arith.constant 0 : index
    %c0_11 = arith.constant 0 : index
    %23 = vector.load %arg10[%c0_9, %c0_10, %c0_11] : memref<2x1x32xf32, #tpu.memory_space<vmem>>, vector<1x1x32xf32>
    %24 = vector.shape_cast %23 : vector<1x1x32xf32> to vector<1x32xf32>
    %c0_12 = arith.constant 0 : index
    %c0_13 = arith.constant 0 : index
    %c0_14 = arith.constant 0 : index
    %c0_15 = arith.constant 0 : index
    %25 = vector.load %arg3[%c0_12, %c0_13, %c0_14, %c0_15] : memref<2x4x32x8xbf16, #tpu.memory_space<vmem>>, vector<1x1x32x8xbf16>
    %26 = vector.shape_cast %25 : vector<1x1x32x8xbf16> to vector<32x8xbf16>
    %27 = arith.truncf %22 : vector<16x32xf32> to vector<16x32xbf16>
    %cst_16 = arith.constant dense<0.000000e+00> : vector<16x8xf32>
    %28 = tpu.matmul %27, %26, %cst_16 {dimension_numbers = #tpu.dot_dimension_numbers<[1], [0], [0], [1], [0, 0, 1, 1], [], []>} : vector<16x32xbf16>, vector<32x8xbf16>, vector<16x8xf32> -> vector<16x8xf32>
    %c0_17 = arith.constant 0 : index
    %c0_18 = arith.constant 0 : index
    %c0_19 = arith.constant 0 : index
    %c0_20 = arith.constant 0 : index
    %29 = vector.load %arg4[%c0_17, %c0_18, %c0_19, %c0_20] : memref<2x4x1x8xf32, #tpu.memory_space<vmem>>, vector<1x1x1x8xf32>
    %30 = vector.shape_cast %29 : vector<1x1x1x8xf32> to vector<1x8xf32>
    %31 = vector.broadcast %30 : vector<1x8xf32> to vector<16x8xf32>
    %32 = arith.addf %28, %31 : vector<16x8xf32>
    %33 = vector.shape_cast %32 : vector<16x8xf32> to vector<2x8x8xf32>
    %c0_21 = arith.constant 0 : index
    %c0_22 = arith.constant 0 : index
    %c0_23 = arith.constant 0 : index
    %c0_24 = arith.constant 0 : index
    %34 = vector.load %arg5[%c0_21, %c0_22, %c0_23, %c0_24] : memref<2x4x32x8xbf16, #tpu.memory_space<vmem>>, vector<1x1x32x8xbf16>
    %35 = vector.shape_cast %34 : vector<1x1x32x8xbf16> to vector<32x8xbf16>
    %36 = arith.truncf %22 : vector<16x32xf32> to vector<16x32xbf16>
    %cst_25 = arith.constant dense<0.000000e+00> : vector<16x8xf32>
    %37 = tpu.matmul %36, %35, %cst_25 {dimension_numbers = #tpu.dot_dimension_numbers<[1], [0], [0], [1], [0, 0, 1, 1], [], []>} : vector<16x32xbf16>, vector<32x8xbf16>, vector<16x8xf32> -> vector<16x8xf32>
    %c0_26 = arith.constant 0 : index
    %c0_27 = arith.constant 0 : index
    %c0_28 = arith.constant 0 : index
    %c0_29 = arith.constant 0 : index
    %38 = vector.load %arg6[%c0_26, %c0_27, %c0_28, %c0_29] : memref<2x4x1x8xf32, #tpu.memory_space<vmem>>, vector<1x1x1x8xf32>
    %39 = vector.shape_cast %38 : vector<1x1x1x8xf32> to vector<1x8xf32>
    %40 = vector.broadcast %39 : vector<1x8xf32> to vector<16x8xf32>
    %41 = arith.addf %37, %40 : vector<16x8xf32>
    %42 = vector.shape_cast %41 : vector<16x8xf32> to vector<2x8x8xf32>
    %c0_30 = arith.constant 0 : index
    %c0_31 = arith.constant 0 : index
    %c0_32 = arith.constant 0 : index
    %c0_33 = arith.constant 0 : index
    %43 = vector.load %arg7[%c0_30, %c0_31, %c0_32, %c0_33] : memref<2x4x32x8xbf16, #tpu.memory_space<vmem>>, vector<1x1x32x8xbf16>
    %44 = vector.shape_cast %43 : vector<1x1x32x8xbf16> to vector<32x8xbf16>
    %45 = arith.truncf %22 : vector<16x32xf32> to vector<16x32xbf16>
    %cst_34 = arith.constant dense<0.000000e+00> : vector<16x8xf32>
    %46 = tpu.matmul %45, %44, %cst_34 {dimension_numbers = #tpu.dot_dimension_numbers<[1], [0], [0], [1], [0, 0, 1, 1], [], []>} : vector<16x32xbf16>, vector<32x8xbf16>, vector<16x8xf32> -> vector<16x8xf32>
    %c0_35 = arith.constant 0 : index
    %c0_36 = arith.constant 0 : index
    %c0_37 = arith.constant 0 : index
    %c0_38 = arith.constant 0 : index
    %47 = vector.load %arg8[%c0_35, %c0_36, %c0_37, %c0_38] : memref<2x4x1x8xf32, #tpu.memory_space<vmem>>, vector<1x1x1x8xf32>
    %48 = vector.shape_cast %47 : vector<1x1x1x8xf32> to vector<1x8xf32>
    %49 = vector.broadcast %48 : vector<1x8xf32> to vector<16x8xf32>
    %50 = arith.addf %46, %49 : vector<16x8xf32>
    %51 = vector.shape_cast %50 : vector<16x8xf32> to vector<2x8x8xf32>
    %52 = arith.truncf %33 : vector<2x8x8xf32> to vector<2x8x8xbf16>
    %53 = arith.truncf %42 : vector<2x8x8xf32> to vector<2x8x8xbf16>
    "tpu.trace_start"() <{level = 10 : i32, message = "bqd,bkd->bqk"}> : () -> ()
    %cst_39 = arith.constant dense<0.000000e+00> : vector<2x8x8xf32>
    %54 = tpu.matmul %52, %53, %cst_39 {dimension_numbers = #tpu.dot_dimension_numbers<[2], [2], [1], [1], [0, 0, 0, 1, 1, 1], [0], [0]>} : vector<2x8x8xbf16>, vector<2x8x8xbf16>, vector<2x8x8xf32> -> vector<2x8x8xf32>
    "tpu.trace_stop"() : () -> ()
    %cst_40 = arith.constant dense<0xFF800000> : vector<2x8xf32>
    %55 = vector.multi_reduction <maximumf>, %54, %cst_40 [2] : vector<2x8x8xf32> to vector<2x8xf32>
    %56 = vector.shape_cast %55 : vector<2x8xf32> to vector<2x8x1xf32>
    %57 = vector.broadcast %56 : vector<2x8x1xf32> to vector<2x8x8xf32>
    %58 = arith.subf %54, %57 : vector<2x8x8xf32>
    %59 = math.exp %58 : vector<2x8x8xf32>
    %cst_41 = arith.constant dense<0.000000e+00> : vector<2x8xf32>
    %60 = vector.multi_reduction <add>, %59, %cst_41 [2] : vector<2x8x8xf32> to vector<2x8xf32>
    %61 = vector.shape_cast %60 : vector<2x8xf32> to vector<2x8x1xf32>
    %62 = tpu.reciprocal %61 {approx = true} : vector<2x8x1xf32> -> vector<2x8x1xf32>
    %63 = vector.broadcast %62 : vector<2x8x1xf32> to vector<2x8x8xf32>
    %64 = arith.mulf %59, %63 : vector<2x8x8xf32>
    %65 = arith.truncf %64 : vector<2x8x8xf32> to vector<2x8x8xbf16>
    %66 = arith.truncf %51 : vector<2x8x8xf32> to vector<2x8x8xbf16>
    "tpu.trace_start"() <{level = 10 : i32, message = "bqk,bkd->bqd"}> : () -> ()
    %cst_42 = arith.constant dense<0.000000e+00> : vector<2x8x8xf32>
    %67 = tpu.matmul %65, %66, %cst_42 {dimension_numbers = #tpu.dot_dimension_numbers<[2], [1], [1], [2], [0, 0, 0, 1, 1, 2], [0], [0]>} : vector<2x8x8xbf16>, vector<2x8x8xbf16>, vector<2x8x8xf32> -> vector<2x8x8xf32>
    "tpu.trace_stop"() : () -> ()
    %68 = vector.shape_cast %67 : vector<2x8x8xf32> to vector<16x8xf32>
    %c0_43 = arith.constant 0 : index
    %c0_44 = arith.constant 0 : index
    %c0_45 = arith.constant 0 : index
    %c0_46 = arith.constant 0 : index
    %69 = vector.load %arg9[%c0_43, %c0_44, %c0_45, %c0_46] : memref<2x4x8x32xbf16, #tpu.memory_space<vmem>>, vector<1x1x8x32xbf16>
    %70 = vector.shape_cast %69 : vector<1x1x8x32xbf16> to vector<8x32xbf16>
    %71 = arith.truncf %68 : vector<16x8xf32> to vector<16x8xbf16>
    %cst_47 = arith.constant dense<0.000000e+00> : vector<16x32xf32>
    %72 = tpu.matmul %71, %70, %cst_47 {dimension_numbers = #tpu.dot_dimension_numbers<[1], [0], [0], [1], [0, 0, 1, 1], [], []>} : vector<16x8xbf16>, vector<8x32xbf16>, vector<16x32xf32> -> vector<16x32xf32>
    %73 = vector.broadcast %24 : vector<1x32xf32> to vector<16x32xf32>
    %74 = arith.addf %73, %72 : vector<16x32xf32>
    %c0_48 = arith.constant 0 : index
    %c1 = arith.constant 1 : index
    %c0_49 = arith.constant 0 : index
    %c0_50 = arith.constant 0 : index
    %75 = vector.load %arg3[%c0_48, %c1, %c0_49, %c0_50] : memref<2x4x32x8xbf16, #tpu.memory_space<vmem>>, vector<1x1x32x8xbf16>
    %76 = vector.shape_cast %75 : vector<1x1x32x8xbf16> to vector<32x8xbf16>
    %77 = arith.truncf %22 : vector<16x32xf32> to vector<16x32xbf16>
    %cst_51 = arith.constant dense<0.000000e+00> : vector<16x8xf32>
    %78 = tpu.matmul %77, %76, %cst_51 {dimension_numbers = #tpu.dot_dimension_numbers<[1], [0], [0], [1], [0, 0, 1, 1], [], []>} : vector<16x32xbf16>, vector<32x8xbf16>, vector<16x8xf32> -> vector<16x8xf32>
    %c0_52 = arith.constant 0 : index
    %c1_53 = arith.constant 1 : index
    %c0_54 = arith.constant 0 : index
    %c0_55 = arith.constant 0 : index
    %79 = vector.load %arg4[%c0_52, %c1_53, %c0_54, %c0_55] : memref<2x4x1x8xf32, #tpu.memory_space<vmem>>, vector<1x1x1x8xf32>
    %80 = vector.shape_cast %79 : vector<1x1x1x8xf32> to vector<1x8xf32>
    %81 = vector.broadcast %80 : vector<1x8xf32> to vector<16x8xf32>
    %82 = arith.addf %78, %81 : vector<16x8xf32>
    %83 = vector.shape_cast %82 : vector<16x8xf32> to vector<2x8x8xf32>
    %c0_56 = arith.constant 0 : index
    %c1_57 = arith.constant 1 : index
    %c0_58 = arith.constant 0 : index
    %c0_59 = arith.constant 0 : index
    %84 = vector.load %arg5[%c0_56, %c1_57, %c0_58, %c0_59] : memref<2x4x32x8xbf16, #tpu.memory_space<vmem>>, vector<1x1x32x8xbf16>
    %85 = vector.shape_cast %84 : vector<1x1x32x8xbf16> to vector<32x8xbf16>
    %86 = arith.truncf %22 : vector<16x32xf32> to vector<16x32xbf16>
    %cst_60 = arith.constant dense<0.000000e+00> : vector<16x8xf32>
    %87 = tpu.matmul %86, %85, %cst_60 {dimension_numbers = #tpu.dot_dimension_numbers<[1], [0], [0], [1], [0, 0, 1, 1], [], []>} : vector<16x32xbf16>, vector<32x8xbf16>, vector<16x8xf32> -> vector<16x8xf32>
    %c0_61 = arith.constant 0 : index
    %c1_62 = arith.constant 1 : index
    %c0_63 = arith.constant 0 : index
    %c0_64 = arith.constant 0 : index
    %88 = vector.load %arg6[%c0_61, %c1_62, %c0_63, %c0_64] : memref<2x4x1x8xf32, #tpu.memory_space<vmem>>, vector<1x1x1x8xf32>
    %89 = vector.shape_cast %88 : vector<1x1x1x8xf32> to vector<1x8xf32>
    %90 = vector.broadcast %89 : vector<1x8xf32> to vector<16x8xf32>
    %91 = arith.addf %87, %90 : vector<16x8xf32>
    %92 = vector.shape_cast %91 : vector<16x8xf32> to vector<2x8x8xf32>
    %c0_65 = arith.constant 0 : index
    %c1_66 = arith.constant 1 : index
    %c0_67 = arith.constant 0 : index
    %c0_68 = arith.constant 0 : index
    %93 = vector.load %arg7[%c0_65, %c1_66, %c0_67, %c0_68] : memref<2x4x32x8xbf16, #tpu.memory_space<vmem>>, vector<1x1x32x8xbf16>
    %94 = vector.shape_cast %93 : vector<1x1x32x8xbf16> to vector<32x8xbf16>
    %95 = arith.truncf %22 : vector<16x32xf32> to vector<16x32xbf16>
    %cst_69 = arith.constant dense<0.000000e+00> : vector<16x8xf32>
    %96 = tpu.matmul %95, %94, %cst_69 {dimension_numbers = #tpu.dot_dimension_numbers<[1], [0], [0], [1], [0, 0, 1, 1], [], []>} : vector<16x32xbf16>, vector<32x8xbf16>, vector<16x8xf32> -> vector<16x8xf32>
    %c0_70 = arith.constant 0 : index
    %c1_71 = arith.constant 1 : index
    %c0_72 = arith.constant 0 : index
    %c0_73 = arith.constant 0 : index
    %97 = vector.load %arg8[%c0_70, %c1_71, %c0_72, %c0_73] : memref<2x4x1x8xf32, #tpu.memory_space<vmem>>, vector<1x1x1x8xf32>
    %98 = vector.shape_cast %97 : vector<1x1x1x8xf32> to vector<1x8xf32>
    %99 = vector.broadcast %98 : vector<1x8xf32> to vector<16x8xf32>
    %100 = arith.addf %96, %99 : vector<16x8xf32>
    %101 = vector.shape_cast %100 : vector<16x8xf32> to vector<2x8x8xf32>
    %102 = arith.truncf %83 : vector<2x8x8xf32> to vector<2x8x8xbf16>
    %103 = arith.truncf %92 : vector<2x8x8xf32> to vector<2x8x8xbf16>
    "tpu.trace_start"() <{level = 10 : i32, message = "bqd,bkd->bqk"}> : () -> ()
    %cst_74 = arith.constant dense<0.000000e+00> : vector<2x8x8xf32>
    %104 = tpu.matmul %102, %103, %cst_74 {dimension_numbers = #tpu.dot_dimension_numbers<[2], [2], [1], [1], [0, 0, 0, 1, 1, 1], [0], [0]>} : vector<2x8x8xbf16>, vector<2x8x8xbf16>, vector<2x8x8xf32> -> vector<2x8x8xf32>
    "tpu.trace_stop"() : () -> ()
    %cst_75 = arith.constant dense<0xFF800000> : vector<2x8xf32>
    %105 = vector.multi_reduction <maximumf>, %104, %cst_75 [2] : vector<2x8x8xf32> to vector<2x8xf32>
    %106 = vector.shape_cast %105 : vector<2x8xf32> to vector<2x8x1xf32>
    %107 = vector.broadcast %106 : vector<2x8x1xf32> to vector<2x8x8xf32>
    %108 = arith.subf %104, %107 : vector<2x8x8xf32>
    %109 = math.exp %108 : vector<2x8x8xf32>
    %cst_76 = arith.constant dense<0.000000e+00> : vector<2x8xf32>
    %110 = vector.multi_reduction <add>, %109, %cst_76 [2] : vector<2x8x8xf32> to vector<2x8xf32>
    %111 = vector.shape_cast %110 : vector<2x8xf32> to vector<2x8x1xf32>
    %112 = tpu.reciprocal %111 {approx = true} : vector<2x8x1xf32> -> vector<2x8x1xf32>
    %113 = vector.broadcast %112 : vector<2x8x1xf32> to vector<2x8x8xf32>
    %114 = arith.mulf %109, %113 : vector<2x8x8xf32>
    %115 = arith.truncf %114 : vector<2x8x8xf32> to vector<2x8x8xbf16>
    %116 = arith.truncf %101 : vector<2x8x8xf32> to vector<2x8x8xbf16>
    "tpu.trace_start"() <{level = 10 : i32, message = "bqk,bkd->bqd"}> : () -> ()
    %cst_77 = arith.constant dense<0.000000e+00> : vector<2x8x8xf32>
    %117 = tpu.matmul %115, %116, %cst_77 {dimension_numbers = #tpu.dot_dimension_numbers<[2], [1], [1], [2], [0, 0, 0, 1, 1, 2], [0], [0]>} : vector<2x8x8xbf16>, vector<2x8x8xbf16>, vector<2x8x8xf32> -> vector<2x8x8xf32>
    "tpu.trace_stop"() : () -> ()
    %118 = vector.shape_cast %117 : vector<2x8x8xf32> to vector<16x8xf32>
    %c0_78 = arith.constant 0 : index
    %c1_79 = arith.constant 1 : index
    %c0_80 = arith.constant 0 : index
    %c0_81 = arith.constant 0 : index
    %119 = vector.load %arg9[%c0_78, %c1_79, %c0_80, %c0_81] : memref<2x4x8x32xbf16, #tpu.memory_space<vmem>>, vector<1x1x8x32xbf16>
    %120 = vector.shape_cast %119 : vector<1x1x8x32xbf16> to vector<8x32xbf16>
    %121 = arith.truncf %118 : vector<16x8xf32> to vector<16x8xbf16>
    %cst_82 = arith.constant dense<0.000000e+00> : vector<16x32xf32>
    %122 = tpu.matmul %121, %120, %cst_82 {dimension_numbers = #tpu.dot_dimension_numbers<[1], [0], [0], [1], [0, 0, 1, 1], [], []>} : vector<16x8xbf16>, vector<8x32xbf16>, vector<16x32xf32> -> vector<16x32xf32>
    %123 = arith.addf %74, %122 : vector<16x32xf32>
    %c0_83 = arith.constant 0 : index
    %c2 = arith.constant 2 : index
    %c0_84 = arith.constant 0 : index
    %c0_85 = arith.constant 0 : index
    %124 = vector.load %arg3[%c0_83, %c2, %c0_84, %c0_85] : memref<2x4x32x8xbf16, #tpu.memory_space<vmem>>, vector<1x1x32x8xbf16>
    %125 = vector.shape_cast %124 : vector<1x1x32x8xbf16> to vector<32x8xbf16>
    %126 = arith.truncf %22 : vector<16x32xf32> to vector<16x32xbf16>
    %cst_86 = arith.constant dense<0.000000e+00> : vector<16x8xf32>
    %127 = tpu.matmul %126, %125, %cst_86 {dimension_numbers = #tpu.dot_dimension_numbers<[1], [0], [0], [1], [0, 0, 1, 1], [], []>} : vector<16x32xbf16>, vector<32x8xbf16>, vector<16x8xf32> -> vector<16x8xf32>
    %c0_87 = arith.constant 0 : index
    %c2_88 = arith.constant 2 : index
    %c0_89 = arith.constant 0 : index
    %c0_90 = arith.constant 0 : index
    %128 = vector.load %arg4[%c0_87, %c2_88, %c0_89, %c0_90] : memref<2x4x1x8xf32, #tpu.memory_space<vmem>>, vector<1x1x1x8xf32>
    %129 = vector.shape_cast %128 : vector<1x1x1x8xf32> to vector<1x8xf32>
    %130 = vector.broadcast %129 : vector<1x8xf32> to vector<16x8xf32>
    %131 = arith.addf %127, %130 : vector<16x8xf32>
    %132 = vector.shape_cast %131 : vector<16x8xf32> to vector<2x8x8xf32>
    %c0_91 = arith.constant 0 : index
    %c2_92 = arith.constant 2 : index
    %c0_93 = arith.constant 0 : index
    %c0_94 = arith.constant 0 : index
    %133 = vector.load %arg5[%c0_91, %c2_92, %c0_93, %c0_94] : memref<2x4x32x8xbf16, #tpu.memory_space<vmem>>, vector<1x1x32x8xbf16>
    %134 = vector.shape_cast %133 : vector<1x1x32x8xbf16> to vector<32x8xbf16>
    %135 = arith.truncf %22 : vector<16x32xf32> to vector<16x32xbf16>
    %cst_95 = arith.constant dense<0.000000e+00> : vector<16x8xf32>
    %136 = tpu.matmul %135, %134, %cst_95 {dimension_numbers = #tpu.dot_dimension_numbers<[1], [0], [0], [1], [0, 0, 1, 1], [], []>} : vector<16x32xbf16>, vector<32x8xbf16>, vector<16x8xf32> -> vector<16x8xf32>
    %c0_96 = arith.constant 0 : index
    %c2_97 = arith.constant 2 : index
    %c0_98 = arith.constant 0 : index
    %c0_99 = arith.constant 0 : index
    %137 = vector.load %arg6[%c0_96, %c2_97, %c0_98, %c0_99] : memref<2x4x1x8xf32, #tpu.memory_space<vmem>>, vector<1x1x1x8xf32>
    %138 = vector.shape_cast %137 : vector<1x1x1x8xf32> to vector<1x8xf32>
    %139 = vector.broadcast %138 : vector<1x8xf32> to vector<16x8xf32>
    %140 = arith.addf %136, %139 : vector<16x8xf32>
    %141 = vector.shape_cast %140 : vector<16x8xf32> to vector<2x8x8xf32>
    %c0_100 = arith.constant 0 : index
    %c2_101 = arith.constant 2 : index
    %c0_102 = arith.constant 0 : index
    %c0_103 = arith.constant 0 : index
    %142 = vector.load %arg7[%c0_100, %c2_101, %c0_102, %c0_103] : memref<2x4x32x8xbf16, #tpu.memory_space<vmem>>, vector<1x1x32x8xbf16>
    %143 = vector.shape_cast %142 : vector<1x1x32x8xbf16> to vector<32x8xbf16>
    %144 = arith.truncf %22 : vector<16x32xf32> to vector<16x32xbf16>
    %cst_104 = arith.constant dense<0.000000e+00> : vector<16x8xf32>
    %145 = tpu.matmul %144, %143, %cst_104 {dimension_numbers = #tpu.dot_dimension_numbers<[1], [0], [0], [1], [0, 0, 1, 1], [], []>} : vector<16x32xbf16>, vector<32x8xbf16>, vector<16x8xf32> -> vector<16x8xf32>
    %c0_105 = arith.constant 0 : index
    %c2_106 = arith.constant 2 : index
    %c0_107 = arith.constant 0 : index
    %c0_108 = arith.constant 0 : index
    %146 = vector.load %arg8[%c0_105, %c2_106, %c0_107, %c0_108] : memref<2x4x1x8xf32, #tpu.memory_space<vmem>>, vector<1x1x1x8xf32>
    %147 = vector.shape_cast %146 : vector<1x1x1x8xf32> to vector<1x8xf32>
    %148 = vector.broadcast %147 : vector<1x8xf32> to vector<16x8xf32>
    %149 = arith.addf %145, %148 : vector<16x8xf32>
    %150 = vector.shape_cast %149 : vector<16x8xf32> to vector<2x8x8xf32>
    %151 = arith.truncf %132 : vector<2x8x8xf32> to vector<2x8x8xbf16>
    %152 = arith.truncf %141 : vector<2x8x8xf32> to vector<2x8x8xbf16>
    "tpu.trace_start"() <{level = 10 : i32, message = "bqd,bkd->bqk"}> : () -> ()
    %cst_109 = arith.constant dense<0.000000e+00> : vector<2x8x8xf32>
    %153 = tpu.matmul %151, %152, %cst_109 {dimension_numbers = #tpu.dot_dimension_numbers<[2], [2], [1], [1], [0, 0, 0, 1, 1, 1], [0], [0]>} : vector<2x8x8xbf16>, vector<2x8x8xbf16>, vector<2x8x8xf32> -> vector<2x8x8xf32>
    "tpu.trace_stop"() : () -> ()
    %cst_110 = arith.constant dense<0xFF800000> : vector<2x8xf32>
    %154 = vector.multi_reduction <maximumf>, %153, %cst_110 [2] : vector<2x8x8xf32> to vector<2x8xf32>
    %155 = vector.shape_cast %154 : vector<2x8xf32> to vector<2x8x1xf32>
    %156 = vector.broadcast %155 : vector<2x8x1xf32> to vector<2x8x8xf32>
    %157 = arith.subf %153, %156 : vector<2x8x8xf32>
    %158 = math.exp %157 : vector<2x8x8xf32>
    %cst_111 = arith.constant dense<0.000000e+00> : vector<2x8xf32>
    %159 = vector.multi_reduction <add>, %158, %cst_111 [2] : vector<2x8x8xf32> to vector<2x8xf32>
    %160 = vector.shape_cast %159 : vector<2x8xf32> to vector<2x8x1xf32>
    %161 = tpu.reciprocal %160 {approx = true} : vector<2x8x1xf32> -> vector<2x8x1xf32>
    %162 = vector.broadcast %161 : vector<2x8x1xf32> to vector<2x8x8xf32>
    %163 = arith.mulf %158, %162 : vector<2x8x8xf32>
    %164 = arith.truncf %163 : vector<2x8x8xf32> to vector<2x8x8xbf16>
    %165 = arith.truncf %150 : vector<2x8x8xf32> to vector<2x8x8xbf16>
    "tpu.trace_start"() <{level = 10 : i32, message = "bqk,bkd->bqd"}> : () -> ()
    %cst_112 = arith.constant dense<0.000000e+00> : vector<2x8x8xf32>
    %166 = tpu.matmul %164, %165, %cst_112 {dimension_numbers = #tpu.dot_dimension_numbers<[2], [1], [1], [2], [0, 0, 0, 1, 1, 2], [0], [0]>} : vector<2x8x8xbf16>, vector<2x8x8xbf16>, vector<2x8x8xf32> -> vector<2x8x8xf32>
    "tpu.trace_stop"() : () -> ()
    %167 = vector.shape_cast %166 : vector<2x8x8xf32> to vector<16x8xf32>
    %c0_113 = arith.constant 0 : index
    %c2_114 = arith.constant 2 : index
    %c0_115 = arith.constant 0 : index
    %c0_116 = arith.constant 0 : index
    %168 = vector.load %arg9[%c0_113, %c2_114, %c0_115, %c0_116] : memref<2x4x8x32xbf16, #tpu.memory_space<vmem>>, vector<1x1x8x32xbf16>
    %169 = vector.shape_cast %168 : vector<1x1x8x32xbf16> to vector<8x32xbf16>
    %170 = arith.truncf %167 : vector<16x8xf32> to vector<16x8xbf16>
    %cst_117 = arith.constant dense<0.000000e+00> : vector<16x32xf32>
    %171 = tpu.matmul %170, %169, %cst_117 {dimension_numbers = #tpu.dot_dimension_numbers<[1], [0], [0], [1], [0, 0, 1, 1], [], []>} : vector<16x8xbf16>, vector<8x32xbf16>, vector<16x32xf32> -> vector<16x32xf32>
    %172 = arith.addf %123, %171 : vector<16x32xf32>
    %c0_118 = arith.constant 0 : index
    %c3 = arith.constant 3 : index
    %c0_119 = arith.constant 0 : index
    %c0_120 = arith.constant 0 : index
    %173 = vector.load %arg3[%c0_118, %c3, %c0_119, %c0_120] : memref<2x4x32x8xbf16, #tpu.memory_space<vmem>>, vector<1x1x32x8xbf16>
    %174 = vector.shape_cast %173 : vector<1x1x32x8xbf16> to vector<32x8xbf16>
    %175 = arith.truncf %22 : vector<16x32xf32> to vector<16x32xbf16>
    %cst_121 = arith.constant dense<0.000000e+00> : vector<16x8xf32>
    %176 = tpu.matmul %175, %174, %cst_121 {dimension_numbers = #tpu.dot_dimension_numbers<[1], [0], [0], [1], [0, 0, 1, 1], [], []>} : vector<16x32xbf16>, vector<32x8xbf16>, vector<16x8xf32> -> vector<16x8xf32>
    %c0_122 = arith.constant 0 : index
    %c3_123 = arith.constant 3 : index
    %c0_124 = arith.constant 0 : index
    %c0_125 = arith.constant 0 : index
    %177 = vector.load %arg4[%c0_122, %c3_123, %c0_124, %c0_125] : memref<2x4x1x8xf32, #tpu.memory_space<vmem>>, vector<1x1x1x8xf32>
    %178 = vector.shape_cast %177 : vector<1x1x1x8xf32> to vector<1x8xf32>
    %179 = vector.broadcast %178 : vector<1x8xf32> to vector<16x8xf32>
    %180 = arith.addf %176, %179 : vector<16x8xf32>
    %181 = vector.shape_cast %180 : vector<16x8xf32> to vector<2x8x8xf32>
    %c0_126 = arith.constant 0 : index
    %c3_127 = arith.constant 3 : index
    %c0_128 = arith.constant 0 : index
    %c0_129 = arith.constant 0 : index
    %182 = vector.load %arg5[%c0_126, %c3_127, %c0_128, %c0_129] : memref<2x4x32x8xbf16, #tpu.memory_space<vmem>>, vector<1x1x32x8xbf16>
    %183 = vector.shape_cast %182 : vector<1x1x32x8xbf16> to vector<32x8xbf16>
    %184 = arith.truncf %22 : vector<16x32xf32> to vector<16x32xbf16>
    %cst_130 = arith.constant dense<0.000000e+00> : vector<16x8xf32>
    %185 = tpu.matmul %184, %183, %cst_130 {dimension_numbers = #tpu.dot_dimension_numbers<[1], [0], [0], [1], [0, 0, 1, 1], [], []>} : vector<16x32xbf16>, vector<32x8xbf16>, vector<16x8xf32> -> vector<16x8xf32>
    %c0_131 = arith.constant 0 : index
    %c3_132 = arith.constant 3 : index
    %c0_133 = arith.constant 0 : index
    %c0_134 = arith.constant 0 : index
    %186 = vector.load %arg6[%c0_131, %c3_132, %c0_133, %c0_134] : memref<2x4x1x8xf32, #tpu.memory_space<vmem>>, vector<1x1x1x8xf32>
    %187 = vector.shape_cast %186 : vector<1x1x1x8xf32> to vector<1x8xf32>
    %188 = vector.broadcast %187 : vector<1x8xf32> to vector<16x8xf32>
    %189 = arith.addf %185, %188 : vector<16x8xf32>
    %190 = vector.shape_cast %189 : vector<16x8xf32> to vector<2x8x8xf32>
    %c0_135 = arith.constant 0 : index
    %c3_136 = arith.constant 3 : index
    %c0_137 = arith.constant 0 : index
    %c0_138 = arith.constant 0 : index
    %191 = vector.load %arg7[%c0_135, %c3_136, %c0_137, %c0_138] : memref<2x4x32x8xbf16, #tpu.memory_space<vmem>>, vector<1x1x32x8xbf16>
    %192 = vector.shape_cast %191 : vector<1x1x32x8xbf16> to vector<32x8xbf16>
    %193 = arith.truncf %22 : vector<16x32xf32> to vector<16x32xbf16>
    %cst_139 = arith.constant dense<0.000000e+00> : vector<16x8xf32>
    %194 = tpu.matmul %193, %192, %cst_139 {dimension_numbers = #tpu.dot_dimension_numbers<[1], [0], [0], [1], [0, 0, 1, 1], [], []>} : vector<16x32xbf16>, vector<32x8xbf16>, vector<16x8xf32> -> vector<16x8xf32>
    %c0_140 = arith.constant 0 : index
    %c3_141 = arith.constant 3 : index
    %c0_142 = arith.constant 0 : index
    %c0_143 = arith.constant 0 : index
    %195 = vector.load %arg8[%c0_140, %c3_141, %c0_142, %c0_143] : memref<2x4x1x8xf32, #tpu.memory_space<vmem>>, vector<1x1x1x8xf32>
    %196 = vector.shape_cast %195 : vector<1x1x1x8xf32> to vector<1x8xf32>
    %197 = vector.broadcast %196 : vector<1x8xf32> to vector<16x8xf32>
    %198 = arith.addf %194, %197 : vector<16x8xf32>
    %199 = vector.shape_cast %198 : vector<16x8xf32> to vector<2x8x8xf32>
    %200 = arith.truncf %181 : vector<2x8x8xf32> to vector<2x8x8xbf16>
    %201 = arith.truncf %190 : vector<2x8x8xf32> to vector<2x8x8xbf16>
    "tpu.trace_start"() <{level = 10 : i32, message = "bqd,bkd->bqk"}> : () -> ()
    %cst_144 = arith.constant dense<0.000000e+00> : vector<2x8x8xf32>
    %202 = tpu.matmul %200, %201, %cst_144 {dimension_numbers = #tpu.dot_dimension_numbers<[2], [2], [1], [1], [0, 0, 0, 1, 1, 1], [0], [0]>} : vector<2x8x8xbf16>, vector<2x8x8xbf16>, vector<2x8x8xf32> -> vector<2x8x8xf32>
    "tpu.trace_stop"() : () -> ()
    %cst_145 = arith.constant dense<0xFF800000> : vector<2x8xf32>
    %203 = vector.multi_reduction <maximumf>, %202, %cst_145 [2] : vector<2x8x8xf32> to vector<2x8xf32>
    %204 = vector.shape_cast %203 : vector<2x8xf32> to vector<2x8x1xf32>
    %205 = vector.broadcast %204 : vector<2x8x1xf32> to vector<2x8x8xf32>
    %206 = arith.subf %202, %205 : vector<2x8x8xf32>
    %207 = math.exp %206 : vector<2x8x8xf32>
    %cst_146 = arith.constant dense<0.000000e+00> : vector<2x8xf32>
    %208 = vector.multi_reduction <add>, %207, %cst_146 [2] : vector<2x8x8xf32> to vector<2x8xf32>
    %209 = vector.shape_cast %208 : vector<2x8xf32> to vector<2x8x1xf32>
    %210 = tpu.reciprocal %209 {approx = true} : vector<2x8x1xf32> -> vector<2x8x1xf32>
    %211 = vector.broadcast %210 : vector<2x8x1xf32> to vector<2x8x8xf32>
    %212 = arith.mulf %207, %211 : vector<2x8x8xf32>
    %213 = arith.truncf %212 : vector<2x8x8xf32> to vector<2x8x8xbf16>
    %214 = arith.truncf %199 : vector<2x8x8xf32> to vector<2x8x8xbf16>
    "tpu.trace_start"() <{level = 10 : i32, message = "bqk,bkd->bqd"}> : () -> ()
    %cst_147 = arith.constant dense<0.000000e+00> : vector<2x8x8xf32>
    %215 = tpu.matmul %213, %214, %cst_147 {dimension_numbers = #tpu.dot_dimension_numbers<[2], [1], [1], [2], [0, 0, 0, 1, 1, 2], [0], [0]>} : vector<2x8x8xbf16>, vector<2x8x8xbf16>, vector<2x8x8xf32> -> vector<2x8x8xf32>
    "tpu.trace_stop"() : () -> ()
    %216 = vector.shape_cast %215 : vector<2x8x8xf32> to vector<16x8xf32>
    %c0_148 = arith.constant 0 : index
    %c3_149 = arith.constant 3 : index
    %c0_150 = arith.constant 0 : index
    %c0_151 = arith.constant 0 : index
    %217 = vector.load %arg9[%c0_148, %c3_149, %c0_150, %c0_151] : memref<2x4x8x32xbf16, #tpu.memory_space<vmem>>, vector<1x1x8x32xbf16>
    %218 = vector.shape_cast %217 : vector<1x1x8x32xbf16> to vector<8x32xbf16>
    %219 = arith.truncf %216 : vector<16x8xf32> to vector<16x8xbf16>
    %cst_152 = arith.constant dense<0.000000e+00> : vector<16x32xf32>
    %220 = tpu.matmul %219, %218, %cst_152 {dimension_numbers = #tpu.dot_dimension_numbers<[1], [0], [0], [1], [0, 0, 1, 1], [], []>} : vector<16x8xbf16>, vector<8x32xbf16>, vector<16x32xf32> -> vector<16x32xf32>
    %221 = arith.addf %172, %220 : vector<16x32xf32>
    %222 = arith.addf %22, %221 : vector<16x32xf32>
    %c0_153 = arith.constant 0 : index
    %c0_154 = arith.constant 0 : index
    %c0_155 = arith.constant 0 : index
    %223 = vector.load %arg11[%c0_153, %c0_154, %c0_155] : memref<2x1x32xf32, #tpu.memory_space<vmem>>, vector<1x1x32xf32>
    %224 = vector.shape_cast %223 : vector<1x1x32xf32> to vector<1x32xf32>
    %c0_156 = arith.constant 0 : index
    %c0_157 = arith.constant 0 : index
    %c0_158 = arith.constant 0 : index
    %225 = vector.load %arg12[%c0_156, %c0_157, %c0_158] : memref<2x1x32xf32, #tpu.memory_space<vmem>>, vector<1x1x32xf32>
    %226 = vector.shape_cast %225 : vector<1x1x32xf32> to vector<1x32xf32>
    %cst_159 = arith.constant dense<0.000000e+00> : vector<16xf32>
    %227 = vector.multi_reduction <add>, %222, %cst_159 [1] : vector<16x32xf32> to vector<16xf32>
    %228 = vector.shape_cast %227 : vector<16xf32> to vector<16x1xf32>
    %cst_160 = arith.constant 3.200000e+01 : f32
    %229 = vector.broadcast %cst_160 : f32 to vector<16x1xf32>
    %230 = arith.divf %228, %229 : vector<16x1xf32>
    %231 = vector.broadcast %230 : vector<16x1xf32> to vector<16x32xf32>
    %232 = arith.subf %222, %231 : vector<16x32xf32>
    %233 = arith.mulf %232, %232 : vector<16x32xf32>
    %cst_161 = arith.constant dense<0.000000e+00> : vector<16xf32>
    %234 = vector.multi_reduction <add>, %233, %cst_161 [1] : vector<16x32xf32> to vector<16xf32>
    %235 = vector.shape_cast %234 : vector<16xf32> to vector<16x1xf32>
    %cst_162 = arith.constant 3.200000e+01 : f32
    %236 = vector.broadcast %cst_162 : f32 to vector<16x1xf32>
    %237 = arith.divf %235, %236 : vector<16x1xf32>
    %cst_163 = arith.constant 9.99999996E-13 : f32
    %238 = vector.broadcast %cst_163 : f32 to vector<16x1xf32>
    %239 = arith.addf %237, %238 : vector<16x1xf32>
    %240 = math.rsqrt %239 : vector<16x1xf32>
    %241 = vector.broadcast %240 : vector<16x1xf32> to vector<16x32xf32>
    %242 = arith.mulf %232, %241 : vector<16x32xf32>
    %243 = vector.broadcast %224 : vector<1x32xf32> to vector<16x32xf32>
    %244 = arith.mulf %243, %242 : vector<16x32xf32>
    %245 = vector.broadcast %226 : vector<1x32xf32> to vector<16x32xf32>
    %246 = arith.addf %244, %245 : vector<16x32xf32>
    %c0_164 = arith.constant 0 : index
    %c0_165 = arith.constant 0 : index
    %c0_166 = arith.constant 0 : index
    %247 = vector.load %arg13[%c0_164, %c0_165, %c0_166] : memref<2x32x64xbf16, #tpu.memory_space<vmem>>, vector<1x32x64xbf16>
    %248 = vector.shape_cast %247 : vector<1x32x64xbf16> to vector<32x64xbf16>
    %249 = arith.truncf %246 : vector<16x32xf32> to vector<16x32xbf16>
    %cst_167 = arith.constant dense<0.000000e+00> : vector<16x64xf32>
    %250 = tpu.matmul %249, %248, %cst_167 {dimension_numbers = #tpu.dot_dimension_numbers<[1], [0], [0], [1], [0, 0, 1, 1], [], []>} : vector<16x32xbf16>, vector<32x64xbf16>, vector<16x64xf32> -> vector<16x64xf32>
    %c0_168 = arith.constant 0 : index
    %c0_169 = arith.constant 0 : index
    %c0_170 = arith.constant 0 : index
    %251 = vector.load %arg14[%c0_168, %c0_169, %c0_170] : memref<2x1x64xf32, #tpu.memory_space<vmem>>, vector<1x1x64xf32>
    %252 = vector.shape_cast %251 : vector<1x1x64xf32> to vector<1x64xf32>
    %253 = vector.broadcast %252 : vector<1x64xf32> to vector<16x64xf32>
    %254 = arith.addf %250, %253 : vector<16x64xf32>
    %255 = arith.mulf %254, %254 : vector<16x64xf32>
    %256 = arith.mulf %254, %255 : vector<16x64xf32>
    %cst_171 = arith.constant 4.471500e-02 : f32
    %257 = vector.broadcast %cst_171 : f32 to vector<16x64xf32>
    %258 = arith.mulf %257, %256 : vector<16x64xf32>
    %259 = arith.addf %254, %258 : vector<16x64xf32>
    %cst_172 = arith.constant 0.797884583 : f32
    %260 = vector.broadcast %cst_172 : f32 to vector<16x64xf32>
    %261 = arith.mulf %260, %259 : vector<16x64xf32>
    %262 = math.tanh %261 : vector<16x64xf32>
    %cst_173 = arith.constant 1.000000e+00 : f32
    %263 = vector.broadcast %cst_173 : f32 to vector<16x64xf32>
    %264 = arith.addf %263, %262 : vector<16x64xf32>
    %cst_174 = arith.constant 5.000000e-01 : f32
    %265 = vector.broadcast %cst_174 : f32 to vector<16x64xf32>
    %266 = arith.mulf %265, %264 : vector<16x64xf32>
    %267 = arith.mulf %254, %266 : vector<16x64xf32>
    %c0_175 = arith.constant 0 : index
    %c0_176 = arith.constant 0 : index
    %c0_177 = arith.constant 0 : index
    %268 = vector.load %arg15[%c0_175, %c0_176, %c0_177] : memref<2x64x32xbf16, #tpu.memory_space<vmem>>, vector<1x64x32xbf16>
    %269 = vector.shape_cast %268 : vector<1x64x32xbf16> to vector<64x32xbf16>
    %270 = arith.truncf %267 : vector<16x64xf32> to vector<16x64xbf16>
    %cst_178 = arith.constant dense<0.000000e+00> : vector<16x32xf32>
    %271 = tpu.matmul %270, %269, %cst_178 {dimension_numbers = #tpu.dot_dimension_numbers<[1], [0], [0], [1], [0, 0, 1, 1], [], []>} : vector<16x64xbf16>, vector<64x32xbf16>, vector<16x32xf32> -> vector<16x32xf32>
    %c0_179 = arith.constant 0 : index
    %c0_180 = arith.constant 0 : index
    %c0_181 = arith.constant 0 : index
    %272 = vector.load %arg16[%c0_179, %c0_180, %c0_181] : memref<2x1x32xf32, #tpu.memory_space<vmem>>, vector<1x1x32xf32>
    %273 = vector.shape_cast %272 : vector<1x1x32xf32> to vector<1x32xf32>
    %274 = vector.broadcast %273 : vector<1x32xf32> to vector<16x32xf32>
    %275 = arith.addf %271, %274 : vector<16x32xf32>
    %276 = arith.addf %246, %275 : vector<16x32xf32>
    %c0_182 = arith.constant 0 : index
    %c0_183 = arith.constant 0 : index
    %c0_184 = arith.constant 0 : index
    %277 = vector.load %arg17[%c0_182, %c0_183, %c0_184] : memref<2x1x32xf32, #tpu.memory_space<vmem>>, vector<1x1x32xf32>
    %278 = vector.shape_cast %277 : vector<1x1x32xf32> to vector<1x32xf32>
    %c0_185 = arith.constant 0 : index
    %c0_186 = arith.constant 0 : index
    %c0_187 = arith.constant 0 : index
    %279 = vector.load %arg18[%c0_185, %c0_186, %c0_187] : memref<2x1x32xf32, #tpu.memory_space<vmem>>, vector<1x1x32xf32>
    %280 = vector.shape_cast %279 : vector<1x1x32xf32> to vector<1x32xf32>
    %cst_188 = arith.constant dense<0.000000e+00> : vector<16xf32>
    %281 = vector.multi_reduction <add>, %276, %cst_188 [1] : vector<16x32xf32> to vector<16xf32>
    %282 = vector.shape_cast %281 : vector<16xf32> to vector<16x1xf32>
    %cst_189 = arith.constant 3.200000e+01 : f32
    %283 = vector.broadcast %cst_189 : f32 to vector<16x1xf32>
    %284 = arith.divf %282, %283 : vector<16x1xf32>
    %285 = vector.broadcast %284 : vector<16x1xf32> to vector<16x32xf32>
    %286 = arith.subf %276, %285 : vector<16x32xf32>
    %287 = arith.mulf %286, %286 : vector<16x32xf32>
    %cst_190 = arith.constant dense<0.000000e+00> : vector<16xf32>
    %288 = vector.multi_reduction <add>, %287, %cst_190 [1] : vector<16x32xf32> to vector<16xf32>
    %289 = vector.shape_cast %288 : vector<16xf32> to vector<16x1xf32>
    %cst_191 = arith.constant 3.200000e+01 : f32
    %290 = vector.broadcast %cst_191 : f32 to vector<16x1xf32>
    %291 = arith.divf %289, %290 : vector<16x1xf32>
    %cst_192 = arith.constant 9.99999996E-13 : f32
    %292 = vector.broadcast %cst_192 : f32 to vector<16x1xf32>
    %293 = arith.addf %291, %292 : vector<16x1xf32>
    %294 = math.rsqrt %293 : vector<16x1xf32>
    %295 = vector.broadcast %294 : vector<16x1xf32> to vector<16x32xf32>
    %296 = arith.mulf %286, %295 : vector<16x32xf32>
    %297 = vector.broadcast %278 : vector<1x32xf32> to vector<16x32xf32>
    %298 = arith.mulf %297, %296 : vector<16x32xf32>
    %299 = vector.broadcast %280 : vector<1x32xf32> to vector<16x32xf32>
    %300 = arith.addf %298, %299 : vector<16x32xf32>
    %c1_193 = arith.constant 1 : index
    %c0_194 = arith.constant 0 : index
    %c0_195 = arith.constant 0 : index
    %301 = vector.load %arg10[%c1_193, %c0_194, %c0_195] : memref<2x1x32xf32, #tpu.memory_space<vmem>>, vector<1x1x32xf32>
    %302 = vector.shape_cast %301 : vector<1x1x32xf32> to vector<1x32xf32>
    %c1_196 = arith.constant 1 : index
    %c0_197 = arith.constant 0 : index
    %c0_198 = arith.constant 0 : index
    %c0_199 = arith.constant 0 : index
    %303 = vector.load %arg3[%c1_196, %c0_197, %c0_198, %c0_199] : memref<2x4x32x8xbf16, #tpu.memory_space<vmem>>, vector<1x1x32x8xbf16>
    %304 = vector.shape_cast %303 : vector<1x1x32x8xbf16> to vector<32x8xbf16>
    %305 = arith.truncf %300 : vector<16x32xf32> to vector<16x32xbf16>
    %cst_200 = arith.constant dense<0.000000e+00> : vector<16x8xf32>
    %306 = tpu.matmul %305, %304, %cst_200 {dimension_numbers = #tpu.dot_dimension_numbers<[1], [0], [0], [1], [0, 0, 1, 1], [], []>} : vector<16x32xbf16>, vector<32x8xbf16>, vector<16x8xf32> -> vector<16x8xf32>
    %c1_201 = arith.constant 1 : index
    %c0_202 = arith.constant 0 : index
    %c0_203 = arith.constant 0 : index
    %c0_204 = arith.constant 0 : index
    %307 = vector.load %arg4[%c1_201, %c0_202, %c0_203, %c0_204] : memref<2x4x1x8xf32, #tpu.memory_space<vmem>>, vector<1x1x1x8xf32>
    %308 = vector.shape_cast %307 : vector<1x1x1x8xf32> to vector<1x8xf32>
    %309 = vector.broadcast %308 : vector<1x8xf32> to vector<16x8xf32>
    %310 = arith.addf %306, %309 : vector<16x8xf32>
    %311 = vector.shape_cast %310 : vector<16x8xf32> to vector<2x8x8xf32>
    %c1_205 = arith.constant 1 : index
    %c0_206 = arith.constant 0 : index
    %c0_207 = arith.constant 0 : index
    %c0_208 = arith.constant 0 : index
    %312 = vector.load %arg5[%c1_205, %c0_206, %c0_207, %c0_208] : memref<2x4x32x8xbf16, #tpu.memory_space<vmem>>, vector<1x1x32x8xbf16>
    %313 = vector.shape_cast %312 : vector<1x1x32x8xbf16> to vector<32x8xbf16>
    %314 = arith.truncf %300 : vector<16x32xf32> to vector<16x32xbf16>
    %cst_209 = arith.constant dense<0.000000e+00> : vector<16x8xf32>
    %315 = tpu.matmul %314, %313, %cst_209 {dimension_numbers = #tpu.dot_dimension_numbers<[1], [0], [0], [1], [0, 0, 1, 1], [], []>} : vector<16x32xbf16>, vector<32x8xbf16>, vector<16x8xf32> -> vector<16x8xf32>
    %c1_210 = arith.constant 1 : index
    %c0_211 = arith.constant 0 : index
    %c0_212 = arith.constant 0 : index
    %c0_213 = arith.constant 0 : index
    %316 = vector.load %arg6[%c1_210, %c0_211, %c0_212, %c0_213] : memref<2x4x1x8xf32, #tpu.memory_space<vmem>>, vector<1x1x1x8xf32>
    %317 = vector.shape_cast %316 : vector<1x1x1x8xf32> to vector<1x8xf32>
    %318 = vector.broadcast %317 : vector<1x8xf32> to vector<16x8xf32>
    %319 = arith.addf %315, %318 : vector<16x8xf32>
    %320 = vector.shape_cast %319 : vector<16x8xf32> to vector<2x8x8xf32>
    %c1_214 = arith.constant 1 : index
    %c0_215 = arith.constant 0 : index
    %c0_216 = arith.constant 0 : index
    %c0_217 = arith.constant 0 : index
    %321 = vector.load %arg7[%c1_214, %c0_215, %c0_216, %c0_217] : memref<2x4x32x8xbf16, #tpu.memory_space<vmem>>, vector<1x1x32x8xbf16>
    %322 = vector.shape_cast %321 : vector<1x1x32x8xbf16> to vector<32x8xbf16>
    %323 = arith.truncf %300 : vector<16x32xf32> to vector<16x32xbf16>
    %cst_218 = arith.constant dense<0.000000e+00> : vector<16x8xf32>
    %324 = tpu.matmul %323, %322, %cst_218 {dimension_numbers = #tpu.dot_dimension_numbers<[1], [0], [0], [1], [0, 0, 1, 1], [], []>} : vector<16x32xbf16>, vector<32x8xbf16>, vector<16x8xf32> -> vector<16x8xf32>
    %c1_219 = arith.constant 1 : index
    %c0_220 = arith.constant 0 : index
    %c0_221 = arith.constant 0 : index
    %c0_222 = arith.constant 0 : index
    %325 = vector.load %arg8[%c1_219, %c0_220, %c0_221, %c0_222] : memref<2x4x1x8xf32, #tpu.memory_space<vmem>>, vector<1x1x1x8xf32>
    %326 = vector.shape_cast %325 : vector<1x1x1x8xf32> to vector<1x8xf32>
    %327 = vector.broadcast %326 : vector<1x8xf32> to vector<16x8xf32>
    %328 = arith.addf %324, %327 : vector<16x8xf32>
    %329 = vector.shape_cast %328 : vector<16x8xf32> to vector<2x8x8xf32>
    %330 = arith.truncf %311 : vector<2x8x8xf32> to vector<2x8x8xbf16>
    %331 = arith.truncf %320 : vector<2x8x8xf32> to vector<2x8x8xbf16>
    "tpu.trace_start"() <{level = 10 : i32, message = "bqd,bkd->bqk"}> : () -> ()
    %cst_223 = arith.constant dense<0.000000e+00> : vector<2x8x8xf32>
    %332 = tpu.matmul %330, %331, %cst_223 {dimension_numbers = #tpu.dot_dimension_numbers<[2], [2], [1], [1], [0, 0, 0, 1, 1, 1], [0], [0]>} : vector<2x8x8xbf16>, vector<2x8x8xbf16>, vector<2x8x8xf32> -> vector<2x8x8xf32>
    "tpu.trace_stop"() : () -> ()
    %cst_224 = arith.constant dense<0xFF800000> : vector<2x8xf32>
    %333 = vector.multi_reduction <maximumf>, %332, %cst_224 [2] : vector<2x8x8xf32> to vector<2x8xf32>
    %334 = vector.shape_cast %333 : vector<2x8xf32> to vector<2x8x1xf32>
    %335 = vector.broadcast %334 : vector<2x8x1xf32> to vector<2x8x8xf32>
    %336 = arith.subf %332, %335 : vector<2x8x8xf32>
    %337 = math.exp %336 : vector<2x8x8xf32>
    %cst_225 = arith.constant dense<0.000000e+00> : vector<2x8xf32>
    %338 = vector.multi_reduction <add>, %337, %cst_225 [2] : vector<2x8x8xf32> to vector<2x8xf32>
    %339 = vector.shape_cast %338 : vector<2x8xf32> to vector<2x8x1xf32>
    %340 = tpu.reciprocal %339 {approx = true} : vector<2x8x1xf32> -> vector<2x8x1xf32>
    %341 = vector.broadcast %340 : vector<2x8x1xf32> to vector<2x8x8xf32>
    %342 = arith.mulf %337, %341 : vector<2x8x8xf32>
    %343 = arith.truncf %342 : vector<2x8x8xf32> to vector<2x8x8xbf16>
    %344 = arith.truncf %329 : vector<2x8x8xf32> to vector<2x8x8xbf16>
    "tpu.trace_start"() <{level = 10 : i32, message = "bqk,bkd->bqd"}> : () -> ()
    %cst_226 = arith.constant dense<0.000000e+00> : vector<2x8x8xf32>
    %345 = tpu.matmul %343, %344, %cst_226 {dimension_numbers = #tpu.dot_dimension_numbers<[2], [1], [1], [2], [0, 0, 0, 1, 1, 2], [0], [0]>} : vector<2x8x8xbf16>, vector<2x8x8xbf16>, vector<2x8x8xf32> -> vector<2x8x8xf32>
    "tpu.trace_stop"() : () -> ()
    %346 = vector.shape_cast %345 : vector<2x8x8xf32> to vector<16x8xf32>
    %c1_227 = arith.constant 1 : index
    %c0_228 = arith.constant 0 : index
    %c0_229 = arith.constant 0 : index
    %c0_230 = arith.constant 0 : index
    %347 = vector.load %arg9[%c1_227, %c0_228, %c0_229, %c0_230] : memref<2x4x8x32xbf16, #tpu.memory_space<vmem>>, vector<1x1x8x32xbf16>
    %348 = vector.shape_cast %347 : vector<1x1x8x32xbf16> to vector<8x32xbf16>
    %349 = arith.truncf %346 : vector<16x8xf32> to vector<16x8xbf16>
    %cst_231 = arith.constant dense<0.000000e+00> : vector<16x32xf32>
    %350 = tpu.matmul %349, %348, %cst_231 {dimension_numbers = #tpu.dot_dimension_numbers<[1], [0], [0], [1], [0, 0, 1, 1], [], []>} : vector<16x8xbf16>, vector<8x32xbf16>, vector<16x32xf32> -> vector<16x32xf32>
    %351 = vector.broadcast %302 : vector<1x32xf32> to vector<16x32xf32>
    %352 = arith.addf %351, %350 : vector<16x32xf32>
    %c1_232 = arith.constant 1 : index
    %c1_233 = arith.constant 1 : index
    %c0_234 = arith.constant 0 : index
    %c0_235 = arith.constant 0 : index
    %353 = vector.load %arg3[%c1_232, %c1_233, %c0_234, %c0_235] : memref<2x4x32x8xbf16, #tpu.memory_space<vmem>>, vector<1x1x32x8xbf16>
    %354 = vector.shape_cast %353 : vector<1x1x32x8xbf16> to vector<32x8xbf16>
    %355 = arith.truncf %300 : vector<16x32xf32> to vector<16x32xbf16>
    %cst_236 = arith.constant dense<0.000000e+00> : vector<16x8xf32>
    %356 = tpu.matmul %355, %354, %cst_236 {dimension_numbers = #tpu.dot_dimension_numbers<[1], [0], [0], [1], [0, 0, 1, 1], [], []>} : vector<16x32xbf16>, vector<32x8xbf16>, vector<16x8xf32> -> vector<16x8xf32>
    %c1_237 = arith.constant 1 : index
    %c1_238 = arith.constant 1 : index
    %c0_239 = arith.constant 0 : index
    %c0_240 = arith.constant 0 : index
    %357 = vector.load %arg4[%c1_237, %c1_238, %c0_239, %c0_240] : memref<2x4x1x8xf32, #tpu.memory_space<vmem>>, vector<1x1x1x8xf32>
    %358 = vector.shape_cast %357 : vector<1x1x1x8xf32> to vector<1x8xf32>
    %359 = vector.broadcast %358 : vector<1x8xf32> to vector<16x8xf32>
    %360 = arith.addf %356, %359 : vector<16x8xf32>
    %361 = vector.shape_cast %360 : vector<16x8xf32> to vector<2x8x8xf32>
    %c1_241 = arith.constant 1 : index
    %c1_242 = arith.constant 1 : index
    %c0_243 = arith.constant 0 : index
    %c0_244 = arith.constant 0 : index
    %362 = vector.load %arg5[%c1_241, %c1_242, %c0_243, %c0_244] : memref<2x4x32x8xbf16, #tpu.memory_space<vmem>>, vector<1x1x32x8xbf16>
    %363 = vector.shape_cast %362 : vector<1x1x32x8xbf16> to vector<32x8xbf16>
    %364 = arith.truncf %300 : vector<16x32xf32> to vector<16x32xbf16>
    %cst_245 = arith.constant dense<0.000000e+00> : vector<16x8xf32>
    %365 = tpu.matmul %364, %363, %cst_245 {dimension_numbers = #tpu.dot_dimension_numbers<[1], [0], [0], [1], [0, 0, 1, 1], [], []>} : vector<16x32xbf16>, vector<32x8xbf16>, vector<16x8xf32> -> vector<16x8xf32>
    %c1_246 = arith.constant 1 : index
    %c1_247 = arith.constant 1 : index
    %c0_248 = arith.constant 0 : index
    %c0_249 = arith.constant 0 : index
    %366 = vector.load %arg6[%c1_246, %c1_247, %c0_248, %c0_249] : memref<2x4x1x8xf32, #tpu.memory_space<vmem>>, vector<1x1x1x8xf32>
    %367 = vector.shape_cast %366 : vector<1x1x1x8xf32> to vector<1x8xf32>
    %368 = vector.broadcast %367 : vector<1x8xf32> to vector<16x8xf32>
    %369 = arith.addf %365, %368 : vector<16x8xf32>
    %370 = vector.shape_cast %369 : vector<16x8xf32> to vector<2x8x8xf32>
    %c1_250 = arith.constant 1 : index
    %c1_251 = arith.constant 1 : index
    %c0_252 = arith.constant 0 : index
    %c0_253 = arith.constant 0 : index
    %371 = vector.load %arg7[%c1_250, %c1_251, %c0_252, %c0_253] : memref<2x4x32x8xbf16, #tpu.memory_space<vmem>>, vector<1x1x32x8xbf16>
    %372 = vector.shape_cast %371 : vector<1x1x32x8xbf16> to vector<32x8xbf16>
    %373 = arith.truncf %300 : vector<16x32xf32> to vector<16x32xbf16>
    %cst_254 = arith.constant dense<0.000000e+00> : vector<16x8xf32>
    %374 = tpu.matmul %373, %372, %cst_254 {dimension_numbers = #tpu.dot_dimension_numbers<[1], [0], [0], [1], [0, 0, 1, 1], [], []>} : vector<16x32xbf16>, vector<32x8xbf16>, vector<16x8xf32> -> vector<16x8xf32>
    %c1_255 = arith.constant 1 : index
    %c1_256 = arith.constant 1 : index
    %c0_257 = arith.constant 0 : index
    %c0_258 = arith.constant 0 : index
    %375 = vector.load %arg8[%c1_255, %c1_256, %c0_257, %c0_258] : memref<2x4x1x8xf32, #tpu.memory_space<vmem>>, vector<1x1x1x8xf32>
    %376 = vector.shape_cast %375 : vector<1x1x1x8xf32> to vector<1x8xf32>
    %377 = vector.broadcast %376 : vector<1x8xf32> to vector<16x8xf32>
    %378 = arith.addf %374, %377 : vector<16x8xf32>
    %379 = vector.shape_cast %378 : vector<16x8xf32> to vector<2x8x8xf32>
    %380 = arith.truncf %361 : vector<2x8x8xf32> to vector<2x8x8xbf16>
    %381 = arith.truncf %370 : vector<2x8x8xf32> to vector<2x8x8xbf16>
    "tpu.trace_start"() <{level = 10 : i32, message = "bqd,bkd->bqk"}> : () -> ()
    %cst_259 = arith.constant dense<0.000000e+00> : vector<2x8x8xf32>
    %382 = tpu.matmul %380, %381, %cst_259 {dimension_numbers = #tpu.dot_dimension_numbers<[2], [2], [1], [1], [0, 0, 0, 1, 1, 1], [0], [0]>} : vector<2x8x8xbf16>, vector<2x8x8xbf16>, vector<2x8x8xf32> -> vector<2x8x8xf32>
    "tpu.trace_stop"() : () -> ()
    %cst_260 = arith.constant dense<0xFF800000> : vector<2x8xf32>
    %383 = vector.multi_reduction <maximumf>, %382, %cst_260 [2] : vector<2x8x8xf32> to vector<2x8xf32>
    %384 = vector.shape_cast %383 : vector<2x8xf32> to vector<2x8x1xf32>
    %385 = vector.broadcast %384 : vector<2x8x1xf32> to vector<2x8x8xf32>
    %386 = arith.subf %382, %385 : vector<2x8x8xf32>
    %387 = math.exp %386 : vector<2x8x8xf32>
    %cst_261 = arith.constant dense<0.000000e+00> : vector<2x8xf32>
    %388 = vector.multi_reduction <add>, %387, %cst_261 [2] : vector<2x8x8xf32> to vector<2x8xf32>
    %389 = vector.shape_cast %388 : vector<2x8xf32> to vector<2x8x1xf32>
    %390 = tpu.reciprocal %389 {approx = true} : vector<2x8x1xf32> -> vector<2x8x1xf32>
    %391 = vector.broadcast %390 : vector<2x8x1xf32> to vector<2x8x8xf32>
    %392 = arith.mulf %387, %391 : vector<2x8x8xf32>
    %393 = arith.truncf %392 : vector<2x8x8xf32> to vector<2x8x8xbf16>
    %394 = arith.truncf %379 : vector<2x8x8xf32> to vector<2x8x8xbf16>
    "tpu.trace_start"() <{level = 10 : i32, message = "bqk,bkd->bqd"}> : () -> ()
    %cst_262 = arith.constant dense<0.000000e+00> : vector<2x8x8xf32>
    %395 = tpu.matmul %393, %394, %cst_262 {dimension_numbers = #tpu.dot_dimension_numbers<[2], [1], [1], [2], [0, 0, 0, 1, 1, 2], [0], [0]>} : vector<2x8x8xbf16>, vector<2x8x8xbf16>, vector<2x8x8xf32> -> vector<2x8x8xf32>
    "tpu.trace_stop"() : () -> ()
    %396 = vector.shape_cast %395 : vector<2x8x8xf32> to vector<16x8xf32>
    %c1_263 = arith.constant 1 : index
    %c1_264 = arith.constant 1 : index
    %c0_265 = arith.constant 0 : index
    %c0_266 = arith.constant 0 : index
    %397 = vector.load %arg9[%c1_263, %c1_264, %c0_265, %c0_266] : memref<2x4x8x32xbf16, #tpu.memory_space<vmem>>, vector<1x1x8x32xbf16>
    %398 = vector.shape_cast %397 : vector<1x1x8x32xbf16> to vector<8x32xbf16>
    %399 = arith.truncf %396 : vector<16x8xf32> to vector<16x8xbf16>
    %cst_267 = arith.constant dense<0.000000e+00> : vector<16x32xf32>
    %400 = tpu.matmul %399, %398, %cst_267 {dimension_numbers = #tpu.dot_dimension_numbers<[1], [0], [0], [1], [0, 0, 1, 1], [], []>} : vector<16x8xbf16>, vector<8x32xbf16>, vector<16x32xf32> -> vector<16x32xf32>
    %401 = arith.addf %352, %400 : vector<16x32xf32>
    %c1_268 = arith.constant 1 : index
    %c2_269 = arith.constant 2 : index
    %c0_270 = arith.constant 0 : index
    %c0_271 = arith.constant 0 : index
    %402 = vector.load %arg3[%c1_268, %c2_269, %c0_270, %c0_271] : memref<2x4x32x8xbf16, #tpu.memory_space<vmem>>, vector<1x1x32x8xbf16>
    %403 = vector.shape_cast %402 : vector<1x1x32x8xbf16> to vector<32x8xbf16>
    %404 = arith.truncf %300 : vector<16x32xf32> to vector<16x32xbf16>
    %cst_272 = arith.constant dense<0.000000e+00> : vector<16x8xf32>
    %405 = tpu.matmul %404, %403, %cst_272 {dimension_numbers = #tpu.dot_dimension_numbers<[1], [0], [0], [1], [0, 0, 1, 1], [], []>} : vector<16x32xbf16>, vector<32x8xbf16>, vector<16x8xf32> -> vector<16x8xf32>
    %c1_273 = arith.constant 1 : index
    %c2_274 = arith.constant 2 : index
    %c0_275 = arith.constant 0 : index
    %c0_276 = arith.constant 0 : index
    %406 = vector.load %arg4[%c1_273, %c2_274, %c0_275, %c0_276] : memref<2x4x1x8xf32, #tpu.memory_space<vmem>>, vector<1x1x1x8xf32>
    %407 = vector.shape_cast %406 : vector<1x1x1x8xf32> to vector<1x8xf32>
    %408 = vector.broadcast %407 : vector<1x8xf32> to vector<16x8xf32>
    %409 = arith.addf %405, %408 : vector<16x8xf32>
    %410 = vector.shape_cast %409 : vector<16x8xf32> to vector<2x8x8xf32>
    %c1_277 = arith.constant 1 : index
    %c2_278 = arith.constant 2 : index
    %c0_279 = arith.constant 0 : index
    %c0_280 = arith.constant 0 : index
    %411 = vector.load %arg5[%c1_277, %c2_278, %c0_279, %c0_280] : memref<2x4x32x8xbf16, #tpu.memory_space<vmem>>, vector<1x1x32x8xbf16>
    %412 = vector.shape_cast %411 : vector<1x1x32x8xbf16> to vector<32x8xbf16>
    %413 = arith.truncf %300 : vector<16x32xf32> to vector<16x32xbf16>
    %cst_281 = arith.constant dense<0.000000e+00> : vector<16x8xf32>
    %414 = tpu.matmul %413, %412, %cst_281 {dimension_numbers = #tpu.dot_dimension_numbers<[1], [0], [0], [1], [0, 0, 1, 1], [], []>} : vector<16x32xbf16>, vector<32x8xbf16>, vector<16x8xf32> -> vector<16x8xf32>
    %c1_282 = arith.constant 1 : index
    %c2_283 = arith.constant 2 : index
    %c0_284 = arith.constant 0 : index
    %c0_285 = arith.constant 0 : index
    %415 = vector.load %arg6[%c1_282, %c2_283, %c0_284, %c0_285] : memref<2x4x1x8xf32, #tpu.memory_space<vmem>>, vector<1x1x1x8xf32>
    %416 = vector.shape_cast %415 : vector<1x1x1x8xf32> to vector<1x8xf32>
    %417 = vector.broadcast %416 : vector<1x8xf32> to vector<16x8xf32>
    %418 = arith.addf %414, %417 : vector<16x8xf32>
    %419 = vector.shape_cast %418 : vector<16x8xf32> to vector<2x8x8xf32>
    %c1_286 = arith.constant 1 : index
    %c2_287 = arith.constant 2 : index
    %c0_288 = arith.constant 0 : index
    %c0_289 = arith.constant 0 : index
    %420 = vector.load %arg7[%c1_286, %c2_287, %c0_288, %c0_289] : memref<2x4x32x8xbf16, #tpu.memory_space<vmem>>, vector<1x1x32x8xbf16>
    %421 = vector.shape_cast %420 : vector<1x1x32x8xbf16> to vector<32x8xbf16>
    %422 = arith.truncf %300 : vector<16x32xf32> to vector<16x32xbf16>
    %cst_290 = arith.constant dense<0.000000e+00> : vector<16x8xf32>
    %423 = tpu.matmul %422, %421, %cst_290 {dimension_numbers = #tpu.dot_dimension_numbers<[1], [0], [0], [1], [0, 0, 1, 1], [], []>} : vector<16x32xbf16>, vector<32x8xbf16>, vector<16x8xf32> -> vector<16x8xf32>
    %c1_291 = arith.constant 1 : index
    %c2_292 = arith.constant 2 : index
    %c0_293 = arith.constant 0 : index
    %c0_294 = arith.constant 0 : index
    %424 = vector.load %arg8[%c1_291, %c2_292, %c0_293, %c0_294] : memref<2x4x1x8xf32, #tpu.memory_space<vmem>>, vector<1x1x1x8xf32>
    %425 = vector.shape_cast %424 : vector<1x1x1x8xf32> to vector<1x8xf32>
    %426 = vector.broadcast %425 : vector<1x8xf32> to vector<16x8xf32>
    %427 = arith.addf %423, %426 : vector<16x8xf32>
    %428 = vector.shape_cast %427 : vector<16x8xf32> to vector<2x8x8xf32>
    %429 = arith.truncf %410 : vector<2x8x8xf32> to vector<2x8x8xbf16>
    %430 = arith.truncf %419 : vector<2x8x8xf32> to vector<2x8x8xbf16>
    "tpu.trace_start"() <{level = 10 : i32, message = "bqd,bkd->bqk"}> : () -> ()
    %cst_295 = arith.constant dense<0.000000e+00> : vector<2x8x8xf32>
    %431 = tpu.matmul %429, %430, %cst_295 {dimension_numbers = #tpu.dot_dimension_numbers<[2], [2], [1], [1], [0, 0, 0, 1, 1, 1], [0], [0]>} : vector<2x8x8xbf16>, vector<2x8x8xbf16>, vector<2x8x8xf32> -> vector<2x8x8xf32>
    "tpu.trace_stop"() : () -> ()
    %cst_296 = arith.constant dense<0xFF800000> : vector<2x8xf32>
    %432 = vector.multi_reduction <maximumf>, %431, %cst_296 [2] : vector<2x8x8xf32> to vector<2x8xf32>
    %433 = vector.shape_cast %432 : vector<2x8xf32> to vector<2x8x1xf32>
    %434 = vector.broadcast %433 : vector<2x8x1xf32> to vector<2x8x8xf32>
    %435 = arith.subf %431, %434 : vector<2x8x8xf32>
    %436 = math.exp %435 : vector<2x8x8xf32>
    %cst_297 = arith.constant dense<0.000000e+00> : vector<2x8xf32>
    %437 = vector.multi_reduction <add>, %436, %cst_297 [2] : vector<2x8x8xf32> to vector<2x8xf32>
    %438 = vector.shape_cast %437 : vector<2x8xf32> to vector<2x8x1xf32>
    %439 = tpu.reciprocal %438 {approx = true} : vector<2x8x1xf32> -> vector<2x8x1xf32>
    %440 = vector.broadcast %439 : vector<2x8x1xf32> to vector<2x8x8xf32>
    %441 = arith.mulf %436, %440 : vector<2x8x8xf32>
    %442 = arith.truncf %441 : vector<2x8x8xf32> to vector<2x8x8xbf16>
    %443 = arith.truncf %428 : vector<2x8x8xf32> to vector<2x8x8xbf16>
    "tpu.trace_start"() <{level = 10 : i32, message = "bqk,bkd->bqd"}> : () -> ()
    %cst_298 = arith.constant dense<0.000000e+00> : vector<2x8x8xf32>
    %444 = tpu.matmul %442, %443, %cst_298 {dimension_numbers = #tpu.dot_dimension_numbers<[2], [1], [1], [2], [0, 0, 0, 1, 1, 2], [0], [0]>} : vector<2x8x8xbf16>, vector<2x8x8xbf16>, vector<2x8x8xf32> -> vector<2x8x8xf32>
    "tpu.trace_stop"() : () -> ()
    %445 = vector.shape_cast %444 : vector<2x8x8xf32> to vector<16x8xf32>
    %c1_299 = arith.constant 1 : index
    %c2_300 = arith.constant 2 : index
    %c0_301 = arith.constant 0 : index
    %c0_302 = arith.constant 0 : index
    %446 = vector.load %arg9[%c1_299, %c2_300, %c0_301, %c0_302] : memref<2x4x8x32xbf16, #tpu.memory_space<vmem>>, vector<1x1x8x32xbf16>
    %447 = vector.shape_cast %446 : vector<1x1x8x32xbf16> to vector<8x32xbf16>
    %448 = arith.truncf %445 : vector<16x8xf32> to vector<16x8xbf16>
    %cst_303 = arith.constant dense<0.000000e+00> : vector<16x32xf32>
    %449 = tpu.matmul %448, %447, %cst_303 {dimension_numbers = #tpu.dot_dimension_numbers<[1], [0], [0], [1], [0, 0, 1, 1], [], []>} : vector<16x8xbf16>, vector<8x32xbf16>, vector<16x32xf32> -> vector<16x32xf32>
    %450 = arith.addf %401, %449 : vector<16x32xf32>
    %c1_304 = arith.constant 1 : index
    %c3_305 = arith.constant 3 : index
    %c0_306 = arith.constant 0 : index
    %c0_307 = arith.constant 0 : index
    %451 = vector.load %arg3[%c1_304, %c3_305, %c0_306, %c0_307] : memref<2x4x32x8xbf16, #tpu.memory_space<vmem>>, vector<1x1x32x8xbf16>
    %452 = vector.shape_cast %451 : vector<1x1x32x8xbf16> to vector<32x8xbf16>
    %453 = arith.truncf %300 : vector<16x32xf32> to vector<16x32xbf16>
    %cst_308 = arith.constant dense<0.000000e+00> : vector<16x8xf32>
    %454 = tpu.matmul %453, %452, %cst_308 {dimension_numbers = #tpu.dot_dimension_numbers<[1], [0], [0], [1], [0, 0, 1, 1], [], []>} : vector<16x32xbf16>, vector<32x8xbf16>, vector<16x8xf32> -> vector<16x8xf32>
    %c1_309 = arith.constant 1 : index
    %c3_310 = arith.constant 3 : index
    %c0_311 = arith.constant 0 : index
    %c0_312 = arith.constant 0 : index
    %455 = vector.load %arg4[%c1_309, %c3_310, %c0_311, %c0_312] : memref<2x4x1x8xf32, #tpu.memory_space<vmem>>, vector<1x1x1x8xf32>
    %456 = vector.shape_cast %455 : vector<1x1x1x8xf32> to vector<1x8xf32>
    %457 = vector.broadcast %456 : vector<1x8xf32> to vector<16x8xf32>
    %458 = arith.addf %454, %457 : vector<16x8xf32>
    %459 = vector.shape_cast %458 : vector<16x8xf32> to vector<2x8x8xf32>
    %c1_313 = arith.constant 1 : index
    %c3_314 = arith.constant 3 : index
    %c0_315 = arith.constant 0 : index
    %c0_316 = arith.constant 0 : index
    %460 = vector.load %arg5[%c1_313, %c3_314, %c0_315, %c0_316] : memref<2x4x32x8xbf16, #tpu.memory_space<vmem>>, vector<1x1x32x8xbf16>
    %461 = vector.shape_cast %460 : vector<1x1x32x8xbf16> to vector<32x8xbf16>
    %462 = arith.truncf %300 : vector<16x32xf32> to vector<16x32xbf16>
    %cst_317 = arith.constant dense<0.000000e+00> : vector<16x8xf32>
    %463 = tpu.matmul %462, %461, %cst_317 {dimension_numbers = #tpu.dot_dimension_numbers<[1], [0], [0], [1], [0, 0, 1, 1], [], []>} : vector<16x32xbf16>, vector<32x8xbf16>, vector<16x8xf32> -> vector<16x8xf32>
    %c1_318 = arith.constant 1 : index
    %c3_319 = arith.constant 3 : index
    %c0_320 = arith.constant 0 : index
    %c0_321 = arith.constant 0 : index
    %464 = vector.load %arg6[%c1_318, %c3_319, %c0_320, %c0_321] : memref<2x4x1x8xf32, #tpu.memory_space<vmem>>, vector<1x1x1x8xf32>
    %465 = vector.shape_cast %464 : vector<1x1x1x8xf32> to vector<1x8xf32>
    %466 = vector.broadcast %465 : vector<1x8xf32> to vector<16x8xf32>
    %467 = arith.addf %463, %466 : vector<16x8xf32>
    %468 = vector.shape_cast %467 : vector<16x8xf32> to vector<2x8x8xf32>
    %c1_322 = arith.constant 1 : index
    %c3_323 = arith.constant 3 : index
    %c0_324 = arith.constant 0 : index
    %c0_325 = arith.constant 0 : index
    %469 = vector.load %arg7[%c1_322, %c3_323, %c0_324, %c0_325] : memref<2x4x32x8xbf16, #tpu.memory_space<vmem>>, vector<1x1x32x8xbf16>
    %470 = vector.shape_cast %469 : vector<1x1x32x8xbf16> to vector<32x8xbf16>
    %471 = arith.truncf %300 : vector<16x32xf32> to vector<16x32xbf16>
    %cst_326 = arith.constant dense<0.000000e+00> : vector<16x8xf32>
    %472 = tpu.matmul %471, %470, %cst_326 {dimension_numbers = #tpu.dot_dimension_numbers<[1], [0], [0], [1], [0, 0, 1, 1], [], []>} : vector<16x32xbf16>, vector<32x8xbf16>, vector<16x8xf32> -> vector<16x8xf32>
    %c1_327 = arith.constant 1 : index
    %c3_328 = arith.constant 3 : index
    %c0_329 = arith.constant 0 : index
    %c0_330 = arith.constant 0 : index
    %473 = vector.load %arg8[%c1_327, %c3_328, %c0_329, %c0_330] : memref<2x4x1x8xf32, #tpu.memory_space<vmem>>, vector<1x1x1x8xf32>
    %474 = vector.shape_cast %473 : vector<1x1x1x8xf32> to vector<1x8xf32>
    %475 = vector.broadcast %474 : vector<1x8xf32> to vector<16x8xf32>
    %476 = arith.addf %472, %475 : vector<16x8xf32>
    %477 = vector.shape_cast %476 : vector<16x8xf32> to vector<2x8x8xf32>
    %478 = arith.truncf %459 : vector<2x8x8xf32> to vector<2x8x8xbf16>
    %479 = arith.truncf %468 : vector<2x8x8xf32> to vector<2x8x8xbf16>
    "tpu.trace_start"() <{level = 10 : i32, message = "bqd,bkd->bqk"}> : () -> ()
    %cst_331 = arith.constant dense<0.000000e+00> : vector<2x8x8xf32>
    %480 = tpu.matmul %478, %479, %cst_331 {dimension_numbers = #tpu.dot_dimension_numbers<[2], [2], [1], [1], [0, 0, 0, 1, 1, 1], [0], [0]>} : vector<2x8x8xbf16>, vector<2x8x8xbf16>, vector<2x8x8xf32> -> vector<2x8x8xf32>
    "tpu.trace_stop"() : () -> ()
    %cst_332 = arith.constant dense<0xFF800000> : vector<2x8xf32>
    %481 = vector.multi_reduction <maximumf>, %480, %cst_332 [2] : vector<2x8x8xf32> to vector<2x8xf32>
    %482 = vector.shape_cast %481 : vector<2x8xf32> to vector<2x8x1xf32>
    %483 = vector.broadcast %482 : vector<2x8x1xf32> to vector<2x8x8xf32>
    %484 = arith.subf %480, %483 : vector<2x8x8xf32>
    %485 = math.exp %484 : vector<2x8x8xf32>
    %cst_333 = arith.constant dense<0.000000e+00> : vector<2x8xf32>
    %486 = vector.multi_reduction <add>, %485, %cst_333 [2] : vector<2x8x8xf32> to vector<2x8xf32>
    %487 = vector.shape_cast %486 : vector<2x8xf32> to vector<2x8x1xf32>
    %488 = tpu.reciprocal %487 {approx = true} : vector<2x8x1xf32> -> vector<2x8x1xf32>
    %489 = vector.broadcast %488 : vector<2x8x1xf32> to vector<2x8x8xf32>
    %490 = arith.mulf %485, %489 : vector<2x8x8xf32>
    %491 = arith.truncf %490 : vector<2x8x8xf32> to vector<2x8x8xbf16>
    %492 = arith.truncf %477 : vector<2x8x8xf32> to vector<2x8x8xbf16>
    "tpu.trace_start"() <{level = 10 : i32, message = "bqk,bkd->bqd"}> : () -> ()
    %cst_334 = arith.constant dense<0.000000e+00> : vector<2x8x8xf32>
    %493 = tpu.matmul %491, %492, %cst_334 {dimension_numbers = #tpu.dot_dimension_numbers<[2], [1], [1], [2], [0, 0, 0, 1, 1, 2], [0], [0]>} : vector<2x8x8xbf16>, vector<2x8x8xbf16>, vector<2x8x8xf32> -> vector<2x8x8xf32>
    "tpu.trace_stop"() : () -> ()
    %494 = vector.shape_cast %493 : vector<2x8x8xf32> to vector<16x8xf32>
    %c1_335 = arith.constant 1 : index
    %c3_336 = arith.constant 3 : index
    %c0_337 = arith.constant 0 : index
    %c0_338 = arith.constant 0 : index
    %495 = vector.load %arg9[%c1_335, %c3_336, %c0_337, %c0_338] : memref<2x4x8x32xbf16, #tpu.memory_space<vmem>>, vector<1x1x8x32xbf16>
    %496 = vector.shape_cast %495 : vector<1x1x8x32xbf16> to vector<8x32xbf16>
    %497 = arith.truncf %494 : vector<16x8xf32> to vector<16x8xbf16>
    %cst_339 = arith.constant dense<0.000000e+00> : vector<16x32xf32>
    %498 = tpu.matmul %497, %496, %cst_339 {dimension_numbers = #tpu.dot_dimension_numbers<[1], [0], [0], [1], [0, 0, 1, 1], [], []>} : vector<16x8xbf16>, vector<8x32xbf16>, vector<16x32xf32> -> vector<16x32xf32>
    %499 = arith.addf %450, %498 : vector<16x32xf32>
    %500 = arith.addf %300, %499 : vector<16x32xf32>
    %c1_340 = arith.constant 1 : index
    %c0_341 = arith.constant 0 : index
    %c0_342 = arith.constant 0 : index
    %501 = vector.load %arg11[%c1_340, %c0_341, %c0_342] : memref<2x1x32xf32, #tpu.memory_space<vmem>>, vector<1x1x32xf32>
    %502 = vector.shape_cast %501 : vector<1x1x32xf32> to vector<1x32xf32>
    %c1_343 = arith.constant 1 : index
    %c0_344 = arith.constant 0 : index
    %c0_345 = arith.constant 0 : index
    %503 = vector.load %arg12[%c1_343, %c0_344, %c0_345] : memref<2x1x32xf32, #tpu.memory_space<vmem>>, vector<1x1x32xf32>
    %504 = vector.shape_cast %503 : vector<1x1x32xf32> to vector<1x32xf32>
    %cst_346 = arith.constant dense<0.000000e+00> : vector<16xf32>
    %505 = vector.multi_reduction <add>, %500, %cst_346 [1] : vector<16x32xf32> to vector<16xf32>
    %506 = vector.shape_cast %505 : vector<16xf32> to vector<16x1xf32>
    %cst_347 = arith.constant 3.200000e+01 : f32
    %507 = vector.broadcast %cst_347 : f32 to vector<16x1xf32>
    %508 = arith.divf %506, %507 : vector<16x1xf32>
    %509 = vector.broadcast %508 : vector<16x1xf32> to vector<16x32xf32>
    %510 = arith.subf %500, %509 : vector<16x32xf32>
    %511 = arith.mulf %510, %510 : vector<16x32xf32>
    %cst_348 = arith.constant dense<0.000000e+00> : vector<16xf32>
    %512 = vector.multi_reduction <add>, %511, %cst_348 [1] : vector<16x32xf32> to vector<16xf32>
    %513 = vector.shape_cast %512 : vector<16xf32> to vector<16x1xf32>
    %cst_349 = arith.constant 3.200000e+01 : f32
    %514 = vector.broadcast %cst_349 : f32 to vector<16x1xf32>
    %515 = arith.divf %513, %514 : vector<16x1xf32>
    %cst_350 = arith.constant 9.99999996E-13 : f32
    %516 = vector.broadcast %cst_350 : f32 to vector<16x1xf32>
    %517 = arith.addf %515, %516 : vector<16x1xf32>
    %518 = math.rsqrt %517 : vector<16x1xf32>
    %519 = vector.broadcast %518 : vector<16x1xf32> to vector<16x32xf32>
    %520 = arith.mulf %510, %519 : vector<16x32xf32>
    %521 = vector.broadcast %502 : vector<1x32xf32> to vector<16x32xf32>
    %522 = arith.mulf %521, %520 : vector<16x32xf32>
    %523 = vector.broadcast %504 : vector<1x32xf32> to vector<16x32xf32>
    %524 = arith.addf %522, %523 : vector<16x32xf32>
    %c1_351 = arith.constant 1 : index
    %c0_352 = arith.constant 0 : index
    %c0_353 = arith.constant 0 : index
    %525 = vector.load %arg13[%c1_351, %c0_352, %c0_353] : memref<2x32x64xbf16, #tpu.memory_space<vmem>>, vector<1x32x64xbf16>
    %526 = vector.shape_cast %525 : vector<1x32x64xbf16> to vector<32x64xbf16>
    %527 = arith.truncf %524 : vector<16x32xf32> to vector<16x32xbf16>
    %cst_354 = arith.constant dense<0.000000e+00> : vector<16x64xf32>
    %528 = tpu.matmul %527, %526, %cst_354 {dimension_numbers = #tpu.dot_dimension_numbers<[1], [0], [0], [1], [0, 0, 1, 1], [], []>} : vector<16x32xbf16>, vector<32x64xbf16>, vector<16x64xf32> -> vector<16x64xf32>
    %c1_355 = arith.constant 1 : index
    %c0_356 = arith.constant 0 : index
    %c0_357 = arith.constant 0 : index
    %529 = vector.load %arg14[%c1_355, %c0_356, %c0_357] : memref<2x1x64xf32, #tpu.memory_space<vmem>>, vector<1x1x64xf32>
    %530 = vector.shape_cast %529 : vector<1x1x64xf32> to vector<1x64xf32>
    %531 = vector.broadcast %530 : vector<1x64xf32> to vector<16x64xf32>
    %532 = arith.addf %528, %531 : vector<16x64xf32>
    %533 = arith.mulf %532, %532 : vector<16x64xf32>
    %534 = arith.mulf %532, %533 : vector<16x64xf32>
    %cst_358 = arith.constant 4.471500e-02 : f32
    %535 = vector.broadcast %cst_358 : f32 to vector<16x64xf32>
    %536 = arith.mulf %535, %534 : vector<16x64xf32>
    %537 = arith.addf %532, %536 : vector<16x64xf32>
    %cst_359 = arith.constant 0.797884583 : f32
    %538 = vector.broadcast %cst_359 : f32 to vector<16x64xf32>
    %539 = arith.mulf %538, %537 : vector<16x64xf32>
    %540 = math.tanh %539 : vector<16x64xf32>
    %cst_360 = arith.constant 1.000000e+00 : f32
    %541 = vector.broadcast %cst_360 : f32 to vector<16x64xf32>
    %542 = arith.addf %541, %540 : vector<16x64xf32>
    %cst_361 = arith.constant 5.000000e-01 : f32
    %543 = vector.broadcast %cst_361 : f32 to vector<16x64xf32>
    %544 = arith.mulf %543, %542 : vector<16x64xf32>
    %545 = arith.mulf %532, %544 : vector<16x64xf32>
    %c1_362 = arith.constant 1 : index
    %c0_363 = arith.constant 0 : index
    %c0_364 = arith.constant 0 : index
    %546 = vector.load %arg15[%c1_362, %c0_363, %c0_364] : memref<2x64x32xbf16, #tpu.memory_space<vmem>>, vector<1x64x32xbf16>
    %547 = vector.shape_cast %546 : vector<1x64x32xbf16> to vector<64x32xbf16>
    %548 = arith.truncf %545 : vector<16x64xf32> to vector<16x64xbf16>
    %cst_365 = arith.constant dense<0.000000e+00> : vector<16x32xf32>
    %549 = tpu.matmul %548, %547, %cst_365 {dimension_numbers = #tpu.dot_dimension_numbers<[1], [0], [0], [1], [0, 0, 1, 1], [], []>} : vector<16x64xbf16>, vector<64x32xbf16>, vector<16x32xf32> -> vector<16x32xf32>
    %c1_366 = arith.constant 1 : index
    %c0_367 = arith.constant 0 : index
    %c0_368 = arith.constant 0 : index
    %550 = vector.load %arg16[%c1_366, %c0_367, %c0_368] : memref<2x1x32xf32, #tpu.memory_space<vmem>>, vector<1x1x32xf32>
    %551 = vector.shape_cast %550 : vector<1x1x32xf32> to vector<1x32xf32>
    %552 = vector.broadcast %551 : vector<1x32xf32> to vector<16x32xf32>
    %553 = arith.addf %549, %552 : vector<16x32xf32>
    %554 = arith.addf %524, %553 : vector<16x32xf32>
    %c1_369 = arith.constant 1 : index
    %c0_370 = arith.constant 0 : index
    %c0_371 = arith.constant 0 : index
    %555 = vector.load %arg17[%c1_369, %c0_370, %c0_371] : memref<2x1x32xf32, #tpu.memory_space<vmem>>, vector<1x1x32xf32>
    %556 = vector.shape_cast %555 : vector<1x1x32xf32> to vector<1x32xf32>
    %c1_372 = arith.constant 1 : index
    %c0_373 = arith.constant 0 : index
    %c0_374 = arith.constant 0 : index
    %557 = vector.load %arg18[%c1_372, %c0_373, %c0_374] : memref<2x1x32xf32, #tpu.memory_space<vmem>>, vector<1x1x32xf32>
    %558 = vector.shape_cast %557 : vector<1x1x32xf32> to vector<1x32xf32>
    %cst_375 = arith.constant dense<0.000000e+00> : vector<16xf32>
    %559 = vector.multi_reduction <add>, %554, %cst_375 [1] : vector<16x32xf32> to vector<16xf32>
    %560 = vector.shape_cast %559 : vector<16xf32> to vector<16x1xf32>
    %cst_376 = arith.constant 3.200000e+01 : f32
    %561 = vector.broadcast %cst_376 : f32 to vector<16x1xf32>
    %562 = arith.divf %560, %561 : vector<16x1xf32>
    %563 = vector.broadcast %562 : vector<16x1xf32> to vector<16x32xf32>
    %564 = arith.subf %554, %563 : vector<16x32xf32>
    %565 = arith.mulf %564, %564 : vector<16x32xf32>
    %cst_377 = arith.constant dense<0.000000e+00> : vector<16xf32>
    %566 = vector.multi_reduction <add>, %565, %cst_377 [1] : vector<16x32xf32> to vector<16xf32>
    %567 = vector.shape_cast %566 : vector<16xf32> to vector<16x1xf32>
    %cst_378 = arith.constant 3.200000e+01 : f32
    %568 = vector.broadcast %cst_378 : f32 to vector<16x1xf32>
    %569 = arith.divf %567, %568 : vector<16x1xf32>
    %cst_379 = arith.constant 9.99999996E-13 : f32
    %570 = vector.broadcast %cst_379 : f32 to vector<16x1xf32>
    %571 = arith.addf %569, %570 : vector<16x1xf32>
    %572 = math.rsqrt %571 : vector<16x1xf32>
    %573 = vector.broadcast %572 : vector<16x1xf32> to vector<16x32xf32>
    %574 = arith.mulf %564, %573 : vector<16x32xf32>
    %575 = vector.broadcast %556 : vector<1x32xf32> to vector<16x32xf32>
    %576 = arith.mulf %575, %574 : vector<16x32xf32>
    %577 = vector.broadcast %558 : vector<1x32xf32> to vector<16x32xf32>
    %578 = arith.addf %576, %577 : vector<16x32xf32>
    %579 = vector.shape_cast %578 : vector<16x32xf32> to vector<2x8x32xf32>
    %580 = vector.extract_strided_slice %579 {offsets = [0, 0, 0], sizes = [2, 1, 32], strides = [1, 1, 1]} : vector<2x8x32xf32> to vector<2x1x32xf32>
    %581 = vector.shape_cast %580 : vector<2x1x32xf32> to vector<2x32xf32>
    %c0_380 = arith.constant 0 : index
    %c0_381 = arith.constant 0 : index
    %582 = vector.load %arg19[%c0_380, %c0_381] : memref<32x32xbf16, #tpu.memory_space<vmem>>, vector<32x32xbf16>
    %583 = arith.truncf %581 : vector<2x32xf32> to vector<2x32xbf16>
    %cst_382 = arith.constant dense<0.000000e+00> : vector<2x32xf32>
    %584 = tpu.matmul %583, %582, %cst_382 {dimension_numbers = #tpu.dot_dimension_numbers<[1], [0], [0], [1], [0, 0, 1, 1], [], []>} : vector<2x32xbf16>, vector<32x32xbf16>, vector<2x32xf32> -> vector<2x32xf32>
    %c0_383 = arith.constant 0 : index
    %c0_384 = arith.constant 0 : index
    %585 = vector.load %arg20[%c0_383, %c0_384] : memref<1x32xf32, #tpu.memory_space<vmem>>, vector<1x32xf32>
    %586 = vector.broadcast %585 : vector<1x32xf32> to vector<2x32xf32>
    %587 = arith.addf %584, %586 : vector<2x32xf32>
    %588 = math.tanh %587 : vector<2x32xf32>
    %c0_385 = arith.constant 0 : index
    %c0_386 = arith.constant 0 : index
    %589 = vector.load %arg21[%c0_385, %c0_386] : memref<32x128xbf16, #tpu.memory_space<vmem>>, vector<32x128xbf16>
    %590 = arith.truncf %588 : vector<2x32xf32> to vector<2x32xbf16>
    %cst_387 = arith.constant dense<0.000000e+00> : vector<2x128xf32>
    %591 = tpu.matmul %590, %589, %cst_387 {dimension_numbers = #tpu.dot_dimension_numbers<[1], [0], [0], [1], [0, 0, 1, 1], [], []>} : vector<2x32xbf16>, vector<32x128xbf16>, vector<2x128xf32> -> vector<2x128xf32>
    %c0_388 = arith.constant 0 : index
    %c0_389 = arith.constant 0 : index
    %592 = vector.load %arg22[%c0_388, %c0_389] : memref<1x128xf32, #tpu.memory_space<vmem>>, vector<1x128xf32>
    %593 = vector.broadcast %592 : vector<1x128xf32> to vector<2x128xf32>
    %594 = arith.addf %591, %593 : vector<2x128xf32>
    %c0_390 = arith.constant 0 : index
    %c0_391 = arith.constant 0 : index
    %595 = vector.load %arg23[%c0_390, %c0_391] : memref<2x128xf32, #tpu.memory_space<vmem>>, vector<2x128xf32>
    tpu.vector_store %arg23[%c0_390, %c0_391], %594 {strides = array<i32>} : memref<2x128xf32, #tpu.memory_space<vmem>>, vector<2x128xf32>,
    return
  }
}

</mosaic_0001>

<llo_original>
// kernel: bert_forward.1
$region0: #{bert_forward.1}
  #allocation0 [shape = 'u32[]', space=smem, size = 0x4, offset = 0x4, fixed_abs, tag = 'smem constant byte address 0x4 - core index']
  #allocation1 [shape = 'u32[144,128]{1,0:T(1,128)}', space=vmem, size = 0x12000, scoped, tag = 'internal scratch']
  %s0 = inlined_call_operand.vmem [shape: f32[16,32], index: 0, kind: input, shape index: {}]
  %s1 = inlined_call_operand.vmem [shape: f32[1,32], index: 1, kind: input, shape index: {}]
  %s2 = inlined_call_operand.vmem [shape: f32[1,32], index: 2, kind: input, shape index: {}]
  %s3 = inlined_call_operand.vmem [shape: bf16[2,4,32,8], index: 3, kind: input, shape index: {}]
  %s4 = inlined_call_operand.vmem [shape: f32[2,4,1,8], index: 4, kind: input, shape index: {}]
  %s5 = inlined_call_operand.vmem [shape: bf16[2,4,32,8], index: 5, kind: input, shape index: {}]
  %s6 = inlined_call_operand.vmem [shape: f32[2,4,1,8], index: 6, kind: input, shape index: {}]
  %s7 = inlined_call_operand.vmem [shape: bf16[2,4,32,8], index: 7, kind: input, shape index: {}]
  %s8 = inlined_call_operand.vmem [shape: f32[2,4,1,8], index: 8, kind: input, shape index: {}]
  %s9 = inlined_call_operand.vmem [shape: bf16[2,4,8,32], index: 9, kind: input, shape index: {}]
  %s10 = inlined_call_operand.vmem [shape: f32[2,1,32], index: 10, kind: input, shape index: {}]
  %s11 = inlined_call_operand.vmem [shape: f32[2,1,32], index: 11, kind: input, shape index: {}]
  %s12 = inlined_call_operand.vmem [shape: f32[2,1,32], index: 12, kind: input, shape index: {}]
  %s13 = inlined_call_operand.vmem [shape: bf16[2,32,64], index: 13, kind: input, shape index: {}]
  %s14 = inlined_call_operand.vmem [shape: f32[2,1,64], index: 14, kind: input, shape index: {}]
  %s15 = inlined_call_operand.vmem [shape: bf16[2,64,32], index: 15, kind: input, shape index: {}]
  %s16 = inlined_call_operand.vmem [shape: f32[2,1,32], index: 16, kind: input, shape index: {}]
  %s17 = inlined_call_operand.vmem [shape: f32[2,1,32], index: 17, kind: input, shape index: {}]
  %s18 = inlined_call_operand.vmem [shape: f32[2,1,32], index: 18, kind: input, shape index: {}]
  %s19 = inlined_call_operand.vmem [shape: bf16[32,32], index: 19, kind: input, shape index: {}]
  %s20 = inlined_call_operand.vmem [shape: f32[1,32], index: 20, kind: input, shape index: {}]
  %s21 = inlined_call_operand.vmem [shape: bf16[32,128], index: 21, kind: input, shape index: {}]
  %s22 = inlined_call_operand.vmem [shape: f32[1,128], index: 22, kind: input, shape index: {}]
  %s23 = inlined_call_operand.hbm [shape: f32[2,128], index: 23, kind: output, shape index: {}]
  %s24 = sld [smem:[#allocation0]]
  $region102: #{bert_forward.1} parent=0
    _
  %s26 = ssub.s32 1, %s24
  %s27 = scalar_select 0, %s26, %s24
  $region1: #{bert_forward.1} parent=0
    #allocation2 [shape = 'u8[1024]{0}', space=vmem, size = 0x400, scoped, tag = 'output window, operand 0, single buffered']
    #allocation3 [shape = 's32[1]{0}', space=sflag, size = 0x4, scoped, tag = 'scoped memory for bert_forward.1']
    %28 = vsyncpa [#allocation3], 0
    // Predicated region
    $region2: #{bert_forward.1} parent=1 // pred_check
      _
    $region3: #{bert_forward.1} parent=1 // pred_check_branch
      %30 = sbr.rel (0) target = $region5
    $region4: #{bert_forward.1} parent=1 // pred_region
      _
    $region5: #{bert_forward.1} parent=1 // pred_fallthru
      _
    // Predicated region
    $region6: #{bert_forward.1} parent=1 // pred_check
      _
    $region7: #{bert_forward.1} parent=1 // pred_check_branch
      %32 = sbr.rel (0) target = $region9
    $region8: #{bert_forward.1} parent=1 // pred_region
      _
    $region9: #{bert_forward.1} parent=1 // pred_fallthru
      _
    // Predicated region
    $region10: #{bert_forward.1} parent=1 // pred_check
      _
    $region11: #{bert_forward.1} parent=1 // pred_check_branch
      %34 = sbr.rel (0) target = $region13
    $region12: #{bert_forward.1} parent=1 // pred_region
      _
    $region13: #{bert_forward.1} parent=1 // pred_fallthru
      _
    // Predicated region
    $region14: #{bert_forward.1} parent=1 // pred_check
      _
    $region15: #{bert_forward.1} parent=1 // pred_check_branch
      %36 = sbr.rel (0) target = $region17
    $region16: #{bert_forward.1} parent=1 // pred_region
      _
    $region17: #{bert_forward.1} parent=1 // pred_fallthru
      _
    // Predicated region
    $region18: #{bert_forward.1} parent=1 // pred_check
      _
    $region19: #{bert_forward.1} parent=1 // pred_check_branch
      %38 = sbr.rel (0) target = $region21
    $region20: #{bert_forward.1} parent=1 // pred_region
      _
    $region21: #{bert_forward.1} parent=1 // pred_fallthru
      _
    // Predicated region
    $region22: #{bert_forward.1} parent=1 // pred_check
      _
    $region23: #{bert_forward.1} parent=1 // pred_check_branch
      %40 = sbr.rel (0) target = $region25
    $region24: #{bert_forward.1} parent=1 // pred_region
      _
    $region25: #{bert_forward.1} parent=1 // pred_fallthru
      _
    // Predicated region
    $region26: #{bert_forward.1} parent=1 // pred_check
      _
    $region27: #{bert_forward.1} parent=1 // pred_check_branch
      %42 = sbr.rel (0) target = $region29
    $region28: #{bert_forward.1} parent=1 // pred_region
      _
    $region29: #{bert_forward.1} parent=1 // pred_fallthru
      _
    // Predicated region
    $region30: #{bert_forward.1} parent=1 // pred_check
      _
    $region31: #{bert_forward.1} parent=1 // pred_check_branch
      %44 = sbr.rel (0) target = $region33
    $region32: #{bert_forward.1} parent=1 // pred_region
      _
    $region33: #{bert_forward.1} parent=1 // pred_fallthru
      _
    // Predicated region
    $region34: #{bert_forward.1} parent=1 // pred_check
      _
    $region35: #{bert_forward.1} parent=1 // pred_check_branch
      %46 = sbr.rel (0) target = $region37
    $region36: #{bert_forward.1} parent=1 // pred_region
      _
    $region37: #{bert_forward.1} parent=1 // pred_fallthru
      _
    // Predicated region
    $region38: #{bert_forward.1} parent=1 // pred_check
      _
    $region39: #{bert_forward.1} parent=1 // pred_check_branch
      %48 = sbr.rel (0) target = $region41
    $region40: #{bert_forward.1} parent=1 // pred_region
      _
    $region41: #{bert_forward.1} parent=1 // pred_fallthru
      _
    // Predicated region
    $region42: #{bert_forward.1} parent=1 // pred_check
      _
    $region43: #{bert_forward.1} parent=1 // pred_check_branch
      %50 = sbr.rel (0) target = $region45
    $region44: #{bert_forward.1} parent=1 // pred_region
      _
    $region45: #{bert_forward.1} parent=1 // pred_fallthru
      _
    // Predicated region
    $region46: #{bert_forward.1} parent=1 // pred_check
      _
    $region47: #{bert_forward.1} parent=1 // pred_check_branch
      %52 = sbr.rel (0) target = $region49
    $region48: #{bert_forward.1} parent=1 // pred_region
      _
    $region49: #{bert_forward.1} parent=1 // pred_fallthru
      _
    // Predicated region
    $region50: #{bert_forward.1} parent=1 // pred_check
      _
    $region51: #{bert_forward.1} parent=1 // pred_check_branch
      %54 = sbr.rel (0) target = $region53
    $region52: #{bert_forward.1} parent=1 // pred_region
      _
    $region53: #{bert_forward.1} parent=1 // pred_fallthru
      _
    // Predicated region
    $region54: #{bert_forward.1} parent=1 // pred_check
      _
    $region55: #{bert_forward.1} parent=1 // pred_check_branch
      %56 = sbr.rel (0) target = $region57
    $region56: #{bert_forward.1} parent=1 // pred_region
      _
    $region57: #{bert_forward.1} parent=1 // pred_fallthru
      _
    // Predicated region
    $region58: #{bert_forward.1} parent=1 // pred_check
      _
    $region59: #{bert_forward.1} parent=1 // pred_check_branch
      %58 = sbr.rel (0) target = $region61
    $region60: #{bert_forward.1} parent=1 // pred_region
      _
    $region61: #{bert_forward.1} parent=1 // pred_fallthru
      _
    // Predicated region
    $region62: #{bert_forward.1} parent=1 // pred_check
      _
    $region63: #{bert_forward.1} parent=1 // pred_check_branch
      %60 = sbr.rel (0) target = $region65
    $region64: #{bert_forward.1} parent=1 // pred_region
      _
    $region65: #{bert_forward.1} parent=1 // pred_fallthru
      _
    // Predicated region
    $region66: #{bert_forward.1} parent=1 // pred_check
      _
    $region67: #{bert_forward.1} parent=1 // pred_check_branch
      %62 = sbr.rel (0) target = $region69
    $region68: #{bert_forward.1} parent=1 // pred_region
      _
    $region69: #{bert_forward.1} parent=1 // pred_fallthru
      _
    // Predicated region
    $region70: #{bert_forward.1} parent=1 // pred_check
      _
    $region71: #{bert_forward.1} parent=1 // pred_check_branch
      %64 = sbr.rel (0) target = $region73
    $region72: #{bert_forward.1} parent=1 // pred_region
      _
    $region73: #{bert_forward.1} parent=1 // pred_fallthru
      _
    // Predicated region
    $region74: #{bert_forward.1} parent=1 // pred_check
      _
    $region75: #{bert_forward.1} parent=1 // pred_check_branch
      %66 = sbr.rel (0) target = $region77
    $region76: #{bert_forward.1} parent=1 // pred_region
      _
    $region77: #{bert_forward.1} parent=1 // pred_fallthru
      _
    // Predicated region
    $region78: #{bert_forward.1} parent=1 // pred_check
      _
    $region79: #{bert_forward.1} parent=1 // pred_check_branch
      %68 = sbr.rel (0) target = $region81
    $region80: #{bert_forward.1} parent=1 // pred_region
      _
    $region81: #{bert_forward.1} parent=1 // pred_fallthru
      _
    // Predicated region
    $region82: #{bert_forward.1} parent=1 // pred_check
      _
    $region83: #{bert_forward.1} parent=1 // pred_check_branch
      %70 = sbr.rel (0) target = $region85
    $region84: #{bert_forward.1} parent=1 // pred_region
      _
    $region85: #{bert_forward.1} parent=1 // pred_fallthru
      _
    // Predicated region
    $region86: #{bert_forward.1} parent=1 // pred_check
      _
    $region87: #{bert_forward.1} parent=1 // pred_check_branch
      %72 = sbr.rel (0) target = $region89
    $region88: #{bert_forward.1} parent=1 // pred_region
      _
    $region89: #{bert_forward.1} parent=1 // pred_fallthru
      _
    // Predicated region
    $region90: #{bert_forward.1} parent=1 // pred_check
      _
    $region91: #{bert_forward.1} parent=1 // pred_check_branch
      %74 = sbr.rel (0) target = $region93
    $region92: #{bert_forward.1} parent=1 // pred_region
      _
    $region93: #{bert_forward.1} parent=1 // pred_fallthru
      _
    %v76 = vld [vmem:[%s0] sm:$0xff]
    %v77 = vld [vmem:[%s0 + $0x8] sm:$0xff]
    %v78 = vld [vmem:[%s1] sm:$0x1]
    %v79 = vld [vmem:[%s2] sm:$0x1]
    %vm80 = vcmask 261120
    %v81 = vsel %vm80, %v76, 0.0
    %82 = vadd.xlane.f32.xlu0 %v81
    %v83 = vpop.xlane.xlu0 %82
    %v84 = vsel %vm80, %v77, 0.0
    %85 = vadd.xlane.f32.xlu0 %v84
    %v86 = vpop.xlane.xlu0 %85
    %v87 = vrcp.pop 32.0
    %v88 = vmul.f32 %v83, %v87
    %v89 = vmul.f32 %v86, %v87
    %v90 = vsub.f32 %v76, %v88
    %v91 = vsub.f32 %v77, %v89
    %v92 = vmul.f32 %v90, %v90
    %v93 = vmul.f32 %v91, %v91
    %v94 = vsel %vm80, %v92, 0.0
    %95 = vadd.xlane.f32.xlu0 %v94
    %v96 = vpop.xlane.xlu0 %95
    %v97 = vsel %vm80, %v93, 0.0
    %98 = vadd.xlane.f32.xlu0 %v97
    %v99 = vpop.xlane.xlu0 %98
    %v100 = vmul.f32 %v96, %v87
    %v101 = vmul.f32 %v99, %v87
    %v102 = vadd.f32 %v100, 1e-12
    %v103 = vadd.f32 %v101, 1e-12
    %v104 = vrsqrt.pop %v102
    %v105 = vrsqrt.pop %v103
    %v106 = vmul.f32 %v90, %v104
    %v107 = vmul.f32 %v91, %v105
    %v109 = vlaneseq
    %v110 = vshrl.u32 %v109, 7
    %v111 = vsub.s32 0, %v110
    %v112 = vrot.slane %v78, %v111
    %v114 = vmul.f32 %v112, %v106
    %v115 = vmul.f32 %v112, %v107
    %v117 = vlaneseq
    %v118 = vshrl.u32 %v117, 7
    %v119 = vsub.s32 0, %v118
    %v120 = vrot.slane %v79, %v119
    %v122 = vadd.f32 %v114, %v120
    %v123 = vadd.f32 %v115, %v120
    %v124 = vld [vmem:[%s10] sm:$0x1]
    %v125 = vld [vmem:[%s3] sm:$0xf]
    %v126 = vld [vmem:[%s3 + $0x4] sm:$0xf]
    %v127 = vld [vmem:[%s3 + $0x8] sm:$0xf]
    %v128 = vld [vmem:[%s3 + $0xc] sm:$0xf]
    %v129 = vpack.c.bf16 %v123, %v122
    %v130 = vld [vmem:[%s4] sm:$0x1]
    %v132 = vlaneseq
    %v133 = vshrl.u32 %v132, 7
    %v134 = vsub.s32 0, %v133
    %v135 = vrot.slane %v130, %v134
    %v141 = vunpack.c.l.b16 %v125
    %v142 = vunpack.c.l.b16 %v126
    %v143 = vunpack.c.l.b16 %v127
    %v144 = vunpack.c.l.b16 %v128
    %v145 = vpack.c.b16 %v142, %v141
    %v146 = vpack.c.b16 %v144, %v143
    %v150 = vsel %vm80, %v129, 0
    %152 = vmatprep.subr.bf16.mxu0 0
    %153 = vmatpush1.bf16.msra.mxu0 %v145
    %154 = vmatprep.subr.bf16.mxu0 0
    %155 = vmatpush1.bf16.msra.mxu0 %v146
    %156 = vmatprep.subr.bf16.mxu0 0
    %157 = vmatpush1.bf16.msra.mxu0 0
    %158 = vmatprep.subr.bf16.mxu0 0
    %159 = vmatpush1.bf16.msra.mxu0 0
    %160 = vmatprep.subr.bf16.mxu0 0
    %161 = vmatpush1.bf16.msra.mxu0 0
    %162 = vmatprep.subr.bf16.mxu0 0
    %163 = vmatpush1.bf16.msra.mxu0 0
    %164 = vmatprep.subr.bf16.mxu0 0
    %165 = vmatpush1.bf16.msra.mxu0 0
    %166 = vmatprep.subr.bf16.mxu0 0
    %167 = vmatpush1.bf16.msra.mxu0 0
    %168 = vmatprep.subr.bf16.mxu0 0
    %169 = vmatpush1.bf16.msra.mxu0 0
    %170 = vmatprep.subr.bf16.mxu0 0
    %171 = vmatpush1.bf16.msra.mxu0 0
    %172 = vmatprep.subr.bf16.mxu0 0
    %173 = vmatpush1.bf16.msra.mxu0 0
    %174 = vmatprep.subr.bf16.mxu0 0
    %175 = vmatpush1.bf16.msra.mxu0 0
    %176 = vmatprep.subr.bf16.mxu0 0
    %177 = vmatpush1.bf16.msra.mxu0 0
    %178 = vmatprep.subr.bf16.mxu0 0
    %179 = vmatpush1.bf16.msra.mxu0 0
    %180 = vmatprep.subr.bf16.mxu0 0
    %181 = vmatpush1.bf16.msra.mxu0 0
    %182 = vmatprep.subr.bf16.mxu0 0
    %183 = vmatpush1.bf16.msra.mxu0 0
    %184 = vmatprep.mubr.bf16.mxu0 0
    %185 = vmatmul.mubr.bf16.gmra.mrb[0].mxu0 %v150
    %v186 = vpop.f32.mrb[0].mxu0
    %v187 = vadd.f32 %v135, %v186
    %v188 = vpop.f32.mrb[0].mxu0
    %v189 = vpop.f32.mrb[0].mxu0
    %v190 = vadd.f32 %v135, %v189
    %v191 = vpop.f32.mrb[0].mxu0
    %192 = vdwg.mxu0
    %v193 = vld [vmem:[%s5] sm:$0xf]
    %v194 = vld [vmem:[%s5 + $0x4] sm:$0xf]
    %v195 = vld [vmem:[%s5 + $0x8] sm:$0xf]
    %v196 = vld [vmem:[%s5 + $0xc] sm:$0xf]
    %v197 = vld [vmem:[%s6] sm:$0x1]
    %v199 = vlaneseq
    %v200 = vshrl.u32 %v199, 7
    %v201 = vsub.s32 0, %v200
    %v202 = vrot.slane %v197, %v201
    %v208 = vunpack.c.l.b16 %v193
    %v209 = vunpack.c.l.b16 %v194
    %v210 = vunpack.c.l.b16 %v195
    %v211 = vunpack.c.l.b16 %v196
    %v212 = vpack.c.b16 %v209, %v208
    %v213 = vpack.c.b16 %v211, %v210
    %216 = vmatprep.subr.bf16.mxu0 0
    %217 = vmatpush1.bf16.msra.mxu0 %v212
    %218 = vmatprep.subr.bf16.mxu0 0
    %219 = vmatpush1.bf16.msra.mxu0 %v213
    %220 = vmatprep.subr.bf16.mxu0 0
    %221 = vmatpush1.bf16.msra.mxu0 0
    %222 = vmatprep.subr.bf16.mxu0 0
    %223 = vmatpush1.bf16.msra.mxu0 0
    %224 = vmatprep.subr.bf16.mxu0 0
    %225 = vmatpush1.bf16.msra.mxu0 0
    %226 = vmatprep.subr.bf16.mxu0 0
    %227 = vmatpush1.bf16.msra.mxu0 0
    %228 = vmatprep.subr.bf16.mxu0 0
    %229 = vmatpush1.bf16.msra.mxu0 0
    %230 = vmatprep.subr.bf16.mxu0 0
    %231 = vmatpush1.bf16.msra.mxu0 0
    %232 = vmatprep.subr.bf16.mxu0 0
    %233 = vmatpush1.bf16.msra.mxu0 0
    %234 = vmatprep.subr.bf16.mxu0 0
    %235 = vmatpush1.bf16.msra.mxu0 0
    %236 = vmatprep.subr.bf16.mxu0 0
    %237 = vmatpush1.bf16.msra.mxu0 0
    %238 = vmatprep.subr.bf16.mxu0 0
    %239 = vmatpush1.bf16.msra.mxu0 0
    %240 = vmatprep.subr.bf16.mxu0 0
    %241 = vmatpush1.bf16.msra.mxu0 0
    %242 = vmatprep.subr.bf16.mxu0 0
    %243 = vmatpush1.bf16.msra.mxu0 0
    %244 = vmatprep.subr.bf16.mxu0 0
    %245 = vmatpush1.bf16.msra.mxu0 0
    %246 = vmatprep.subr.bf16.mxu0 0
    %247 = vmatpush1.bf16.msra.mxu0 0
    %248 = vmatprep.mubr.bf16.mxu0 0
    %249 = vmatmul.mubr.bf16.gmra.mrb[0].mxu0 %v150
    %v250 = vpop.f32.mrb[0].mxu0
    %v251 = vadd.f32 %v202, %v250
    %v252 = vpop.f32.mrb[0].mxu0
    %v253 = vpop.f32.mrb[0].mxu0
    %v254 = vadd.f32 %v202, %v253
    %v255 = vpop.f32.mrb[0].mxu0
    %256 = vdwg.mxu0
    %v257 = vld [vmem:[%s7] sm:$0xf]
    %v258 = vld [vmem:[%s7 + $0x4] sm:$0xf]
    %v259 = vld [vmem:[%s7 + $0x8] sm:$0xf]
    %v260 = vld [vmem:[%s7 + $0xc] sm:$0xf]
    %v261 = vld [vmem:[%s8] sm:$0x1]
    %v263 = vlaneseq
    %v264 = vshrl.u32 %v263, 7
    %v265 = vsub.s32 0, %v264
    %v266 = vrot.slane %v261, %v265
    %v272 = vunpack.c.l.b16 %v257
    %v273 = vunpack.c.l.b16 %v258
    %v274 = vunpack.c.l.b16 %v259
    %v275 = vunpack.c.l.b16 %v260
    %v276 = vpack.c.b16 %v273, %v272
    %v277 = vpack.c.b16 %v275, %v274
    %280 = vmatprep.subr.bf16.mxu0 0
    %281 = vmatpush1.bf16.msra.mxu0 %v276
    %282 = vmatprep.subr.bf16.mxu0 0
    %283 = vmatpush1.bf16.msra.mxu0 %v277
    %284 = vmatprep.subr.bf16.mxu0 0
    %285 = vmatpush1.bf16.msra.mxu0 0
    %286 = vmatprep.subr.bf16.mxu0 0
    %287 = vmatpush1.bf16.msra.mxu0 0
    %288 = vmatprep.subr.bf16.mxu0 0
    %289 = vmatpush1.bf16.msra.mxu0 0
    %290 = vmatprep.subr.bf16.mxu0 0
    %291 = vmatpush1.bf16.msra.mxu0 0
    %292 = vmatprep.subr.bf16.mxu0 0
    %293 = vmatpush1.bf16.msra.mxu0 0
    %294 = vmatprep.subr.bf16.mxu0 0
    %295 = vmatpush1.bf16.msra.mxu0 0
    %296 = vmatprep.subr.bf16.mxu0 0
    %297 = vmatpush1.bf16.msra.mxu0 0
    %298 = vmatprep.subr.bf16.mxu0 0
    %299 = vmatpush1.bf16.msra.mxu0 0
    %300 = vmatprep.subr.bf16.mxu0 0
    %301 = vmatpush1.bf16.msra.mxu0 0
    %302 = vmatprep.subr.bf16.mxu0 0
    %303 = vmatpush1.bf16.msra.mxu0 0
    %304 = vmatprep.subr.bf16.mxu0 0
    %305 = vmatpush1.bf16.msra.mxu0 0
    %306 = vmatprep.subr.bf16.mxu0 0
    %307 = vmatpush1.bf16.msra.mxu0 0
    %308 = vmatprep.subr.bf16.mxu0 0
    %309 = vmatpush1.bf16.msra.mxu0 0
    %310 = vmatprep.subr.bf16.mxu0 0
    %311 = vmatpush1.bf16.msra.mxu0 0
    %312 = vmatprep.mubr.bf16.mxu0 0
    %313 = vmatmul.mubr.bf16.gmra.mrb[0].mxu0 %v150
    %v314 = vpop.f32.mrb[0].mxu0
    %v315 = vadd.f32 %v266, %v314
    %v316 = vpop.f32.mrb[0].mxu0
    %v317 = vpop.f32.mrb[0].mxu0
    %v318 = vadd.f32 %v266, %v317
    %v319 = vpop.f32.mrb[0].mxu0
    %320 = vdwg.mxu0
    %v321 = vpack.c.bf16 %v187, %v187
    %v322 = vpack.c.bf16 %v190, %v190
    %v323 = vpack.c.bf16 %v251, %v251
    %v324 = vpack.c.bf16 %v254, %v254
    %vm325 = vcmask 64512
    %v327 = vsel %vm325, %v321, 0
    %v330 = vsel %vm325, %v323, 0
    %332 = vmatprep.subr.bf16.mxu0 0
    %333 = vmatpush1.bf16.xpose.msra.mxu0 %v330
    %334 = vmatprep.subr.bf16.mxu0 0
    %335 = vmatpush1.bf16.xpose.msra.mxu0 0
    %336 = vmatprep.subr.bf16.mxu0 0
    %337 = vmatpush1.bf16.xpose.msra.mxu0 0
    %338 = vmatprep.subr.bf16.mxu0 0
    %339 = vmatpush1.bf16.xpose.msra.mxu0 0
    %340 = vmatprep.subr.bf16.mxu0 0
    %341 = vmatpush1.bf16.xpose.msra.mxu0 0
    %342 = vmatprep.subr.bf16.mxu0 0
    %343 = vmatpush1.bf16.xpose.msra.mxu0 0
    %344 = vmatprep.subr.bf16.mxu0 0
    %345 = vmatpush1.bf16.xpose.msra.mxu0 0
    %346 = vmatprep.subr.bf16.mxu0 0
    %347 = vmatpush1.bf16.xpose.msra.mxu0 0
    %348 = vmatprep.subr.bf16.mxu0 0
    %349 = vmatpush1.bf16.xpose.msra.mxu0 0
    %350 = vmatprep.subr.bf16.mxu0 0
    %351 = vmatpush1.bf16.xpose.msra.mxu0 0
    %352 = vmatprep.subr.bf16.mxu0 0
    %353 = vmatpush1.bf16.xpose.msra.mxu0 0
    %354 = vmatprep.subr.bf16.mxu0 0
    %355 = vmatpush1.bf16.xpose.msra.mxu0 0
    %356 = vmatprep.subr.bf16.mxu0 0
    %357 = vmatpush1.bf16.xpose.msra.mxu0 0
    %358 = vmatprep.subr.bf16.mxu0 0
    %359 = vmatpush1.bf16.xpose.msra.mxu0 0
    %360 = vmatprep.subr.bf16.mxu0 0
    %361 = vmatpush1.bf16.xpose.msra.mxu0 0
    %362 = vmatprep.subr.bf16.mxu0 0
    %363 = vmatpush1.bf16.xpose.msra.mxu0 0
    %364 = vmatprep.mubr.bf16.mxu0 0
    %365 = vmatmul.mubr.bf16.gmra.mrb[0].mxu0 %v327
    %v366 = vpop.f32.mrb[0].mxu0
    %v367 = vadd.f32 0.0, %v366
    %v368 = vpop.f32.mrb[0].mxu0
    %v369 = vpop.f32.mrb[0].mxu0
    %v370 = vpop.f32.mrb[0].mxu0
    %371 = vdwg.mxu0
    %v373 = vsel %vm325, %v322, 0
    %v376 = vsel %vm325, %v324, 0
    %378 = vmatprep.subr.bf16.mxu0 0
    %379 = vmatpush1.bf16.xpose.msra.mxu0 %v376
    %380 = vmatprep.subr.bf16.mxu0 0
    %381 = vmatpush1.bf16.xpose.msra.mxu0 0
    %382 = vmatprep.subr.bf16.mxu0 0
    %383 = vmatpush1.bf16.xpose.msra.mxu0 0
    %384 = vmatprep.subr.bf16.mxu0 0
    %385 = vmatpush1.bf16.xpose.msra.mxu0 0
    %386 = vmatprep.subr.bf16.mxu0 0
    %387 = vmatpush1.bf16.xpose.msra.mxu0 0
    %388 = vmatprep.subr.bf16.mxu0 0
    %389 = vmatpush1.bf16.xpose.msra.mxu0 0
    %390 = vmatprep.subr.bf16.mxu0 0
    %391 = vmatpush1.bf16.xpose.msra.mxu0 0
    %392 = vmatprep.subr.bf16.mxu0 0
    %393 = vmatpush1.bf16.xpose.msra.mxu0 0
    %394 = vmatprep.subr.bf16.mxu0 0
    %395 = vmatpush1.bf16.xpose.msra.mxu0 0
    %396 = vmatprep.subr.bf16.mxu0 0
    %397 = vmatpush1.bf16.xpose.msra.mxu0 0
    %398 = vmatprep.subr.bf16.mxu0 0
    %399 = vmatpush1.bf16.xpose.msra.mxu0 0
    %400 = vmatprep.subr.bf16.mxu0 0
    %401 = vmatpush1.bf16.xpose.msra.mxu0 0
    %402 = vmatprep.subr.bf16.mxu0 0
    %403 = vmatpush1.bf16.xpose.msra.mxu0 0
    %404 = vmatprep.subr.bf16.mxu0 0
    %405 = vmatpush1.bf16.xpose.msra.mxu0 0
    %406 = vmatprep.subr.bf16.mxu0 0
    %407 = vmatpush1.bf16.xpose.msra.mxu0 0
    %408 = vmatprep.subr.bf16.mxu0 0
    %409 = vmatpush1.bf16.xpose.msra.mxu0 0
    %410 = vmatprep.mubr.bf16.mxu0 0
    %411 = vmatmul.mubr.bf16.gmra.mrb[0].mxu0 %v373
    %v412 = vpop.f32.mrb[0].mxu0
    %v413 = vadd.f32 0.0, %v412
    %v414 = vpop.f32.mrb[0].mxu0
    %v415 = vpop.f32.mrb[0].mxu0
    %v416 = vpop.f32.mrb[0].mxu0
    %417 = vdwg.mxu0
    %v418 = vsel %vm325, %v367, -inf
    %419 = vmax.xlane.f32.xlu0 %v418
    %v420 = vpop.xlane.xlu0 %419
    %v421 = vsel %vm325, %v413, -inf
    %422 = vmax.xlane.f32.xlu0 %v421
    %v423 = vpop.xlane.xlu0 %422
    %v424 = vsub.f32 %v367, %v420
    %v425 = vsub.f32 %v413, %v423
    %v426 = vmul.f32 %v424, 1.442695
    %v427 = vpow.pop %v426
    %v428 = vmul.f32 %v425, 1.442695
    %v429 = vpow.pop %v428
    %v430 = vsel %vm325, %v427, 0.0
    %431 = vadd.xlane.f32.xlu0 %v430
    %v432 = vpop.xlane.xlu0 %431
    %v433 = vsel %vm325, %v429, 0.0
    %434 = vadd.xlane.f32.xlu0 %v433
    %v435 = vpop.xlane.xlu0 %434
    %v436 = vrcp.pop %v432
    %v437 = vrcp.pop %v435
    %v438 = vmul.f32 %v427, %v436
    %v439 = vmul.f32 %v429, %v437
    %v440 = vpack.c.bf16 %v438, %v438
    %v441 = vpack.c.bf16 %v439, %v439
    %v442 = vpack.c.bf16 %v315, %v315
    %v443 = vpack.c.bf16 %v318, %v318
    %v445 = vsel %vm325, %v440, 0
    %vm447 = vcmask 1043456
    %v449 = vsel %vm447, %v442, 0
    %451 = vmatprep.subr.bf16.mxu0 0
    %452 = vmatpush1.bf16.msra.mxu0 %v449
    %453 = vmatprep.subr.bf16.mxu0 0
    %454 = vmatpush1.bf16.msra.mxu0 0
    %455 = vmatprep.subr.bf16.mxu0 0
    %456 = vmatpush1.bf16.msra.mxu0 0
    %457 = vmatprep.subr.bf16.mxu0 0
    %458 = vmatpush1.bf16.msra.mxu0 0
    %459 = vmatprep.subr.bf16.mxu0 0
    %460 = vmatpush1.bf16.msra.mxu0 0
    %461 = vmatprep.subr.bf16.mxu0 0
    %462 = vmatpush1.bf16.msra.mxu0 0
    %463 = vmatprep.subr.bf16.mxu0 0
    %464 = vmatpush1.bf16.msra.mxu0 0
    %465 = vmatprep.subr.bf16.mxu0 0
    %466 = vmatpush1.bf16.msra.mxu0 0
    %467 = vmatprep.subr.bf16.mxu0 0
    %468 = vmatpush1.bf16.msra.mxu0 0
    %469 = vmatprep.subr.bf16.mxu0 0
    %470 = vmatpush1.bf16.msra.mxu0 0
    %471 = vmatprep.subr.bf16.mxu0 0
    %472 = vmatpush1.bf16.msra.mxu0 0
    %473 = vmatprep.subr.bf16.mxu0 0
    %474 = vmatpush1.bf16.msra.mxu0 0
    %475 = vmatprep.subr.bf16.mxu0 0
    %476 = vmatpush1.bf16.msra.mxu0 0
    %477 = vmatprep.subr.bf16.mxu0 0
    %478 = vmatpush1.bf16.msra.mxu0 0
    %479 = vmatprep.subr.bf16.mxu0 0
    %480 = vmatpush1.bf16.msra.mxu0 0
    %481 = vmatprep.subr.bf16.mxu0 0
    %482 = vmatpush1.bf16.msra.mxu0 0
    %483 = vmatprep.mubr.bf16.mxu0 0
    %484 = vmatmul.mubr.bf16.gmra.mrb[0].mxu0 %v445
    %v485 = vpop.f32.mrb[0].mxu0
    %v486 = vadd.f32 0.0, %v485
    %v487 = vpop.f32.mrb[0].mxu0
    %v488 = vpop.f32.mrb[0].mxu0
    %v489 = vpop.f32.mrb[0].mxu0
    %490 = vdwg.mxu0
    %v492 = vsel %vm325, %v441, 0
    %v495 = vsel %vm447, %v443, 0
    %497 = vmatprep.subr.bf16.mxu0 0
    %498 = vmatpush1.bf16.msra.mxu0 %v495
    %499 = vmatprep.subr.bf16.mxu0 0
    %500 = vmatpush1.bf16.msra.mxu0 0
    %501 = vmatprep.subr.bf16.mxu0 0
    %502 = vmatpush1.bf16.msra.mxu0 0
    %503 = vmatprep.subr.bf16.mxu0 0
    %504 = vmatpush1.bf16.msra.mxu0 0
    %505 = vmatprep.subr.bf16.mxu0 0
    %506 = vmatpush1.bf16.msra.mxu0 0
    %507 = vmatprep.subr.bf16.mxu0 0
    %508 = vmatpush1.bf16.msra.mxu0 0
    %509 = vmatprep.subr.bf16.mxu0 0
    %510 = vmatpush1.bf16.msra.mxu0 0
    %511 = vmatprep.subr.bf16.mxu0 0
    %512 = vmatpush1.bf16.msra.mxu0 0
    %513 = vmatprep.subr.bf16.mxu0 0
    %514 = vmatpush1.bf16.msra.mxu0 0
    %515 = vmatprep.subr.bf16.mxu0 0
    %516 = vmatpush1.bf16.msra.mxu0 0
    %517 = vmatprep.subr.bf16.mxu0 0
    %518 = vmatpush1.bf16.msra.mxu0 0
    %519 = vmatprep.subr.bf16.mxu0 0
    %520 = vmatpush1.bf16.msra.mxu0 0
    %521 = vmatprep.subr.bf16.mxu0 0
    %522 = vmatpush1.bf16.msra.mxu0 0
    %523 = vmatprep.subr.bf16.mxu0 0
    %524 = vmatpush1.bf16.msra.mxu0 0
    %525 = vmatprep.subr.bf16.mxu0 0
    %526 = vmatpush1.bf16.msra.mxu0 0
    %527 = vmatprep.subr.bf16.mxu0 0
    %528 = vmatpush1.bf16.msra.mxu0 0
    %529 = vmatprep.mubr.bf16.mxu0 0
    %530 = vmatmul.mubr.bf16.gmra.mrb[0].mxu0 %v492
    %v531 = vpop.f32.mrb[0].mxu0
    %v532 = vadd.f32 0.0, %v531
    %v533 = vpop.f32.mrb[0].mxu0
    %v534 = vpop.f32.mrb[0].mxu0
    %v535 = vpop.f32.mrb[0].mxu0
    %536 = vdwg.mxu0
    %v537 = vld [vmem:[%s9] sm:$0xf]
    %v538 = vpack.c.bf16 %v532, %v486
    %v540 = vsel %vm325, %v538, 0
    %v543 = vsel %vm447, %v537, 0
    %545 = vmatprep.subr.bf16.mxu0 0
    %546 = vmatpush1.bf16.msra.mxu0 %v543
    %547 = vmatprep.subr.bf16.mxu0 0
    %548 = vmatpush1.bf16.msra.mxu0 0
    %549 = vmatprep.subr.bf16.mxu0 0
    %550 = vmatpush1.bf16.msra.mxu0 0
    %551 = vmatprep.subr.bf16.mxu0 0
    %552 = vmatpush1.bf16.msra.mxu0 0
    %553 = vmatprep.subr.bf16.mxu0 0
    %554 = vmatpush1.bf16.msra.mxu0 0
    %555 = vmatprep.subr.bf16.mxu0 0
    %556 = vmatpush1.bf16.msra.mxu0 0
    %557 = vmatprep.subr.bf16.mxu0 0
    %558 = vmatpush1.bf16.msra.mxu0 0
    %559 = vmatprep.subr.bf16.mxu0 0
    %560 = vmatpush1.bf16.msra.mxu0 0
    %561 = vmatprep.subr.bf16.mxu0 0
    %562 = vmatpush1.bf16.msra.mxu0 0
    %563 = vmatprep.subr.bf16.mxu0 0
    %564 = vmatpush1.bf16.msra.mxu0 0
    %565 = vmatprep.subr.bf16.mxu0 0
    %566 = vmatpush1.bf16.msra.mxu0 0
    %567 = vmatprep.subr.bf16.mxu0 0
    %568 = vmatpush1.bf16.msra.mxu0 0
    %569 = vmatprep.subr.bf16.mxu0 0
    %570 = vmatpush1.bf16.msra.mxu0 0
    %571 = vmatprep.subr.bf16.mxu0 0
    %572 = vmatpush1.bf16.msra.mxu0 0
    %573 = vmatprep.subr.bf16.mxu0 0
    %574 = vmatpush1.bf16.msra.mxu0 0
    %575 = vmatprep.subr.bf16.mxu0 0
    %576 = vmatpush1.bf16.msra.mxu0 0
    %577 = vmatprep.mubr.bf16.mxu0 0
    %578 = vmatmul.mubr.bf16.gmra.mrb[0].mxu0 %v540
    %v579 = vpop.f32.mrb[0].mxu0
    %v580 = vadd.f32 0.0, %v579
    %v581 = vpop.f32.mrb[0].mxu0
    %v582 = vpop.f32.mrb[0].mxu0
    %v583 = vadd.f32 0.0, %v582
    %v584 = vpop.f32.mrb[0].mxu0
    %585 = vdwg.mxu0
    %v587 = vlaneseq
    %v588 = vshrl.u32 %v587, 7
    %v589 = vsub.s32 0, %v588
    %v590 = vrot.slane %v124, %v589
    %v592 = vadd.f32 %v590, %v580
    %v593 = vadd.f32 %v590, %v583
    %s594 = scalar_lea.vmem %s3, 16
    %v595 = vld [vmem:[%s594] sm:$0xf]
    %v596 = vld [vmem:[%s594 + $0x4] sm:$0xf]
    %v597 = vld [vmem:[%s594 + $0x8] sm:$0xf]
    %v598 = vld [vmem:[%s594 + $0xc] sm:$0xf]
    %s599 = scalar_lea.vmem %s4, 1
    %v600 = vld [vmem:[%s599] sm:$0x1]
    %v602 = vlaneseq
    %v603 = vshrl.u32 %v602, 7
    %v604 = vsub.s32 0, %v603
    %v605 = vrot.slane %v600, %v604
    %v611 = vunpack.c.l.b16 %v595
    %v612 = vunpack.c.l.b16 %v596
    %v613 = vunpack.c.l.b16 %v597
    %v614 = vunpack.c.l.b16 %v598
    %v615 = vpack.c.b16 %v612, %v611
    %v616 = vpack.c.b16 %v614, %v613
    %619 = vmatprep.subr.bf16.mxu0 0
    %620 = vmatpush1.bf16.msra.mxu0 %v615
    %621 = vmatprep.subr.bf16.mxu0 0
    %622 = vmatpush1.bf16.msra.mxu0 %v616
    %623 = vmatprep.subr.bf16.mxu0 0
    %624 = vmatpush1.bf16.msra.mxu0 0
    %625 = vmatprep.subr.bf16.mxu0 0
    %626 = vmatpush1.bf16.msra.mxu0 0
    %627 = vmatprep.subr.bf16.mxu0 0
    %628 = vmatpush1.bf16.msra.mxu0 0
    %629 = vmatprep.subr.bf16.mxu0 0
    %630 = vmatpush1.bf16.msra.mxu0 0
    %631 = vmatprep.subr.bf16.mxu0 0
    %632 = vmatpush1.bf16.msra.mxu0 0
    %633 = vmatprep.subr.bf16.mxu0 0
    %634 = vmatpush1.bf16.msra.mxu0 0
    %635 = vmatprep.subr.bf16.mxu0 0
    %636 = vmatpush1.bf16.msra.mxu0 0
    %637 = vmatprep.subr.bf16.mxu0 0
    %638 = vmatpush1.bf16.msra.mxu0 0
    %639 = vmatprep.subr.bf16.mxu0 0
    %640 = vmatpush1.bf16.msra.mxu0 0
    %641 = vmatprep.subr.bf16.mxu0 0
    %642 = vmatpush1.bf16.msra.mxu0 0
    %643 = vmatprep.subr.bf16.mxu0 0
    %644 = vmatpush1.bf16.msra.mxu0 0
    %645 = vmatprep.subr.bf16.mxu0 0
    %646 = vmatpush1.bf16.msra.mxu0 0
    %647 = vmatprep.subr.bf16.mxu0 0
    %648 = vmatpush1.bf16.msra.mxu0 0
    %649 = vmatprep.subr.bf16.mxu0 0
    %650 = vmatpush1.bf16.msra.mxu0 0
    %651 = vmatprep.mubr.bf16.mxu0 0
    %652 = vmatmul.mubr.bf16.gmra.mrb[0].mxu0 %v150
    %v653 = vpop.f32.mrb[0].mxu0
    %v654 = vadd.f32 %v605, %v653
    %v655 = vpop.f32.mrb[0].mxu0
    %v656 = vpop.f32.mrb[0].mxu0
    %v657 = vadd.f32 %v605, %v656
    %v658 = vpop.f32.mrb[0].mxu0
    %659 = vdwg.mxu0
    %s660 = scalar_lea.vmem %s5, 16
    %v661 = vld [vmem:[%s660] sm:$0xf]
    %v662 = vld [vmem:[%s660 + $0x4] sm:$0xf]
    %v663 = vld [vmem:[%s660 + $0x8] sm:$0xf]
    %v664 = vld [vmem:[%s660 + $0xc] sm:$0xf]
    %s665 = scalar_lea.vmem %s6, 1
    %v666 = vld [vmem:[%s665] sm:$0x1]
    %v668 = vlaneseq
    %v669 = vshrl.u32 %v668, 7
    %v670 = vsub.s32 0, %v669
    %v671 = vrot.slane %v666, %v670
    %v677 = vunpack.c.l.b16 %v661
    %v678 = vunpack.c.l.b16 %v662
    %v679 = vunpack.c.l.b16 %v663
    %v680 = vunpack.c.l.b16 %v664
    %v681 = vpack.c.b16 %v678, %v677
    %v682 = vpack.c.b16 %v680, %v679
    %685 = vmatprep.subr.bf16.mxu0 0
    %686 = vmatpush1.bf16.msra.mxu0 %v681
    %687 = vmatprep.subr.bf16.mxu0 0
    %688 = vmatpush1.bf16.msra.mxu0 %v682
    %689 = vmatprep.subr.bf16.mxu0 0
    %690 = vmatpush1.bf16.msra.mxu0 0
    %691 = vmatprep.subr.bf16.mxu0 0
    %692 = vmatpush1.bf16.msra.mxu0 0
    %693 = vmatprep.subr.bf16.mxu0 0
    %694 = vmatpush1.bf16.msra.mxu0 0
    %695 = vmatprep.subr.bf16.mxu0 0
    %696 = vmatpush1.bf16.msra.mxu0 0
    %697 = vmatprep.subr.bf16.mxu0 0
    %698 = vmatpush1.bf16.msra.mxu0 0
    %699 = vmatprep.subr.bf16.mxu0 0
    %700 = vmatpush1.bf16.msra.mxu0 0
    %701 = vmatprep.subr.bf16.mxu0 0
    %702 = vmatpush1.bf16.msra.mxu0 0
    %703 = vmatprep.subr.bf16.mxu0 0
    %704 = vmatpush1.bf16.msra.mxu0 0
    %705 = vmatprep.subr.bf16.mxu0 0
    %706 = vmatpush1.bf16.msra.mxu0 0
    %707 = vmatprep.subr.bf16.mxu0 0
    %708 = vmatpush1.bf16.msra.mxu0 0
    %709 = vmatprep.subr.bf16.mxu0 0
    %710 = vmatpush1.bf16.msra.mxu0 0
    %711 = vmatprep.subr.bf16.mxu0 0
    %712 = vmatpush1.bf16.msra.mxu0 0
    %713 = vmatprep.subr.bf16.mxu0 0
    %714 = vmatpush1.bf16.msra.mxu0 0
    %715 = vmatprep.subr.bf16.mxu0 0
    %716 = vmatpush1.bf16.msra.mxu0 0
    %717 = vmatprep.mubr.bf16.mxu0 0
    %718 = vmatmul.mubr.bf16.gmra.mrb[0].mxu0 %v150
    %v719 = vpop.f32.mrb[0].mxu0
    %v720 = vadd.f32 %v671, %v719
    %v721 = vpop.f32.mrb[0].mxu0
    %v722 = vpop.f32.mrb[0].mxu0
    %v723 = vadd.f32 %v671, %v722
    %v724 = vpop.f32.mrb[0].mxu0
    %725 = vdwg.mxu0
    %s726 = scalar_lea.vmem %s7, 16
    %v727 = vld [vmem:[%s726] sm:$0xf]
    %v728 = vld [vmem:[%s726 + $0x4] sm:$0xf]
    %v729 = vld [vmem:[%s726 + $0x8] sm:$0xf]
    %v730 = vld [vmem:[%s726 + $0xc] sm:$0xf]
    %s731 = scalar_lea.vmem %s8, 1
    %v732 = vld [vmem:[%s731] sm:$0x1]
    %v734 = vlaneseq
    %v735 = vshrl.u32 %v734, 7
    %v736 = vsub.s32 0, %v735
    %v737 = vrot.slane %v732, %v736
    %v743 = vunpack.c.l.b16 %v727
    %v744 = vunpack.c.l.b16 %v728
    %v745 = vunpack.c.l.b16 %v729
    %v746 = vunpack.c.l.b16 %v730
    %v747 = vpack.c.b16 %v744, %v743
    %v748 = vpack.c.b16 %v746, %v745
    %751 = vmatprep.subr.bf16.mxu0 0
    %752 = vmatpush1.bf16.msra.mxu0 %v747
    %753 = vmatprep.subr.bf16.mxu0 0
    %754 = vmatpush1.bf16.msra.mxu0 %v748
    %755 = vmatprep.subr.bf16.mxu0 0
    %756 = vmatpush1.bf16.msra.mxu0 0
    %757 = vmatprep.subr.bf16.mxu0 0
    %758 = vmatpush1.bf16.msra.mxu0 0
    %759 = vmatprep.subr.bf16.mxu0 0
    %760 = vmatpush1.bf16.msra.mxu0 0
    %761 = vmatprep.subr.bf16.mxu0 0
    %762 = vmatpush1.bf16.msra.mxu0 0
    %763 = vmatprep.subr.bf16.mxu0 0
    %764 = vmatpush1.bf16.msra.mxu0 0
    %765 = vmatprep.subr.bf16.mxu0 0
    %766 = vmatpush1.bf16.msra.mxu0 0
    %767 = vmatprep.subr.bf16.mxu0 0
    %768 = vmatpush1.bf16.msra.mxu0 0
    %769 = vmatprep.subr.bf16.mxu0 0
    %770 = vmatpush1.bf16.msra.mxu0 0
    %771 = vmatprep.subr.bf16.mxu0 0
    %772 = vmatpush1.bf16.msra.mxu0 0
    %773 = vmatprep.subr.bf16.mxu0 0
    %774 = vmatpush1.bf16.msra.mxu0 0
    %775 = vmatprep.subr.bf16.mxu0 0
    %776 = vmatpush1.bf16.msra.mxu0 0
    %777 = vmatprep.subr.bf16.mxu0 0
    %778 = vmatpush1.bf16.msra.mxu0 0
    %779 = vmatprep.subr.bf16.mxu0 0
    %780 = vmatpush1.bf16.msra.mxu0 0
    %781 = vmatprep.subr.bf16.mxu0 0
    %782 = vmatpush1.bf16.msra.mxu0 0
    %783 = vmatprep.mubr.bf16.mxu0 0
    %784 = vmatmul.mubr.bf16.gmra.mrb[0].mxu0 %v150
    %v785 = vpop.f32.mrb[0].mxu0
    %v786 = vadd.f32 %v737, %v785
    %v787 = vpop.f32.mrb[0].mxu0
    %v788 = vpop.f32.mrb[0].mxu0
    %v789 = vadd.f32 %v737, %v788
    %v790 = vpop.f32.mrb[0].mxu0
    %791 = vdwg.mxu0
    %v792 = vpack.c.bf16 %v654, %v654
    %v793 = vpack.c.bf16 %v657, %v657
    %v794 = vpack.c.bf16 %v720, %v720
    %v795 = vpack.c.bf16 %v723, %v723
    %v797 = vsel %vm325, %v792, 0
    %v800 = vsel %vm325, %v794, 0
    %802 = vmatprep.subr.bf16.mxu0 0
    %803 = vmatpush1.bf16.xpose.msra.mxu0 %v800
    %804 = vmatprep.subr.bf16.mxu0 0
    %805 = vmatpush1.bf16.xpose.msra.mxu0 0
    %806 = vmatprep.subr.bf16.mxu0 0
    %807 = vmatpush1.bf16.xpose.msra.mxu0 0
    %808 = vmatprep.subr.bf16.mxu0 0
    %809 = vmatpush1.bf16.xpose.msra.mxu0 0
    %810 = vmatprep.subr.bf16.mxu0 0
    %811 = vmatpush1.bf16.xpose.msra.mxu0 0
    %812 = vmatprep.subr.bf16.mxu0 0
    %813 = vmatpush1.bf16.xpose.msra.mxu0 0
    %814 = vmatprep.subr.bf16.mxu0 0
    %815 = vmatpush1.bf16.xpose.msra.mxu0 0
    %816 = vmatprep.subr.bf16.mxu0 0
    %817 = vmatpush1.bf16.xpose.msra.mxu0 0
    %818 = vmatprep.subr.bf16.mxu0 0
    %819 = vmatpush1.bf16.xpose.msra.mxu0 0
    %820 = vmatprep.subr.bf16.mxu0 0
    %821 = vmatpush1.bf16.xpose.msra.mxu0 0
    %822 = vmatprep.subr.bf16.mxu0 0
    %823 = vmatpush1.bf16.xpose.msra.mxu0 0
    %824 = vmatprep.subr.bf16.mxu0 0
    %825 = vmatpush1.bf16.xpose.msra.mxu0 0
    %826 = vmatprep.subr.bf16.mxu0 0
    %827 = vmatpush1.bf16.xpose.msra.mxu0 0
    %828 = vmatprep.subr.bf16.mxu0 0
    %829 = vmatpush1.bf16.xpose.msra.mxu0 0
    %830 = vmatprep.subr.bf16.mxu0 0
    %831 = vmatpush1.bf16.xpose.msra.mxu0 0
    %832 = vmatprep.subr.bf16.mxu0 0
    %833 = vmatpush1.bf16.xpose.msra.mxu0 0
    %834 = vmatprep.mubr.bf16.mxu0 0
    %835 = vmatmul.mubr.bf16.gmra.mrb[0].mxu0 %v797
    %v836 = vpop.f32.mrb[0].mxu0
    %v837 = vadd.f32 0.0, %v836
    %v838 = vpop.f32.mrb[0].mxu0
    %v839 = vpop.f32.mrb[0].mxu0
    %v840 = vpop.f32.mrb[0].mxu0
    %841 = vdwg.mxu0
    %v843 = vsel %vm325, %v793, 0
    %v846 = vsel %vm325, %v795, 0
    %848 = vmatprep.subr.bf16.mxu0 0
    %849 = vmatpush1.bf16.xpose.msra.mxu0 %v846
    %850 = vmatprep.subr.bf16.mxu0 0
    %851 = vmatpush1.bf16.xpose.msra.mxu0 0
    %852 = vmatprep.subr.bf16.mxu0 0
    %853 = vmatpush1.bf16.xpose.msra.mxu0 0
    %854 = vmatprep.subr.bf16.mxu0 0
    %855 = vmatpush1.bf16.xpose.msra.mxu0 0
    %856 = vmatprep.subr.bf16.mxu0 0
    %857 = vmatpush1.bf16.xpose.msra.mxu0 0
    %858 = vmatprep.subr.bf16.mxu0 0
    %859 = vmatpush1.bf16.xpose.msra.mxu0 0
    %860 = vmatprep.subr.bf16.mxu0 0
    %861 = vmatpush1.bf16.xpose.msra.mxu0 0
    %862 = vmatprep.subr.bf16.mxu0 0
    %863 = vmatpush1.bf16.xpose.msra.mxu0 0
    %864 = vmatprep.subr.bf16.mxu0 0
    %865 = vmatpush1.bf16.xpose.msra.mxu0 0
    %866 = vmatprep.subr.bf16.mxu0 0
    %867 = vmatpush1.bf16.xpose.msra.mxu0 0
    %868 = vmatprep.subr.bf16.mxu0 0
    %869 = vmatpush1.bf16.xpose.msra.mxu0 0
    %870 = vmatprep.subr.bf16.mxu0 0
    %871 = vmatpush1.bf16.xpose.msra.mxu0 0
    %872 = vmatprep.subr.bf16.mxu0 0
    %873 = vmatpush1.bf16.xpose.msra.mxu0 0
    %874 = vmatprep.subr.bf16.mxu0 0
    %875 = vmatpush1.bf16.xpose.msra.mxu0 0
    %876 = vmatprep.subr.bf16.mxu0 0
    %877 = vmatpush1.bf16.xpose.msra.mxu0 0
    %878 = vmatprep.subr.bf16.mxu0 0
    %879 = vmatpush1.bf16.xpose.msra.mxu0 0
    %880 = vmatprep.mubr.bf16.mxu0 0
    %881 = vmatmul.mubr.bf16.gmra.mrb[0].mxu0 %v843
    %v882 = vpop.f32.mrb[0].mxu0
    %v883 = vadd.f32 0.0, %v882
    %v884 = vpop.f32.mrb[0].mxu0
    %v885 = vpop.f32.mrb[0].mxu0
    %v886 = vpop.f32.mrb[0].mxu0
    %887 = vdwg.mxu0
    %v888 = vsel %vm325, %v837, -inf
    %889 = vmax.xlane.f32.xlu0 %v888
    %v890 = vpop.xlane.xlu0 %889
    %v891 = vsel %vm325, %v883, -inf
    %892 = vmax.xlane.f32.xlu0 %v891
    %v893 = vpop.xlane.xlu0 %892
    %v894 = vsub.f32 %v837, %v890
    %v895 = vsub.f32 %v883, %v893
    %v896 = vmul.f32 %v894, 1.442695
    %v897 = vpow.pop %v896
    %v898 = vmul.f32 %v895, 1.442695
    %v899 = vpow.pop %v898
    %v900 = vsel %vm325, %v897, 0.0
    %901 = vadd.xlane.f32.xlu0 %v900
    %v902 = vpop.xlane.xlu0 %901
    %v903 = vsel %vm325, %v899, 0.0
    %904 = vadd.xlane.f32.xlu0 %v903
    %v905 = vpop.xlane.xlu0 %904
    %v906 = vrcp.pop %v902
    %v907 = vrcp.pop %v905
    %v908 = vmul.f32 %v897, %v906
    %v909 = vmul.f32 %v899, %v907
    %v910 = vpack.c.bf16 %v908, %v908
    %v911 = vpack.c.bf16 %v909, %v909
    %v912 = vpack.c.bf16 %v786, %v786
    %v913 = vpack.c.bf16 %v789, %v789
    %v915 = vsel %vm325, %v910, 0
    %v918 = vsel %vm447, %v912, 0
    %920 = vmatprep.subr.bf16.mxu0 0
    %921 = vmatpush1.bf16.msra.mxu0 %v918
    %922 = vmatprep.subr.bf16.mxu0 0
    %923 = vmatpush1.bf16.msra.mxu0 0
    %924 = vmatprep.subr.bf16.mxu0 0
    %925 = vmatpush1.bf16.msra.mxu0 0
    %926 = vmatprep.subr.bf16.mxu0 0
    %927 = vmatpush1.bf16.msra.mxu0 0
    %928 = vmatprep.subr.bf16.mxu0 0
    %929 = vmatpush1.bf16.msra.mxu0 0
    %930 = vmatprep.subr.bf16.mxu0 0
    %931 = vmatpush1.bf16.msra.mxu0 0
    %932 = vmatprep.subr.bf16.mxu0 0
    %933 = vmatpush1.bf16.msra.mxu0 0
    %934 = vmatprep.subr.bf16.mxu0 0
    %935 = vmatpush1.bf16.msra.mxu0 0
    %936 = vmatprep.subr.bf16.mxu0 0
    %937 = vmatpush1.bf16.msra.mxu0 0
    %938 = vmatprep.subr.bf16.mxu0 0
    %939 = vmatpush1.bf16.msra.mxu0 0
    %940 = vmatprep.subr.bf16.mxu0 0
    %941 = vmatpush1.bf16.msra.mxu0 0
    %942 = vmatprep.subr.bf16.mxu0 0
    %943 = vmatpush1.bf16.msra.mxu0 0
    %944 = vmatprep.subr.bf16.mxu0 0
    %945 = vmatpush1.bf16.msra.mxu0 0
    %946 = vmatprep.subr.bf16.mxu0 0
    %947 = vmatpush1.bf16.msra.mxu0 0
    %948 = vmatprep.subr.bf16.mxu0 0
    %949 = vmatpush1.bf16.msra.mxu0 0
    %950 = vmatprep.subr.bf16.mxu0 0
    %951 = vmatpush1.bf16.msra.mxu0 0
    %952 = vmatprep.mubr.bf16.mxu0 0
    %953 = vmatmul.mubr.bf16.gmra.mrb[0].mxu0 %v915
    %v954 = vpop.f32.mrb[0].mxu0
    %v955 = vadd.f32 0.0, %v954
    %v956 = vpop.f32.mrb[0].mxu0
    %v957 = vpop.f32.mrb[0].mxu0
    %v958 = vpop.f32.mrb[0].mxu0
    %959 = vdwg.mxu0
    %v961 = vsel %vm325, %v911, 0
    %v964 = vsel %vm447, %v913, 0
    %966 = vmatprep.subr.bf16.mxu0 0
    %967 = vmatpush1.bf16.msra.mxu0 %v964
    %968 = vmatprep.subr.bf16.mxu0 0
    %969 = vmatpush1.bf16.msra.mxu0 0
    %970 = vmatprep.subr.bf16.mxu0 0
    %971 = vmatpush1.bf16.msra.mxu0 0
    %972 = vmatprep.subr.bf16.mxu0 0
    %973 = vmatpush1.bf16.msra.mxu0 0
    %974 = vmatprep.subr.bf16.mxu0 0
    %975 = vmatpush1.bf16.msra.mxu0 0
    %976 = vmatprep.subr.bf16.mxu0 0
    %977 = vmatpush1.bf16.msra.mxu0 0
    %978 = vmatprep.subr.bf16.mxu0 0
    %979 = vmatpush1.bf16.msra.mxu0 0
    %980 = vmatprep.subr.bf16.mxu0 0
    %981 = vmatpush1.bf16.msra.mxu0 0
    %982 = vmatprep.subr.bf16.mxu0 0
    %983 = vmatpush1.bf16.msra.mxu0 0
    %984 = vmatprep.subr.bf16.mxu0 0
    %985 = vmatpush1.bf16.msra.mxu0 0
    %986 = vmatprep.subr.bf16.mxu0 0
    %987 = vmatpush1.bf16.msra.mxu0 0
    %988 = vmatprep.subr.bf16.mxu0 0
    %989 = vmatpush1.bf16.msra.mxu0 0
    %990 = vmatprep.subr.bf16.mxu0 0
    %991 = vmatpush1.bf16.msra.mxu0 0
    %992 = vmatprep.subr.bf16.mxu0 0
    %993 = vmatpush1.bf16.msra.mxu0 0
    %994 = vmatprep.subr.bf16.mxu0 0
    %995 = vmatpush1.bf16.msra.mxu0 0
    %996 = vmatprep.subr.bf16.mxu0 0
    %997 = vmatpush1.bf16.msra.mxu0 0
    %998 = vmatprep.mubr.bf16.mxu0 0
    %999 = vmatmul.mubr.bf16.gmra.mrb[0].mxu0 %v961
    %v1000 = vpop.f32.mrb[0].mxu0
    %v1001 = vadd.f32 0.0, %v1000
    %v1002 = vpop.f32.mrb[0].mxu0
    %v1003 = vpop.f32.mrb[0].mxu0
    %v1004 = vpop.f32.mrb[0].mxu0
    %1005 = vdwg.mxu0
    %s1006 = scalar_lea.vmem %s9, 4
    %v1007 = vld [vmem:[%s1006] sm:$0xf]
    %v1008 = vpack.c.bf16 %v1001, %v955
    %v1010 = vsel %vm325, %v1008, 0
    %v1013 = vsel %vm447, %v1007, 0
    %1015 = vmatprep.subr.bf16.mxu0 0
    %1016 = vmatpush1.bf16.msra.mxu0 %v1013
    %1017 = vmatprep.subr.bf16.mxu0 0
    %1018 = vmatpush1.bf16.msra.mxu0 0
    %1019 = vmatprep.subr.bf16.mxu0 0
    %1020 = vmatpush1.bf16.msra.mxu0 0
    %1021 = vmatprep.subr.bf16.mxu0 0
    %1022 = vmatpush1.bf16.msra.mxu0 0
    %1023 = vmatprep.subr.bf16.mxu0 0
    %1024 = vmatpush1.bf16.msra.mxu0 0
    %1025 = vmatprep.subr.bf16.mxu0 0
    %1026 = vmatpush1.bf16.msra.mxu0 0
    %1027 = vmatprep.subr.bf16.mxu0 0
    %1028 = vmatpush1.bf16.msra.mxu0 0
    %1029 = vmatprep.subr.bf16.mxu0 0
    %1030 = vmatpush1.bf16.msra.mxu0 0
    %1031 = vmatprep.subr.bf16.mxu0 0
    %1032 = vmatpush1.bf16.msra.mxu0 0
    %1033 = vmatprep.subr.bf16.mxu0 0
    %1034 = vmatpush1.bf16.msra.mxu0 0
    %1035 = vmatprep.subr.bf16.mxu0 0
    %1036 = vmatpush1.bf16.msra.mxu0 0
    %1037 = vmatprep.subr.bf16.mxu0 0
    %1038 = vmatpush1.bf16.msra.mxu0 0
    %1039 = vmatprep.subr.bf16.mxu0 0
    %1040 = vmatpush1.bf16.msra.mxu0 0
    %1041 = vmatprep.subr.bf16.mxu0 0
    %1042 = vmatpush1.bf16.msra.mxu0 0
    %1043 = vmatprep.subr.bf16.mxu0 0
    %1044 = vmatpush1.bf16.msra.mxu0 0
    %1045 = vmatprep.subr.bf16.mxu0 0
    %1046 = vmatpush1.bf16.msra.mxu0 0
    %1047 = vmatprep.mubr.bf16.mxu0 0
    %1048 = vmatmul.mubr.bf16.gmra.mrb[0].mxu0 %v1010
    %v1049 = vpop.f32.mrb[0].mxu0
    %v1050 = vadd.f32 0.0, %v1049
    %v1051 = vpop.f32.mrb[0].mxu0
    %v1052 = vpop.f32.mrb[0].mxu0
    %v1053 = vadd.f32 0.0, %v1052
    %v1054 = vpop.f32.mrb[0].mxu0
    %1055 = vdwg.mxu0
    %v1056 = vadd.f32 %v592, %v1050
    %v1057 = vadd.f32 %v593, %v1053
    %s1058 = scalar_lea.vmem %s3, 32
    %v1059 = vld [vmem:[%s1058] sm:$0xf]
    %v1060 = vld [vmem:[%s1058 + $0x4] sm:$0xf]
    %v1061 = vld [vmem:[%s1058 + $0x8] sm:$0xf]
    %v1062 = vld [vmem:[%s1058 + $0xc] sm:$0xf]
    %s1063 = scalar_lea.vmem %s4, 2
    %v1064 = vld [vmem:[%s1063] sm:$0x1]
    %v1066 = vlaneseq
    %v1067 = vshrl.u32 %v1066, 7
    %v1068 = vsub.s32 0, %v1067
    %v1069 = vrot.slane %v1064, %v1068
    %v1075 = vunpack.c.l.b16 %v1059
    %v1076 = vunpack.c.l.b16 %v1060
    %v1077 = vunpack.c.l.b16 %v1061
    %v1078 = vunpack.c.l.b16 %v1062
    %v1079 = vpack.c.b16 %v1076, %v1075
    %v1080 = vpack.c.b16 %v1078, %v1077
    %1083 = vmatprep.subr.bf16.mxu0 0
    %1084 = vmatpush1.bf16.msra.mxu0 %v1079
    %1085 = vmatprep.subr.bf16.mxu0 0
    %1086 = vmatpush1.bf16.msra.mxu0 %v1080
    %1087 = vmatprep.subr.bf16.mxu0 0
    %1088 = vmatpush1.bf16.msra.mxu0 0
    %1089 = vmatprep.subr.bf16.mxu0 0
    %1090 = vmatpush1.bf16.msra.mxu0 0
    %1091 = vmatprep.subr.bf16.mxu0 0
    %1092 = vmatpush1.bf16.msra.mxu0 0
    %1093 = vmatprep.subr.bf16.mxu0 0
    %1094 = vmatpush1.bf16.msra.mxu0 0
    %1095 = vmatprep.subr.bf16.mxu0 0
    %1096 = vmatpush1.bf16.msra.mxu0 0
    %1097 = vmatprep.subr.bf16.mxu0 0
    %1098 = vmatpush1.bf16.msra.mxu0 0
    %1099 = vmatprep.subr.bf16.mxu0 0
    %1100 = vmatpush1.bf16.msra.mxu0 0
    %1101 = vmatprep.subr.bf16.mxu0 0
    %1102 = vmatpush1.bf16.msra.mxu0 0
    %1103 = vmatprep.subr.bf16.mxu0 0
    %1104 = vmatpush1.bf16.msra.mxu0 0
    %1105 = vmatprep.subr.bf16.mxu0 0
    %1106 = vmatpush1.bf16.msra.mxu0 0
    %1107 = vmatprep.subr.bf16.mxu0 0
    %1108 = vmatpush1.bf16.msra.mxu0 0
    %1109 = vmatprep.subr.bf16.mxu0 0
    %1110 = vmatpush1.bf16.msra.mxu0 0
    %1111 = vmatprep.subr.bf16.mxu0 0
    %1112 = vmatpush1.bf16.msra.mxu0 0
    %1113 = vmatprep.subr.bf16.mxu0 0
    %1114 = vmatpush1.bf16.msra.mxu0 0
    %1115 = vmatprep.mubr.bf16.mxu0 0
    %1116 = vmatmul.mubr.bf16.gmra.mrb[0].mxu0 %v150
    %v1117 = vpop.f32.mrb[0].mxu0
    %v1118 = vadd.f32 %v1069, %v1117
    %v1119 = vpop.f32.mrb[0].mxu0
    %v1120 = vpop.f32.mrb[0].mxu0
    %v1121 = vadd.f32 %v1069, %v1120
    %v1122 = vpop.f32.mrb[0].mxu0
    %1123 = vdwg.mxu0
    %s1124 = scalar_lea.vmem %s5, 32
    %v1125 = vld [vmem:[%s1124] sm:$0xf]
    %v1126 = vld [vmem:[%s1124 + $0x4] sm:$0xf]
    %v1127 = vld [vmem:[%s1124 + $0x8] sm:$0xf]
    %v1128 = vld [vmem:[%s1124 + $0xc] sm:$0xf]
    %s1129 = scalar_lea.vmem %s6, 2
    %v1130 = vld [vmem:[%s1129] sm:$0x1]
    %v1132 = vlaneseq
    %v1133 = vshrl.u32 %v1132, 7
    %v1134 = vsub.s32 0, %v1133
    %v1135 = vrot.slane %v1130, %v1134
    %v1141 = vunpack.c.l.b16 %v1125
    %v1142 = vunpack.c.l.b16 %v1126
    %v1143 = vunpack.c.l.b16 %v1127
    %v1144 = vunpack.c.l.b16 %v1128
    %v1145 = vpack.c.b16 %v1142, %v1141
    %v1146 = vpack.c.b16 %v1144, %v1143
    %1149 = vmatprep.subr.bf16.mxu0 0
    %1150 = vmatpush1.bf16.msra.mxu0 %v1145
    %1151 = vmatprep.subr.bf16.mxu0 0
    %1152 = vmatpush1.bf16.msra.mxu0 %v1146
    %1153 = vmatprep.subr.bf16.mxu0 0
    %1154 = vmatpush1.bf16.msra.mxu0 0
    %1155 = vmatprep.subr.bf16.mxu0 0
    %1156 = vmatpush1.bf16.msra.mxu0 0
    %1157 = vmatprep.subr.bf16.mxu0 0
    %1158 = vmatpush1.bf16.msra.mxu0 0
    %1159 = vmatprep.subr.bf16.mxu0 0
    %1160 = vmatpush1.bf16.msra.mxu0 0
    %1161 = vmatprep.subr.bf16.mxu0 0
    %1162 = vmatpush1.bf16.msra.mxu0 0
    %1163 = vmatprep.subr.bf16.mxu0 0
    %1164 = vmatpush1.bf16.msra.mxu0 0
    %1165 = vmatprep.subr.bf16.mxu0 0
    %1166 = vmatpush1.bf16.msra.mxu0 0
    %1167 = vmatprep.subr.bf16.mxu0 0
    %1168 = vmatpush1.bf16.msra.mxu0 0
    %1169 = vmatprep.subr.bf16.mxu0 0
    %1170 = vmatpush1.bf16.msra.mxu0 0
    %1171 = vmatprep.subr.bf16.mxu0 0
    %1172 = vmatpush1.bf16.msra.mxu0 0
    %1173 = vmatprep.subr.bf16.mxu0 0
    %1174 = vmatpush1.bf16.msra.mxu0 0
    %1175 = vmatprep.subr.bf16.mxu0 0
    %1176 = vmatpush1.bf16.msra.mxu0 0
    %1177 = vmatprep.subr.bf16.mxu0 0
    %1178 = vmatpush1.bf16.msra.mxu0 0
    %1179 = vmatprep.subr.bf16.mxu0 0
    %1180 = vmatpush1.bf16.msra.mxu0 0
    %1181 = vmatprep.mubr.bf16.mxu0 0
    %1182 = vmatmul.mubr.bf16.gmra.mrb[0].mxu0 %v150
    %v1183 = vpop.f32.mrb[0].mxu0
    %v1184 = vadd.f32 %v1135, %v1183
    %v1185 = vpop.f32.mrb[0].mxu0
    %v1186 = vpop.f32.mrb[0].mxu0
    %v1187 = vadd.f32 %v1135, %v1186
    %v1188 = vpop.f32.mrb[0].mxu0
    %1189 = vdwg.mxu0
    %s1190 = scalar_lea.vmem %s7, 32
    %v1191 = vld [vmem:[%s1190] sm:$0xf]
    %v1192 = vld [vmem:[%s1190 + $0x4] sm:$0xf]
    %v1193 = vld [vmem:[%s1190 + $0x8] sm:$0xf]
    %v1194 = vld [vmem:[%s1190 + $0xc] sm:$0xf]
    %s1195 = scalar_lea.vmem %s8, 2
    %v1196 = vld [vmem:[%s1195] sm:$0x1]
    %v1198 = vlaneseq
    %v1199 = vshrl.u32 %v1198, 7
    %v1200 = vsub.s32 0, %v1199
    %v1201 = vrot.slane %v1196, %v1200
    %v1207 = vunpack.c.l.b16 %v1191
    %v1208 = vunpack.c.l.b16 %v1192
    %v1209 = vunpack.c.l.b16 %v1193
    %v1210 = vunpack.c.l.b16 %v1194
    %v1211 = vpack.c.b16 %v1208, %v1207
    %v1212 = vpack.c.b16 %v1210, %v1209
    %1215 = vmatprep.subr.bf16.mxu0 0
    %1216 = vmatpush1.bf16.msra.mxu0 %v1211
    %1217 = vmatprep.subr.bf16.mxu0 0
    %1218 = vmatpush1.bf16.msra.mxu0 %v1212
    %1219 = vmatprep.subr.bf16.mxu0 0
    %1220 = vmatpush1.bf16.msra.mxu0 0
    %1221 = vmatprep.subr.bf16.mxu0 0
    %1222 = vmatpush1.bf16.msra.mxu0 0
    %1223 = vmatprep.subr.bf16.mxu0 0
    %1224 = vmatpush1.bf16.msra.mxu0 0
    %1225 = vmatprep.subr.bf16.mxu0 0
    %1226 = vmatpush1.bf16.msra.mxu0 0
    %1227 = vmatprep.subr.bf16.mxu0 0
    %1228 = vmatpush1.bf16.msra.mxu0 0
    %1229 = vmatprep.subr.bf16.mxu0 0
    %1230 = vmatpush1.bf16.msra.mxu0 0
    %1231 = vmatprep.subr.bf16.mxu0 0
    %1232 = vmatpush1.bf16.msra.mxu0 0
    %1233 = vmatprep.subr.bf16.mxu0 0
    %1234 = vmatpush1.bf16.msra.mxu0 0
    %1235 = vmatprep.subr.bf16.mxu0 0
    %1236 = vmatpush1.bf16.msra.mxu0 0
    %1237 = vmatprep.subr.bf16.mxu0 0
    %1238 = vmatpush1.bf16.msra.mxu0 0
    %1239 = vmatprep.subr.bf16.mxu0 0
    %1240 = vmatpush1.bf16.msra.mxu0 0
    %1241 = vmatprep.subr.bf16.mxu0 0
    %1242 = vmatpush1.bf16.msra.mxu0 0
    %1243 = vmatprep.subr.bf16.mxu0 0
    %1244 = vmatpush1.bf16.msra.mxu0 0
    %1245 = vmatprep.subr.bf16.mxu0 0
    %1246 = vmatpush1.bf16.msra.mxu0 0
    %1247 = vmatprep.mubr.bf16.mxu0 0
    %1248 = vmatmul.mubr.bf16.gmra.mrb[0].mxu0 %v150
    %v1249 = vpop.f32.mrb[0].mxu0
    %v1250 = vadd.f32 %v1201, %v1249
    %v1251 = vpop.f32.mrb[0].mxu0
    %v1252 = vpop.f32.mrb[0].mxu0
    %v1253 = vadd.f32 %v1201, %v1252
    %v1254 = vpop.f32.mrb[0].mxu0
    %1255 = vdwg.mxu0
    %v1256 = vpack.c.bf16 %v1118, %v1118
    %v1257 = vpack.c.bf16 %v1121, %v1121
    %v1258 = vpack.c.bf16 %v1184, %v1184
    %v1259 = vpack.c.bf16 %v1187, %v1187
    %v1261 = vsel %vm325, %v1256, 0
    %v1264 = vsel %vm325, %v1258, 0
    %1266 = vmatprep.subr.bf16.mxu0 0
    %1267 = vmatpush1.bf16.xpose.msra.mxu0 %v1264
    %1268 = vmatprep.subr.bf16.mxu0 0
    %1269 = vmatpush1.bf16.xpose.msra.mxu0 0
    %1270 = vmatprep.subr.bf16.mxu0 0
    %1271 = vmatpush1.bf16.xpose.msra.mxu0 0
    %1272 = vmatprep.subr.bf16.mxu0 0
    %1273 = vmatpush1.bf16.xpose.msra.mxu0 0
    %1274 = vmatprep.subr.bf16.mxu0 0
    %1275 = vmatpush1.bf16.xpose.msra.mxu0 0
    %1276 = vmatprep.subr.bf16.mxu0 0
    %1277 = vmatpush1.bf16.xpose.msra.mxu0 0
    %1278 = vmatprep.subr.bf16.mxu0 0
    %1279 = vmatpush1.bf16.xpose.msra.mxu0 0
    %1280 = vmatprep.subr.bf16.mxu0 0
    %1281 = vmatpush1.bf16.xpose.msra.mxu0 0
    %1282 = vmatprep.subr.bf16.mxu0 0
    %1283 = vmatpush1.bf16.xpose.msra.mxu0 0
    %1284 = vmatprep.subr.bf16.mxu0 0
    %1285 = vmatpush1.bf16.xpose.msra.mxu0 0
    %1286 = vmatprep.subr.bf16.mxu0 0
    %1287 = vmatpush1.bf16.xpose.msra.mxu0 0
    %1288 = vmatprep.subr.bf16.mxu0 0
    %1289 = vmatpush1.bf16.xpose.msra.mxu0 0
    %1290 = vmatprep.subr.bf16.mxu0 0
    %1291 = vmatpush1.bf16.xpose.msra.mxu0 0
    %1292 = vmatprep.subr.bf16.mxu0 0
    %1293 = vmatpush1.bf16.xpose.msra.mxu0 0
    %1294 = vmatprep.subr.bf16.mxu0 0
    %1295 = vmatpush1.bf16.xpose.msra.mxu0 0
    %1296 = vmatprep.subr.bf16.mxu0 0
    %1297 = vmatpush1.bf16.xpose.msra.mxu0 0
    %1298 = vmatprep.mubr.bf16.mxu0 0
    %1299 = vmatmul.mubr.bf16.gmra.mrb[0].mxu0 %v1261
    %v1300 = vpop.f32.mrb[0].mxu0
    %v1301 = vadd.f32 0.0, %v1300
    %v1302 = vpop.f32.mrb[0].mxu0
    %v1303 = vpop.f32.mrb[0].mxu0
    %v1304 = vpop.f32.mrb[0].mxu0
    %1305 = vdwg.mxu0
    %v1307 = vsel %vm325, %v1257, 0
    %v1310 = vsel %vm325, %v1259, 0
    %1312 = vmatprep.subr.bf16.mxu0 0
    %1313 = vmatpush1.bf16.xpose.msra.mxu0 %v1310
    %1314 = vmatprep.subr.bf16.mxu0 0
    %1315 = vmatpush1.bf16.xpose.msra.mxu0 0
    %1316 = vmatprep.subr.bf16.mxu0 0
    %1317 = vmatpush1.bf16.xpose.msra.mxu0 0
    %1318 = vmatprep.subr.bf16.mxu0 0
    %1319 = vmatpush1.bf16.xpose.msra.mxu0 0
    %1320 = vmatprep.subr.bf16.mxu0 0
    %1321 = vmatpush1.bf16.xpose.msra.mxu0 0
    %1322 = vmatprep.subr.bf16.mxu0 0
    %1323 = vmatpush1.bf16.xpose.msra.mxu0 0
    %1324 = vmatprep.subr.bf16.mxu0 0
    %1325 = vmatpush1.bf16.xpose.msra.mxu0 0
    %1326 = vmatprep.subr.bf16.mxu0 0
    %1327 = vmatpush1.bf16.xpose.msra.mxu0 0
    %1328 = vmatprep.subr.bf16.mxu0 0
    %1329 = vmatpush1.bf16.xpose.msra.mxu0 0
    %1330 = vmatprep.subr.bf16.mxu0 0
    %1331 = vmatpush1.bf16.xpose.msra.mxu0 0
    %1332 = vmatprep.subr.bf16.mxu0 0
    %1333 = vmatpush1.bf16.xpose.msra.mxu0 0
    %1334 = vmatprep.subr.bf16.mxu0 0
    %1335 = vmatpush1.bf16.xpose.msra.mxu0 0
    %1336 = vmatprep.subr.bf16.mxu0 0
    %1337 = vmatpush1.bf16.xpose.msra.mxu0 0
    %1338 = vmatprep.subr.bf16.mxu0 0
    %1339 = vmatpush1.bf16.xpose.msra.mxu0 0
    %1340 = vmatprep.subr.bf16.mxu0 0
    %1341 = vmatpush1.bf16.xpose.msra.mxu0 0
    %1342 = vmatprep.subr.bf16.mxu0 0
    %1343 = vmatpush1.bf16.xpose.msra.mxu0 0
    %1344 = vmatprep.mubr.bf16.mxu0 0
    %1345 = vmatmul.mubr.bf16.gmra.mrb[0].mxu0 %v1307
    %v1346 = vpop.f32.mrb[0].mxu0
    %v1347 = vadd.f32 0.0, %v1346
    %v1348 = vpop.f32.mrb[0].mxu0
    %v1349 = vpop.f32.mrb[0].mxu0
    %v1350 = vpop.f32.mrb[0].mxu0
    %1351 = vdwg.mxu0
    %v1352 = vsel %vm325, %v1301, -inf
    %1353 = vmax.xlane.f32.xlu0 %v1352
    %v1354 = vpop.xlane.xlu0 %1353
    %v1355 = vsel %vm325, %v1347, -inf
    %1356 = vmax.xlane.f32.xlu0 %v1355
    %v1357 = vpop.xlane.xlu0 %1356
    %v1358 = vsub.f32 %v1301, %v1354
    %v1359 = vsub.f32 %v1347, %v1357
    %v1360 = vmul.f32 %v1358, 1.442695
    %v1361 = vpow.pop %v1360
    %v1362 = vmul.f32 %v1359, 1.442695
    %v1363 = vpow.pop %v1362
    %v1364 = vsel %vm325, %v1361, 0.0
    %1365 = vadd.xlane.f32.xlu0 %v1364
    %v1366 = vpop.xlane.xlu0 %1365
    %v1367 = vsel %vm325, %v1363, 0.0
    %1368 = vadd.xlane.f32.xlu0 %v1367
    %v1369 = vpop.xlane.xlu0 %1368
    %v1370 = vrcp.pop %v1366
    %v1371 = vrcp.pop %v1369
    %v1372 = vmul.f32 %v1361, %v1370
    %v1373 = vmul.f32 %v1363, %v1371
    %v1374 = vpack.c.bf16 %v1372, %v1372
    %v1375 = vpack.c.bf16 %v1373, %v1373
    %v1376 = vpack.c.bf16 %v1250, %v1250
    %v1377 = vpack.c.bf16 %v1253, %v1253
    %v1379 = vsel %vm325, %v1374, 0
    %v1382 = vsel %vm447, %v1376, 0
    %1384 = vmatprep.subr.bf16.mxu0 0
    %1385 = vmatpush1.bf16.msra.mxu0 %v1382
    %1386 = vmatprep.subr.bf16.mxu0 0
    %1387 = vmatpush1.bf16.msra.mxu0 0
    %1388 = vmatprep.subr.bf16.mxu0 0
    %1389 = vmatpush1.bf16.msra.mxu0 0
    %1390 = vmatprep.subr.bf16.mxu0 0
    %1391 = vmatpush1.bf16.msra.mxu0 0
    %1392 = vmatprep.subr.bf16.mxu0 0
    %1393 = vmatpush1.bf16.msra.mxu0 0
    %1394 = vmatprep.subr.bf16.mxu0 0
    %1395 = vmatpush1.bf16.msra.mxu0 0
    %1396 = vmatprep.subr.bf16.mxu0 0
    %1397 = vmatpush1.bf16.msra.mxu0 0
    %1398 = vmatprep.subr.bf16.mxu0 0
    %1399 = vmatpush1.bf16.msra.mxu0 0
    %1400 = vmatprep.subr.bf16.mxu0 0
    %1401 = vmatpush1.bf16.msra.mxu0 0
    %1402 = vmatprep.subr.bf16.mxu0 0
    %1403 = vmatpush1.bf16.msra.mxu0 0
    %1404 = vmatprep.subr.bf16.mxu0 0
    %1405 = vmatpush1.bf16.msra.mxu0 0
    %1406 = vmatprep.subr.bf16.mxu0 0
    %1407 = vmatpush1.bf16.msra.mxu0 0
    %1408 = vmatprep.subr.bf16.mxu0 0
    %1409 = vmatpush1.bf16.msra.mxu0 0
    %1410 = vmatprep.subr.bf16.mxu0 0
    %1411 = vmatpush1.bf16.msra.mxu0 0
    %1412 = vmatprep.subr.bf16.mxu0 0
    %1413 = vmatpush1.bf16.msra.mxu0 0
    %1414 = vmatprep.subr.bf16.mxu0 0
    %1415 = vmatpush1.bf16.msra.mxu0 0
    %1416 = vmatprep.mubr.bf16.mxu0 0
    %1417 = vmatmul.mubr.bf16.gmra.mrb[0].mxu0 %v1379
    %v1418 = vpop.f32.mrb[0].mxu0
    %v1419 = vadd.f32 0.0, %v1418
    %v1420 = vpop.f32.mrb[0].mxu0
    %v1421 = vpop.f32.mrb[0].mxu0
    %v1422 = vpop.f32.mrb[0].mxu0
    %1423 = vdwg.mxu0
    %v1425 = vsel %vm325, %v1375, 0
    %v1428 = vsel %vm447, %v1377, 0
    %1430 = vmatprep.subr.bf16.mxu0 0
    %1431 = vmatpush1.bf16.msra.mxu0 %v1428
    %1432 = vmatprep.subr.bf16.mxu0 0
    %1433 = vmatpush1.bf16.msra.mxu0 0
    %1434 = vmatprep.subr.bf16.mxu0 0
    %1435 = vmatpush1.bf16.msra.mxu0 0
    %1436 = vmatprep.subr.bf16.mxu0 0
    %1437 = vmatpush1.bf16.msra.mxu0 0
    %1438 = vmatprep.subr.bf16.mxu0 0
    %1439 = vmatpush1.bf16.msra.mxu0 0
    %1440 = vmatprep.subr.bf16.mxu0 0
    %1441 = vmatpush1.bf16.msra.mxu0 0
    %1442 = vmatprep.subr.bf16.mxu0 0
    %1443 = vmatpush1.bf16.msra.mxu0 0
    %1444 = vmatprep.subr.bf16.mxu0 0
    %1445 = vmatpush1.bf16.msra.mxu0 0
    %1446 = vmatprep.subr.bf16.mxu0 0
    %1447 = vmatpush1.bf16.msra.mxu0 0
    %1448 = vmatprep.subr.bf16.mxu0 0
    %1449 = vmatpush1.bf16.msra.mxu0 0
    %1450 = vmatprep.subr.bf16.mxu0 0
    %1451 = vmatpush1.bf16.msra.mxu0 0
    %1452 = vmatprep.subr.bf16.mxu0 0
    %1453 = vmatpush1.bf16.msra.mxu0 0
    %1454 = vmatprep.subr.bf16.mxu0 0
    %1455 = vmatpush1.bf16.msra.mxu0 0
    %1456 = vmatprep.subr.bf16.mxu0 0
    %1457 = vmatpush1.bf16.msra.mxu0 0
    %1458 = vmatprep.subr.bf16.mxu0 0
    %1459 = vmatpush1.bf16.msra.mxu0 0
    %1460 = vmatprep.subr.bf16.mxu0 0
    %1461 = vmatpush1.bf16.msra.mxu0 0
    %1462 = vmatprep.mubr.bf16.mxu0 0
    %1463 = vmatmul.mubr.bf16.gmra.mrb[0].mxu0 %v1425
    %v1464 = vpop.f32.mrb[0].mxu0
    %v1465 = vadd.f32 0.0, %v1464
    %v1466 = vpop.f32.mrb[0].mxu0
    %v1467 = vpop.f32.mrb[0].mxu0
    %v1468 = vpop.f32.mrb[0].mxu0
    %1469 = vdwg.mxu0
    %s1470 = scalar_lea.vmem %s9, 8
    %v1471 = vld [vmem:[%s1470] sm:$0xf]
    %v1472 = vpack.c.bf16 %v1465, %v1419
    %v1474 = vsel %vm325, %v1472, 0
    %v1477 = vsel %vm447, %v1471, 0
    %1479 = vmatprep.subr.bf16.mxu0 0
    %1480 = vmatpush1.bf16.msra.mxu0 %v1477
    %1481 = vmatprep.subr.bf16.mxu0 0
    %1482 = vmatpush1.bf16.msra.mxu0 0
    %1483 = vmatprep.subr.bf16.mxu0 0
    %1484 = vmatpush1.bf16.msra.mxu0 0
    %1485 = vmatprep.subr.bf16.mxu0 0
    %1486 = vmatpush1.bf16.msra.mxu0 0
    %1487 = vmatprep.subr.bf16.mxu0 0
    %1488 = vmatpush1.bf16.msra.mxu0 0
    %1489 = vmatprep.subr.bf16.mxu0 0
    %1490 = vmatpush1.bf16.msra.mxu0 0
    %1491 = vmatprep.subr.bf16.mxu0 0
    %1492 = vmatpush1.bf16.msra.mxu0 0
    %1493 = vmatprep.subr.bf16.mxu0 0
    %1494 = vmatpush1.bf16.msra.mxu0 0
    %1495 = vmatprep.subr.bf16.mxu0 0
    %1496 = vmatpush1.bf16.msra.mxu0 0
    %1497 = vmatprep.subr.bf16.mxu0 0
    %1498 = vmatpush1.bf16.msra.mxu0 0
    %1499 = vmatprep.subr.bf16.mxu0 0
    %1500 = vmatpush1.bf16.msra.mxu0 0
    %1501 = vmatprep.subr.bf16.mxu0 0
    %1502 = vmatpush1.bf16.msra.mxu0 0
    %1503 = vmatprep.subr.bf16.mxu0 0
    %1504 = vmatpush1.bf16.msra.mxu0 0
    %1505 = vmatprep.subr.bf16.mxu0 0
    %1506 = vmatpush1.bf16.msra.mxu0 0
    %1507 = vmatprep.subr.bf16.mxu0 0
    %1508 = vmatpush1.bf16.msra.mxu0 0
    %1509 = vmatprep.subr.bf16.mxu0 0
    %1510 = vmatpush1.bf16.msra.mxu0 0
    %1511 = vmatprep.mubr.bf16.mxu0 0
    %1512 = vmatmul.mubr.bf16.gmra.mrb[0].mxu0 %v1474
    %v1513 = vpop.f32.mrb[0].mxu0
    %v1514 = vadd.f32 0.0, %v1513
    %v1515 = vpop.f32.mrb[0].mxu0
    %v1516 = vpop.f32.mrb[0].mxu0
    %v1517 = vadd.f32 0.0, %v1516
    %v1518 = vpop.f32.mrb[0].mxu0
    %1519 = vdwg.mxu0
    %v1520 = vadd.f32 %v1056, %v1514
    %v1521 = vadd.f32 %v1057, %v1517
    %s1522 = scalar_lea.vmem %s3, 48
    %v1523 = vld [vmem:[%s1522] sm:$0xf]
    %v1524 = vld [vmem:[%s1522 + $0x4] sm:$0xf]
    %v1525 = vld [vmem:[%s1522 + $0x8] sm:$0xf]
    %v1526 = vld [vmem:[%s1522 + $0xc] sm:$0xf]
    %s1527 = scalar_lea.vmem %s4, 3
    %v1528 = vld [vmem:[%s1527] sm:$0x1]
    %v1530 = vlaneseq
    %v1531 = vshrl.u32 %v1530, 7
    %v1532 = vsub.s32 0, %v1531
    %v1533 = vrot.slane %v1528, %v1532
    %v1539 = vunpack.c.l.b16 %v1523
    %v1540 = vunpack.c.l.b16 %v1524
    %v1541 = vunpack.c.l.b16 %v1525
    %v1542 = vunpack.c.l.b16 %v1526
    %v1543 = vpack.c.b16 %v1540, %v1539
    %v1544 = vpack.c.b16 %v1542, %v1541
    %1547 = vmatprep.subr.bf16.mxu0 0
    %1548 = vmatpush1.bf16.msra.mxu0 %v1543
    %1549 = vmatprep.subr.bf16.mxu0 0
    %1550 = vmatpush1.bf16.msra.mxu0 %v1544
    %1551 = vmatprep.subr.bf16.mxu0 0
    %1552 = vmatpush1.bf16.msra.mxu0 0
    %1553 = vmatprep.subr.bf16.mxu0 0
    %1554 = vmatpush1.bf16.msra.mxu0 0
    %1555 = vmatprep.subr.bf16.mxu0 0
    %1556 = vmatpush1.bf16.msra.mxu0 0
    %1557 = vmatprep.subr.bf16.mxu0 0
    %1558 = vmatpush1.bf16.msra.mxu0 0
    %1559 = vmatprep.subr.bf16.mxu0 0
    %1560 = vmatpush1.bf16.msra.mxu0 0
    %1561 = vmatprep.subr.bf16.mxu0 0
    %1562 = vmatpush1.bf16.msra.mxu0 0
    %1563 = vmatprep.subr.bf16.mxu0 0
    %1564 = vmatpush1.bf16.msra.mxu0 0
    %1565 = vmatprep.subr.bf16.mxu0 0
    %1566 = vmatpush1.bf16.msra.mxu0 0
    %1567 = vmatprep.subr.bf16.mxu0 0
    %1568 = vmatpush1.bf16.msra.mxu0 0
    %1569 = vmatprep.subr.bf16.mxu0 0
    %1570 = vmatpush1.bf16.msra.mxu0 0
    %1571 = vmatprep.subr.bf16.mxu0 0
    %1572 = vmatpush1.bf16.msra.mxu0 0
    %1573 = vmatprep.subr.bf16.mxu0 0
    %1574 = vmatpush1.bf16.msra.mxu0 0
    %1575 = vmatprep.subr.bf16.mxu0 0
    %1576 = vmatpush1.bf16.msra.mxu0 0
    %1577 = vmatprep.subr.bf16.mxu0 0
    %1578 = vmatpush1.bf16.msra.mxu0 0
    %1579 = vmatprep.mubr.bf16.mxu0 0
    %1580 = vmatmul.mubr.bf16.gmra.mrb[0].mxu0 %v150
    %v1581 = vpop.f32.mrb[0].mxu0
    %v1582 = vadd.f32 %v1533, %v1581
    %v1583 = vpop.f32.mrb[0].mxu0
    %v1584 = vpop.f32.mrb[0].mxu0
    %v1585 = vadd.f32 %v1533, %v1584
    %v1586 = vpop.f32.mrb[0].mxu0
    %1587 = vdwg.mxu0
    %s1588 = scalar_lea.vmem %s5, 48
    %v1589 = vld [vmem:[%s1588] sm:$0xf]
    %v1590 = vld [vmem:[%s1588 + $0x4] sm:$0xf]
    %v1591 = vld [vmem:[%s1588 + $0x8] sm:$0xf]
    %v1592 = vld [vmem:[%s1588 + $0xc] sm:$0xf]
    %s1593 = scalar_lea.vmem %s6, 3
    %v1594 = vld [vmem:[%s1593] sm:$0x1]
    %v1596 = vlaneseq
    %v1597 = vshrl.u32 %v1596, 7
    %v1598 = vsub.s32 0, %v1597
    %v1599 = vrot.slane %v1594, %v1598
    %v1605 = vunpack.c.l.b16 %v1589
    %v1606 = vunpack.c.l.b16 %v1590
    %v1607 = vunpack.c.l.b16 %v1591
    %v1608 = vunpack.c.l.b16 %v1592
    %v1609 = vpack.c.b16 %v1606, %v1605
    %v1610 = vpack.c.b16 %v1608, %v1607
    %1613 = vmatprep.subr.bf16.mxu0 0
    %1614 = vmatpush1.bf16.msra.mxu0 %v1609
    %1615 = vmatprep.subr.bf16.mxu0 0
    %1616 = vmatpush1.bf16.msra.mxu0 %v1610
    %1617 = vmatprep.subr.bf16.mxu0 0
    %1618 = vmatpush1.bf16.msra.mxu0 0
    %1619 = vmatprep.subr.bf16.mxu0 0
    %1620 = vmatpush1.bf16.msra.mxu0 0
    %1621 = vmatprep.subr.bf16.mxu0 0
    %1622 = vmatpush1.bf16.msra.mxu0 0
    %1623 = vmatprep.subr.bf16.mxu0 0
    %1624 = vmatpush1.bf16.msra.mxu0 0
    %1625 = vmatprep.subr.bf16.mxu0 0
    %1626 = vmatpush1.bf16.msra.mxu0 0
    %1627 = vmatprep.subr.bf16.mxu0 0
    %1628 = vmatpush1.bf16.msra.mxu0 0
    %1629 = vmatprep.subr.bf16.mxu0 0
    %1630 = vmatpush1.bf16.msra.mxu0 0
    %1631 = vmatprep.subr.bf16.mxu0 0
    %1632 = vmatpush1.bf16.msra.mxu0 0
    %1633 = vmatprep.subr.bf16.mxu0 0
    %1634 = vmatpush1.bf16.msra.mxu0 0
    %1635 = vmatprep.subr.bf16.mxu0 0
    %1636 = vmatpush1.bf16.msra.mxu0 0
    %1637 = vmatprep.subr.bf16.mxu0 0
    %1638 = vmatpush1.bf16.msra.mxu0 0
    %1639 = vmatprep.subr.bf16.mxu0 0
    %1640 = vmatpush1.bf16.msra.mxu0 0
    %1641 = vmatprep.subr.bf16.mxu0 0
    %1642 = vmatpush1.bf16.msra.mxu0 0
    %1643 = vmatprep.subr.bf16.mxu0 0
    %1644 = vmatpush1.bf16.msra.mxu0 0
    %1645 = vmatprep.mubr.bf16.mxu0 0
    %1646 = vmatmul.mubr.bf16.gmra.mrb[0].mxu0 %v150
    %v1647 = vpop.f32.mrb[0].mxu0
    %v1648 = vadd.f32 %v1599, %v1647
    %v1649 = vpop.f32.mrb[0].mxu0
    %v1650 = vpop.f32.mrb[0].mxu0
    %v1651 = vadd.f32 %v1599, %v1650
    %v1652 = vpop.f32.mrb[0].mxu0
    %1653 = vdwg.mxu0
    %s1654 = scalar_lea.vmem %s7, 48
    %v1655 = vld [vmem:[%s1654] sm:$0xf]
    %v1656 = vld [vmem:[%s1654 + $0x4] sm:$0xf]
    %v1657 = vld [vmem:[%s1654 + $0x8] sm:$0xf]
    %v1658 = vld [vmem:[%s1654 + $0xc] sm:$0xf]
    %s1659 = scalar_lea.vmem %s8, 3
    %v1660 = vld [vmem:[%s1659] sm:$0x1]
    %v1662 = vlaneseq
    %v1663 = vshrl.u32 %v1662, 7
    %v1664 = vsub.s32 0, %v1663
    %v1665 = vrot.slane %v1660, %v1664
    %v1671 = vunpack.c.l.b16 %v1655
    %v1672 = vunpack.c.l.b16 %v1656
    %v1673 = vunpack.c.l.b16 %v1657
    %v1674 = vunpack.c.l.b16 %v1658
    %v1675 = vpack.c.b16 %v1672, %v1671
    %v1676 = vpack.c.b16 %v1674, %v1673
    %1679 = vmatprep.subr.bf16.mxu0 0
    %1680 = vmatpush1.bf16.msra.mxu0 %v1675
    %1681 = vmatprep.subr.bf16.mxu0 0
    %1682 = vmatpush1.bf16.msra.mxu0 %v1676
    %1683 = vmatprep.subr.bf16.mxu0 0
    %1684 = vmatpush1.bf16.msra.mxu0 0
    %1685 = vmatprep.subr.bf16.mxu0 0
    %1686 = vmatpush1.bf16.msra.mxu0 0
    %1687 = vmatprep.subr.bf16.mxu0 0
    %1688 = vmatpush1.bf16.msra.mxu0 0
    %1689 = vmatprep.subr.bf16.mxu0 0
    %1690 = vmatpush1.bf16.msra.mxu0 0
    %1691 = vmatprep.subr.bf16.mxu0 0
    %1692 = vmatpush1.bf16.msra.mxu0 0
    %1693 = vmatprep.subr.bf16.mxu0 0
    %1694 = vmatpush1.bf16.msra.mxu0 0
    %1695 = vmatprep.subr.bf16.mxu0 0
    %1696 = vmatpush1.bf16.msra.mxu0 0
    %1697 = vmatprep.subr.bf16.mxu0 0
    %1698 = vmatpush1.bf16.msra.mxu0 0
    %1699 = vmatprep.subr.bf16.mxu0 0
    %1700 = vmatpush1.bf16.msra.mxu0 0
    %1701 = vmatprep.subr.bf16.mxu0 0
    %1702 = vmatpush1.bf16.msra.mxu0 0
    %1703 = vmatprep.subr.bf16.mxu0 0
    %1704 = vmatpush1.bf16.msra.mxu0 0
    %1705 = vmatprep.subr.bf16.mxu0 0
    %1706 = vmatpush1.bf16.msra.mxu0 0
    %1707 = vmatprep.subr.bf16.mxu0 0
    %1708 = vmatpush1.bf16.msra.mxu0 0
    %1709 = vmatprep.subr.bf16.mxu0 0
    %1710 = vmatpush1.bf16.msra.mxu0 0
    %1711 = vmatprep.mubr.bf16.mxu0 0
    %1712 = vmatmul.mubr.bf16.gmra.mrb[0].mxu0 %v150
    %v1713 = vpop.f32.mrb[0].mxu0
    %v1714 = vadd.f32 %v1665, %v1713
    %v1715 = vpop.f32.mrb[0].mxu0
    %v1716 = vpop.f32.mrb[0].mxu0
    %v1717 = vadd.f32 %v1665, %v1716
    %v1718 = vpop.f32.mrb[0].mxu0
    %1719 = vdwg.mxu0
    %v1720 = vpack.c.bf16 %v1582, %v1582
    %v1721 = vpack.c.bf16 %v1585, %v1585
    %v1722 = vpack.c.bf16 %v1648, %v1648
    %v1723 = vpack.c.bf16 %v1651, %v1651
    %v1725 = vsel %vm325, %v1720, 0
    %v1728 = vsel %vm325, %v1722, 0
    %1730 = vmatprep.subr.bf16.mxu0 0
    %1731 = vmatpush1.bf16.xpose.msra.mxu0 %v1728
    %1732 = vmatprep.subr.bf16.mxu0 0
    %1733 = vmatpush1.bf16.xpose.msra.mxu0 0
    %1734 = vmatprep.subr.bf16.mxu0 0
    %1735 = vmatpush1.bf16.xpose.msra.mxu0 0
    %1736 = vmatprep.subr.bf16.mxu0 0
    %1737 = vmatpush1.bf16.xpose.msra.mxu0 0
    %1738 = vmatprep.subr.bf16.mxu0 0
    %1739 = vmatpush1.bf16.xpose.msra.mxu0 0
    %1740 = vmatprep.subr.bf16.mxu0 0
    %1741 = vmatpush1.bf16.xpose.msra.mxu0 0
    %1742 = vmatprep.subr.bf16.mxu0 0
    %1743 = vmatpush1.bf16.xpose.msra.mxu0 0
    %1744 = vmatprep.subr.bf16.mxu0 0
    %1745 = vmatpush1.bf16.xpose.msra.mxu0 0
    %1746 = vmatprep.subr.bf16.mxu0 0
    %1747 = vmatpush1.bf16.xpose.msra.mxu0 0
    %1748 = vmatprep.subr.bf16.mxu0 0
    %1749 = vmatpush1.bf16.xpose.msra.mxu0 0
    %1750 = vmatprep.subr.bf16.mxu0 0
    %1751 = vmatpush1.bf16.xpose.msra.mxu0 0
    %1752 = vmatprep.subr.bf16.mxu0 0
    %1753 = vmatpush1.bf16.xpose.msra.mxu0 0
    %1754 = vmatprep.subr.bf16.mxu0 0
    %1755 = vmatpush1.bf16.xpose.msra.mxu0 0
    %1756 = vmatprep.subr.bf16.mxu0 0
    %1757 = vmatpush1.bf16.xpose.msra.mxu0 0
    %1758 = vmatprep.subr.bf16.mxu0 0
    %1759 = vmatpush1.bf16.xpose.msra.mxu0 0
    %1760 = vmatprep.subr.bf16.mxu0 0
    %1761 = vmatpush1.bf16.xpose.msra.mxu0 0
    %1762 = vmatprep.mubr.bf16.mxu0 0
    %1763 = vmatmul.mubr.bf16.gmra.mrb[0].mxu0 %v1725
    %v1764 = vpop.f32.mrb[0].mxu0
    %v1765 = vadd.f32 0.0, %v1764
    %v1766 = vpop.f32.mrb[0].mxu0
    %v1767 = vpop.f32.mrb[0].mxu0
    %v1768 = vpop.f32.mrb[0].mxu0
    %1769 = vdwg.mxu0
    %v1771 = vsel %vm325, %v1721, 0
    %v1774 = vsel %vm325, %v1723, 0
    %1776 = vmatprep.subr.bf16.mxu0 0
    %1777 = vmatpush1.bf16.xpose.msra.mxu0 %v1774
    %1778 = vmatprep.subr.bf16.mxu0 0
    %1779 = vmatpush1.bf16.xpose.msra.mxu0 0
    %1780 = vmatprep.subr.bf16.mxu0 0
    %1781 = vmatpush1.bf16.xpose.msra.mxu0 0
    %1782 = vmatprep.subr.bf16.mxu0 0
    %1783 = vmatpush1.bf16.xpose.msra.mxu0 0
    %1784 = vmatprep.subr.bf16.mxu0 0
    %1785 = vmatpush1.bf16.xpose.msra.mxu0 0
    %1786 = vmatprep.subr.bf16.mxu0 0
    %1787 = vmatpush1.bf16.xpose.msra.mxu0 0
    %1788 = vmatprep.subr.bf16.mxu0 0
    %1789 = vmatpush1.bf16.xpose.msra.mxu0 0
    %1790 = vmatprep.subr.bf16.mxu0 0
    %1791 = vmatpush1.bf16.xpose.msra.mxu0 0
    %1792 = vmatprep.subr.bf16.mxu0 0
    %1793 = vmatpush1.bf16.xpose.msra.mxu0 0
    %1794 = vmatprep.subr.bf16.mxu0 0
    %1795 = vmatpush1.bf16.xpose.msra.mxu0 0
    %1796 = vmatprep.subr.bf16.mxu0 0
    %1797 = vmatpush1.bf16.xpose.msra.mxu0 0
    %1798 = vmatprep.subr.bf16.mxu0 0
    %1799 = vmatpush1.bf16.xpose.msra.mxu0 0
    %1800 = vmatprep.subr.bf16.mxu0 0
    %1801 = vmatpush1.bf16.xpose.msra.mxu0 0
    %1802 = vmatprep.subr.bf16.mxu0 0
    %1803 = vmatpush1.bf16.xpose.msra.mxu0 0
    %1804 = vmatprep.subr.bf16.mxu0 0
    %1805 = vmatpush1.bf16.xpose.msra.mxu0 0
    %1806 = vmatprep.subr.bf16.mxu0 0
    %1807 = vmatpush1.bf16.xpose.msra.mxu0 0
    %1808 = vmatprep.mubr.bf16.mxu0 0
    %1809 = vmatmul.mubr.bf16.gmra.mrb[0].mxu0 %v1771
    %v1810 = vpop.f32.mrb[0].mxu0
    %v1811 = vadd.f32 0.0, %v1810
    %v1812 = vpop.f32.mrb[0].mxu0
    %v1813 = vpop.f32.mrb[0].mxu0
    %v1814 = vpop.f32.mrb[0].mxu0
    %1815 = vdwg.mxu0
    %v1816 = vsel %vm325, %v1765, -inf
    %1817 = vmax.xlane.f32.xlu0 %v1816
    %v1818 = vpop.xlane.xlu0 %1817
    %v1819 = vsel %vm325, %v1811, -inf
    %1820 = vmax.xlane.f32.xlu0 %v1819
    %v1821 = vpop.xlane.xlu0 %1820
    %v1822 = vsub.f32 %v1765, %v1818
    %v1823 = vsub.f32 %v1811, %v1821
    %v1824 = vmul.f32 %v1822, 1.442695
    %v1825 = vpow.pop %v1824
    %v1826 = vmul.f32 %v1823, 1.442695
    %v1827 = vpow.pop %v1826
    %v1828 = vsel %vm325, %v1825, 0.0
    %1829 = vadd.xlane.f32.xlu0 %v1828
    %v1830 = vpop.xlane.xlu0 %1829
    %v1831 = vsel %vm325, %v1827, 0.0
    %1832 = vadd.xlane.f32.xlu0 %v1831
    %v1833 = vpop.xlane.xlu0 %1832
    %v1834 = vrcp.pop %v1830
    %v1835 = vrcp.pop %v1833
    %v1836 = vmul.f32 %v1825, %v1834
    %v1837 = vmul.f32 %v1827, %v1835
    %v1838 = vpack.c.bf16 %v1836, %v1836
    %v1839 = vpack.c.bf16 %v1837, %v1837
    %v1840 = vpack.c.bf16 %v1714, %v1714
    %v1841 = vpack.c.bf16 %v1717, %v1717
    %v1843 = vsel %vm325, %v1838, 0
    %v1846 = vsel %vm447, %v1840, 0
    %1848 = vmatprep.subr.bf16.mxu0 0
    %1849 = vmatpush1.bf16.msra.mxu0 %v1846
    %1850 = vmatprep.subr.bf16.mxu0 0
    %1851 = vmatpush1.bf16.msra.mxu0 0
    %1852 = vmatprep.subr.bf16.mxu0 0
    %1853 = vmatpush1.bf16.msra.mxu0 0
    %1854 = vmatprep.subr.bf16.mxu0 0
    %1855 = vmatpush1.bf16.msra.mxu0 0
    %1856 = vmatprep.subr.bf16.mxu0 0
    %1857 = vmatpush1.bf16.msra.mxu0 0
    %1858 = vmatprep.subr.bf16.mxu0 0
    %1859 = vmatpush1.bf16.msra.mxu0 0
    %1860 = vmatprep.subr.bf16.mxu0 0
    %1861 = vmatpush1.bf16.msra.mxu0 0
    %1862 = vmatprep.subr.bf16.mxu0 0
    %1863 = vmatpush1.bf16.msra.mxu0 0
    %1864 = vmatprep.subr.bf16.mxu0 0
    %1865 = vmatpush1.bf16.msra.mxu0 0
    %1866 = vmatprep.subr.bf16.mxu0 0
    %1867 = vmatpush1.bf16.msra.mxu0 0
    %1868 = vmatprep.subr.bf16.mxu0 0
    %1869 = vmatpush1.bf16.msra.mxu0 0
    %1870 = vmatprep.subr.bf16.mxu0 0
    %1871 = vmatpush1.bf16.msra.mxu0 0
    %1872 = vmatprep.subr.bf16.mxu0 0
    %1873 = vmatpush1.bf16.msra.mxu0 0
    %1874 = vmatprep.subr.bf16.mxu0 0
    %1875 = vmatpush1.bf16.msra.mxu0 0
    %1876 = vmatprep.subr.bf16.mxu0 0
    %1877 = vmatpush1.bf16.msra.mxu0 0
    %1878 = vmatprep.subr.bf16.mxu0 0
    %1879 = vmatpush1.bf16.msra.mxu0 0
    %1880 = vmatprep.mubr.bf16.mxu0 0
    %1881 = vmatmul.mubr.bf16.gmra.mrb[0].mxu0 %v1843
    %v1882 = vpop.f32.mrb[0].mxu0
    %v1883 = vadd.f32 0.0, %v1882
    %v1884 = vpop.f32.mrb[0].mxu0
    %v1885 = vpop.f32.mrb[0].mxu0
    %v1886 = vpop.f32.mrb[0].mxu0
    %1887 = vdwg.mxu0
    %v1889 = vsel %vm325, %v1839, 0
    %v1892 = vsel %vm447, %v1841, 0
    %1894 = vmatprep.subr.bf16.mxu0 0
    %1895 = vmatpush1.bf16.msra.mxu0 %v1892
    %1896 = vmatprep.subr.bf16.mxu0 0
    %1897 = vmatpush1.bf16.msra.mxu0 0
    %1898 = vmatprep.subr.bf16.mxu0 0
    %1899 = vmatpush1.bf16.msra.mxu0 0
    %1900 = vmatprep.subr.bf16.mxu0 0
    %1901 = vmatpush1.bf16.msra.mxu0 0
    %1902 = vmatprep.subr.bf16.mxu0 0
    %1903 = vmatpush1.bf16.msra.mxu0 0
    %1904 = vmatprep.subr.bf16.mxu0 0
    %1905 = vmatpush1.bf16.msra.mxu0 0
    %1906 = vmatprep.subr.bf16.mxu0 0
    %1907 = vmatpush1.bf16.msra.mxu0 0
    %1908 = vmatprep.subr.bf16.mxu0 0
    %1909 = vmatpush1.bf16.msra.mxu0 0
    %1910 = vmatprep.subr.bf16.mxu0 0
    %1911 = vmatpush1.bf16.msra.mxu0 0
    %1912 = vmatprep.subr.bf16.mxu0 0
    %1913 = vmatpush1.bf16.msra.mxu0 0
    %1914 = vmatprep.subr.bf16.mxu0 0
    %1915 = vmatpush1.bf16.msra.mxu0 0
    %1916 = vmatprep.subr.bf16.mxu0 0
    %1917 = vmatpush1.bf16.msra.mxu0 0
    %1918 = vmatprep.subr.bf16.mxu0 0
    %1919 = vmatpush1.bf16.msra.mxu0 0
    %1920 = vmatprep.subr.bf16.mxu0 0
    %1921 = vmatpush1.bf16.msra.mxu0 0
    %1922 = vmatprep.subr.bf16.mxu0 0
    %1923 = vmatpush1.bf16.msra.mxu0 0
    %1924 = vmatprep.subr.bf16.mxu0 0
    %1925 = vmatpush1.bf16.msra.mxu0 0
    %1926 = vmatprep.mubr.bf16.mxu0 0
    %1927 = vmatmul.mubr.bf16.gmra.mrb[0].mxu0 %v1889
    %v1928 = vpop.f32.mrb[0].mxu0
    %v1929 = vadd.f32 0.0, %v1928
    %v1930 = vpop.f32.mrb[0].mxu0
    %v1931 = vpop.f32.mrb[0].mxu0
    %v1932 = vpop.f32.mrb[0].mxu0
    %1933 = vdwg.mxu0
    %s1934 = scalar_lea.vmem %s9, 12
    %v1935 = vld [vmem:[%s1934] sm:$0xf]
    %v1936 = vpack.c.bf16 %v1929, %v1883
    %v1938 = vsel %vm325, %v1936, 0
    %v1941 = vsel %vm447, %v1935, 0
    %1943 = vmatprep.subr.bf16.mxu0 0
    %1944 = vmatpush1.bf16.msra.mxu0 %v1941
    %1945 = vmatprep.subr.bf16.mxu0 0
    %1946 = vmatpush1.bf16.msra.mxu0 0
    %1947 = vmatprep.subr.bf16.mxu0 0
    %1948 = vmatpush1.bf16.msra.mxu0 0
    %1949 = vmatprep.subr.bf16.mxu0 0
    %1950 = vmatpush1.bf16.msra.mxu0 0
    %1951 = vmatprep.subr.bf16.mxu0 0
    %1952 = vmatpush1.bf16.msra.mxu0 0
    %1953 = vmatprep.subr.bf16.mxu0 0
    %1954 = vmatpush1.bf16.msra.mxu0 0
    %1955 = vmatprep.subr.bf16.mxu0 0
    %1956 = vmatpush1.bf16.msra.mxu0 0
    %1957 = vmatprep.subr.bf16.mxu0 0
    %1958 = vmatpush1.bf16.msra.mxu0 0
    %1959 = vmatprep.subr.bf16.mxu0 0
    %1960 = vmatpush1.bf16.msra.mxu0 0
    %1961 = vmatprep.subr.bf16.mxu0 0
    %1962 = vmatpush1.bf16.msra.mxu0 0
    %1963 = vmatprep.subr.bf16.mxu0 0
    %1964 = vmatpush1.bf16.msra.mxu0 0
    %1965 = vmatprep.subr.bf16.mxu0 0
    %1966 = vmatpush1.bf16.msra.mxu0 0
    %1967 = vmatprep.subr.bf16.mxu0 0
    %1968 = vmatpush1.bf16.msra.mxu0 0
    %1969 = vmatprep.subr.bf16.mxu0 0
    %1970 = vmatpush1.bf16.msra.mxu0 0
    %1971 = vmatprep.subr.bf16.mxu0 0
    %1972 = vmatpush1.bf16.msra.mxu0 0
    %1973 = vmatprep.subr.bf16.mxu0 0
    %1974 = vmatpush1.bf16.msra.mxu0 0
    %1975 = vmatprep.mubr.bf16.mxu0 0
    %1976 = vmatmul.mubr.bf16.gmra.mrb[0].mxu0 %v1938
    %v1977 = vpop.f32.mrb[0].mxu0
    %v1978 = vadd.f32 0.0, %v1977
    %v1979 = vpop.f32.mrb[0].mxu0
    %v1980 = vpop.f32.mrb[0].mxu0
    %v1981 = vadd.f32 0.0, %v1980
    %v1982 = vpop.f32.mrb[0].mxu0
    %1983 = vdwg.mxu0
    %v1984 = vadd.f32 %v1520, %v1978
    %v1985 = vadd.f32 %v1521, %v1981
    %v1986 = vadd.f32 %v122, %v1984
    %v1987 = vadd.f32 %v123, %v1985
    %v1988 = vld [vmem:[%s11] sm:$0x1]
    %v1989 = vld [vmem:[%s12] sm:$0x1]
    %v1990 = vsel %vm80, %v1986, 0.0
    %1991 = vadd.xlane.f32.xlu0 %v1990
    %v1992 = vpop.xlane.xlu0 %1991
    %v1993 = vsel %vm80, %v1987, 0.0
    %1994 = vadd.xlane.f32.xlu0 %v1993
    %v1995 = vpop.xlane.xlu0 %1994
    %v1996 = vmul.f32 %v1992, %v87
    %v1997 = vmul.f32 %v1995, %v87
    %v1998 = vsub.f32 %v1986, %v1996
    %v1999 = vsub.f32 %v1987, %v1997
    %v2000 = vmul.f32 %v1998, %v1998
    %v2001 = vmul.f32 %v1999, %v1999
    %v2002 = vsel %vm80, %v2000, 0.0
    %2003 = vadd.xlane.f32.xlu0 %v2002
    %v2004 = vpop.xlane.xlu0 %2003
    %v2005 = vsel %vm80, %v2001, 0.0
    %2006 = vadd.xlane.f32.xlu0 %v2005
    %v2007 = vpop.xlane.xlu0 %2006
    %v2008 = vmul.f32 %v2004, %v87
    %v2009 = vmul.f32 %v2007, %v87
    %v2010 = vadd.f32 %v2008, 1e-12
    %v2011 = vadd.f32 %v2009, 1e-12
    %v2012 = vrsqrt.pop %v2010
    %v2013 = vrsqrt.pop %v2011
    %v2014 = vmul.f32 %v1998, %v2012
    %v2015 = vmul.f32 %v1999, %v2013
    %v2017 = vlaneseq
    %v2018 = vshrl.u32 %v2017, 7
    %v2019 = vsub.s32 0, %v2018
    %v2020 = vrot.slane %v1988, %v2019
    %v2022 = vmul.f32 %v2020, %v2014
    %v2023 = vmul.f32 %v2020, %v2015
    %v2025 = vlaneseq
    %v2026 = vshrl.u32 %v2025, 7
    %v2027 = vsub.s32 0, %v2026
    %v2028 = vrot.slane %v1989, %v2027
    %v2030 = vadd.f32 %v2022, %v2028
    %v2031 = vadd.f32 %v2023, %v2028
    %v2032 = vld [vmem:[%s13] sm:$0xf]
    %v2033 = vld [vmem:[%s13 + $0x4] sm:$0xf]
    %v2034 = vld [vmem:[%s13 + $0x8] sm:$0xf]
    %v2035 = vld [vmem:[%s13 + $0xc] sm:$0xf]
    %v2036 = vpack.c.bf16 %v2031, %v2030
    %v2037 = vld [vmem:[%s14] sm:$0x1]
    %v2039 = vlaneseq
    %v2040 = vshrl.u32 %v2039, 7
    %v2041 = vsub.s32 0, %v2040
    %v2042 = vrot.slane %v2037, %v2041
    %v2048 = vunpack.c.l.b16 %v2032
    %v2049 = vunpack.c.l.b16 %v2033
    %v2050 = vunpack.c.l.b16 %v2034
    %v2051 = vunpack.c.l.b16 %v2035
    %v2052 = vpack.c.b16 %v2049, %v2048
    %v2053 = vpack.c.b16 %v2051, %v2050
    %v2057 = vsel %vm80, %v2036, 0
    %2059 = vmatprep.subr.bf16.mxu0 0
    %2060 = vmatpush1.bf16.msra.mxu0 %v2052
    %2061 = vmatprep.subr.bf16.mxu0 0
    %2062 = vmatpush1.bf16.msra.mxu0 %v2053
    %2063 = vmatprep.subr.bf16.mxu0 0
    %2064 = vmatpush1.bf16.msra.mxu0 0
    %2065 = vmatprep.subr.bf16.mxu0 0
    %2066 = vmatpush1.bf16.msra.mxu0 0
    %2067 = vmatprep.subr.bf16.mxu0 0
    %2068 = vmatpush1.bf16.msra.mxu0 0
    %2069 = vmatprep.subr.bf16.mxu0 0
    %2070 = vmatpush1.bf16.msra.mxu0 0
    %2071 = vmatprep.subr.bf16.mxu0 0
    %2072 = vmatpush1.bf16.msra.mxu0 0
    %2073 = vmatprep.subr.bf16.mxu0 0
    %2074 = vmatpush1.bf16.msra.mxu0 0
    %2075 = vmatprep.subr.bf16.mxu0 0
    %2076 = vmatpush1.bf16.msra.mxu0 0
    %2077 = vmatprep.subr.bf16.mxu0 0
    %2078 = vmatpush1.bf16.msra.mxu0 0
    %2079 = vmatprep.subr.bf16.mxu0 0
    %2080 = vmatpush1.bf16.msra.mxu0 0
    %2081 = vmatprep.subr.bf16.mxu0 0
    %2082 = vmatpush1.bf16.msra.mxu0 0
    %2083 = vmatprep.subr.bf16.mxu0 0
    %2084 = vmatpush1.bf16.msra.mxu0 0
    %2085 = vmatprep.subr.bf16.mxu0 0
    %2086 = vmatpush1.bf16.msra.mxu0 0
    %2087 = vmatprep.subr.bf16.mxu0 0
    %2088 = vmatpush1.bf16.msra.mxu0 0
    %2089 = vmatprep.subr.bf16.mxu0 0
    %2090 = vmatpush1.bf16.msra.mxu0 0
    %2091 = vmatprep.mubr.bf16.mxu0 0
    %2092 = vmatmul.mubr.bf16.gmra.mrb[0].mxu0 %v2057
    %v2093 = vpop.f32.mrb[0].mxu0
    %v2094 = vadd.f32 %v2042, %v2093
    %v2095 = vpop.f32.mrb[0].mxu0
    %v2096 = vpop.f32.mrb[0].mxu0
    %v2097 = vadd.f32 %v2042, %v2096
    %v2098 = vpop.f32.mrb[0].mxu0
    %2099 = vdwg.mxu0
    %v2100 = vmul.f32 %v2094, %v2094
    %v2101 = vmul.f32 %v2097, %v2097
    %v2102 = vmul.f32 %v2094, %v2100
    %v2103 = vmul.f32 %v2097, %v2101
    %v2104 = vmul.f32 %v2102, 0.044715
    %v2105 = vmul.f32 %v2103, 0.044715
    %v2106 = vadd.f32 %v2094, %v2104
    %v2107 = vadd.f32 %v2097, %v2105
    %v2108 = vmul.f32 %v2106, 0.7978846
    %v2109 = vmul.f32 %v2107, 0.7978846
    %v2110 = vtanh.pop %v2108
    %v2111 = vtanh.pop %v2109
    %v2112 = vadd.f32 %v2110, 1.0
    %v2113 = vadd.f32 %v2111, 1.0
    %v2114 = vmul.f32 %v2112, 0.5
    %v2115 = vmul.f32 %v2113, 0.5
    %v2116 = vmul.f32 %v2094, %v2114
    %v2117 = vmul.f32 %v2097, %v2115
    %v2118 = vld [vmem:[%s15] sm:$0xf]
    %v2119 = vld [vmem:[%s15 + $0x4] sm:$0xf]
    %v2120 = vld [vmem:[%s15 + $0x8] sm:$0xf]
    %v2121 = vld [vmem:[%s15 + $0xc] sm:$0xf]
    %v2122 = vld [vmem:[%s15 + $0x10] sm:$0xf]
    %v2123 = vld [vmem:[%s15 + $0x14] sm:$0xf]
    %v2124 = vld [vmem:[%s15 + $0x18] sm:$0xf]
    %v2125 = vld [vmem:[%s15 + $0x1c] sm:$0xf]
    %v2126 = vpack.c.bf16 %v2117, %v2116
    %v2127 = vld [vmem:[%s16] sm:$0x1]
    %v2129 = vlaneseq
    %v2130 = vshrl.u32 %v2129, 7
    %v2131 = vsub.s32 0, %v2130
    %v2132 = vrot.slane %v2127, %v2131
    %v2142 = vunpack.c.l.b16 %v2118
    %v2143 = vunpack.c.l.b16 %v2119
    %v2144 = vunpack.c.l.b16 %v2120
    %v2145 = vunpack.c.l.b16 %v2121
    %v2146 = vunpack.c.l.b16 %v2122
    %v2147 = vunpack.c.l.b16 %v2123
    %v2148 = vunpack.c.l.b16 %v2124
    %v2149 = vunpack.c.l.b16 %v2125
    %v2150 = vpack.c.b16 %v2143, %v2142
    %v2151 = vpack.c.b16 %v2145, %v2144
    %v2152 = vpack.c.b16 %v2147, %v2146
    %v2153 = vpack.c.b16 %v2149, %v2148
    %vm2158 = vcmask 523264
    %v2160 = vsel %vm2158, %v2126, 0
    %2162 = vmatprep.subr.bf16.mxu0 0
    %2163 = vmatpush1.bf16.msra.mxu0 %v2150
    %2164 = vmatprep.subr.bf16.mxu0 0
    %2165 = vmatpush1.bf16.msra.mxu0 %v2151
    %2166 = vmatprep.subr.bf16.mxu0 0
    %2167 = vmatpush1.bf16.msra.mxu0 %v2152
    %2168 = vmatprep.subr.bf16.mxu0 0
    %2169 = vmatpush1.bf16.msra.mxu0 %v2153
    %2170 = vmatprep.subr.bf16.mxu0 0
    %2171 = vmatpush1.bf16.msra.mxu0 0
    %2172 = vmatprep.subr.bf16.mxu0 0
    %2173 = vmatpush1.bf16.msra.mxu0 0
    %2174 = vmatprep.subr.bf16.mxu0 0
    %2175 = vmatpush1.bf16.msra.mxu0 0
    %2176 = vmatprep.subr.bf16.mxu0 0
    %2177 = vmatpush1.bf16.msra.mxu0 0
    %2178 = vmatprep.subr.bf16.mxu0 0
    %2179 = vmatpush1.bf16.msra.mxu0 0
    %2180 = vmatprep.subr.bf16.mxu0 0
    %2181 = vmatpush1.bf16.msra.mxu0 0
    %2182 = vmatprep.subr.bf16.mxu0 0
    %2183 = vmatpush1.bf16.msra.mxu0 0
    %2184 = vmatprep.subr.bf16.mxu0 0
    %2185 = vmatpush1.bf16.msra.mxu0 0
    %2186 = vmatprep.subr.bf16.mxu0 0
    %2187 = vmatpush1.bf16.msra.mxu0 0
    %2188 = vmatprep.subr.bf16.mxu0 0
    %2189 = vmatpush1.bf16.msra.mxu0 0
    %2190 = vmatprep.subr.bf16.mxu0 0
    %2191 = vmatpush1.bf16.msra.mxu0 0
    %2192 = vmatprep.subr.bf16.mxu0 0
    %2193 = vmatpush1.bf16.msra.mxu0 0
    %2194 = vmatprep.mubr.bf16.mxu0 0
    %2195 = vmatmul.mubr.bf16.gmra.mrb[0].mxu0 %v2160
    %v2196 = vpop.f32.mrb[0].mxu0
    %v2197 = vadd.f32 %v2132, %v2196
    %v2198 = vpop.f32.mrb[0].mxu0
    %v2199 = vpop.f32.mrb[0].mxu0
    %v2200 = vadd.f32 %v2132, %v2199
    %v2201 = vpop.f32.mrb[0].mxu0
    %2202 = vdwg.mxu0
    %v2203 = vadd.f32 %v2030, %v2197
    %v2204 = vadd.f32 %v2031, %v2200
    %v2205 = vld [vmem:[%s17] sm:$0x1]
    %v2206 = vld [vmem:[%s18] sm:$0x1]
    %v2207 = vsel %vm80, %v2203, 0.0
    %2208 = vadd.xlane.f32.xlu0 %v2207
    %v2209 = vpop.xlane.xlu0 %2208
    %v2210 = vsel %vm80, %v2204, 0.0
    %2211 = vadd.xlane.f32.xlu0 %v2210
    %v2212 = vpop.xlane.xlu0 %2211
    %v2213 = vmul.f32 %v2209, %v87
    %v2214 = vmul.f32 %v2212, %v87
    %v2215 = vsub.f32 %v2203, %v2213
    %v2216 = vsub.f32 %v2204, %v2214
    %v2217 = vmul.f32 %v2215, %v2215
    %v2218 = vmul.f32 %v2216, %v2216
    %v2219 = vsel %vm80, %v2217, 0.0
    %2220 = vadd.xlane.f32.xlu0 %v2219
    %v2221 = vpop.xlane.xlu0 %2220
    %v2222 = vsel %vm80, %v2218, 0.0
    %2223 = vadd.xlane.f32.xlu0 %v2222
    %v2224 = vpop.xlane.xlu0 %2223
    %v2225 = vmul.f32 %v2221, %v87
    %v2226 = vmul.f32 %v2224, %v87
    %v2227 = vadd.f32 %v2225, 1e-12
    %v2228 = vadd.f32 %v2226, 1e-12
    %v2229 = vrsqrt.pop %v2227
    %v2230 = vrsqrt.pop %v2228
    %v2231 = vmul.f32 %v2215, %v2229
    %v2232 = vmul.f32 %v2216, %v2230
    %v2234 = vlaneseq
    %v2235 = vshrl.u32 %v2234, 7
    %v2236 = vsub.s32 0, %v2235
    %v2237 = vrot.slane %v2205, %v2236
    %v2239 = vmul.f32 %v2237, %v2231
    %v2240 = vmul.f32 %v2237, %v2232
    %v2242 = vlaneseq
    %v2243 = vshrl.u32 %v2242, 7
    %v2244 = vsub.s32 0, %v2243
    %v2245 = vrot.slane %v2206, %v2244
    %v2247 = vadd.f32 %v2239, %v2245
    %v2248 = vadd.f32 %v2240, %v2245
    %s2249 = scalar_lea.vmem %s10, 1
    %v2250 = vld [vmem:[%s2249] sm:$0x1]
    %s2251 = scalar_lea.vmem %s3, 64
    %v2252 = vld [vmem:[%s2251] sm:$0xf]
    %v2253 = vld [vmem:[%s2251 + $0x4] sm:$0xf]
    %v2254 = vld [vmem:[%s2251 + $0x8] sm:$0xf]
    %v2255 = vld [vmem:[%s2251 + $0xc] sm:$0xf]
    %v2256 = vpack.c.bf16 %v2248, %v2247
    %s2257 = scalar_lea.vmem %s4, 4
    %v2258 = vld [vmem:[%s2257] sm:$0x1]
    %v2260 = vlaneseq
    %v2261 = vshrl.u32 %v2260, 7
    %v2262 = vsub.s32 0, %v2261
    %v2263 = vrot.slane %v2258, %v2262
    %v2269 = vunpack.c.l.b16 %v2252
    %v2270 = vunpack.c.l.b16 %v2253
    %v2271 = vunpack.c.l.b16 %v2254
    %v2272 = vunpack.c.l.b16 %v2255
    %v2273 = vpack.c.b16 %v2270, %v2269
    %v2274 = vpack.c.b16 %v2272, %v2271
    %v2278 = vsel %vm80, %v2256, 0
    %2280 = vmatprep.subr.bf16.mxu0 0
    %2281 = vmatpush1.bf16.msra.mxu0 %v2273
    %2282 = vmatprep.subr.bf16.mxu0 0
    %2283 = vmatpush1.bf16.msra.mxu0 %v2274
    %2284 = vmatprep.subr.bf16.mxu0 0
    %2285 = vmatpush1.bf16.msra.mxu0 0
    %2286 = vmatprep.subr.bf16.mxu0 0
    %2287 = vmatpush1.bf16.msra.mxu0 0
    %2288 = vmatprep.subr.bf16.mxu0 0
    %2289 = vmatpush1.bf16.msra.mxu0 0
    %2290 = vmatprep.subr.bf16.mxu0 0
    %2291 = vmatpush1.bf16.msra.mxu0 0
    %2292 = vmatprep.subr.bf16.mxu0 0
    %2293 = vmatpush1.bf16.msra.mxu0 0
    %2294 = vmatprep.subr.bf16.mxu0 0
    %2295 = vmatpush1.bf16.msra.mxu0 0
    %2296 = vmatprep.subr.bf16.mxu0 0
    %2297 = vmatpush1.bf16.msra.mxu0 0
    %2298 = vmatprep.subr.bf16.mxu0 0
    %2299 = vmatpush1.bf16.msra.mxu0 0
    %2300 = vmatprep.subr.bf16.mxu0 0
    %2301 = vmatpush1.bf16.msra.mxu0 0
    %2302 = vmatprep.subr.bf16.mxu0 0
    %2303 = vmatpush1.bf16.msra.mxu0 0
    %2304 = vmatprep.subr.bf16.mxu0 0
    %2305 = vmatpush1.bf16.msra.mxu0 0
    %2306 = vmatprep.subr.bf16.mxu0 0
    %2307 = vmatpush1.bf16.msra.mxu0 0
    %2308 = vmatprep.subr.bf16.mxu0 0
    %2309 = vmatpush1.bf16.msra.mxu0 0
    %2310 = vmatprep.subr.bf16.mxu0 0
    %2311 = vmatpush1.bf16.msra.mxu0 0
    %2312 = vmatprep.mubr.bf16.mxu0 0
    %2313 = vmatmul.mubr.bf16.gmra.mrb[0].mxu0 %v2278
    %v2314 = vpop.f32.mrb[0].mxu0
    %v2315 = vadd.f32 %v2263, %v2314
    %v2316 = vpop.f32.mrb[0].mxu0
    %v2317 = vpop.f32.mrb[0].mxu0
    %v2318 = vadd.f32 %v2263, %v2317
    %v2319 = vpop.f32.mrb[0].mxu0
    %2320 = vdwg.mxu0
    %s2321 = scalar_lea.vmem %s5, 64
    %v2322 = vld [vmem:[%s2321] sm:$0xf]
    %v2323 = vld [vmem:[%s2321 + $0x4] sm:$0xf]
    %v2324 = vld [vmem:[%s2321 + $0x8] sm:$0xf]
    %v2325 = vld [vmem:[%s2321 + $0xc] sm:$0xf]
    %s2326 = scalar_lea.vmem %s6, 4
    %v2327 = vld [vmem:[%s2326] sm:$0x1]
    %v2329 = vlaneseq
    %v2330 = vshrl.u32 %v2329, 7
    %v2331 = vsub.s32 0, %v2330
    %v2332 = vrot.slane %v2327, %v2331
    %v2338 = vunpack.c.l.b16 %v2322
    %v2339 = vunpack.c.l.b16 %v2323
    %v2340 = vunpack.c.l.b16 %v2324
    %v2341 = vunpack.c.l.b16 %v2325
    %v2342 = vpack.c.b16 %v2339, %v2338
    %v2343 = vpack.c.b16 %v2341, %v2340
    %2346 = vmatprep.subr.bf16.mxu0 0
    %2347 = vmatpush1.bf16.msra.mxu0 %v2342
    %2348 = vmatprep.subr.bf16.mxu0 0
    %2349 = vmatpush1.bf16.msra.mxu0 %v2343
    %2350 = vmatprep.subr.bf16.mxu0 0
    %2351 = vmatpush1.bf16.msra.mxu0 0
    %2352 = vmatprep.subr.bf16.mxu0 0
    %2353 = vmatpush1.bf16.msra.mxu0 0
    %2354 = vmatprep.subr.bf16.mxu0 0
    %2355 = vmatpush1.bf16.msra.mxu0 0
    %2356 = vmatprep.subr.bf16.mxu0 0
    %2357 = vmatpush1.bf16.msra.mxu0 0
    %2358 = vmatprep.subr.bf16.mxu0 0
    %2359 = vmatpush1.bf16.msra.mxu0 0
    %2360 = vmatprep.subr.bf16.mxu0 0
    %2361 = vmatpush1.bf16.msra.mxu0 0
    %2362 = vmatprep.subr.bf16.mxu0 0
    %2363 = vmatpush1.bf16.msra.mxu0 0
    %2364 = vmatprep.subr.bf16.mxu0 0
    %2365 = vmatpush1.bf16.msra.mxu0 0
    %2366 = vmatprep.subr.bf16.mxu0 0
    %2367 = vmatpush1.bf16.msra.mxu0 0
    %2368 = vmatprep.subr.bf16.mxu0 0
    %2369 = vmatpush1.bf16.msra.mxu0 0
    %2370 = vmatprep.subr.bf16.mxu0 0
    %2371 = vmatpush1.bf16.msra.mxu0 0
    %2372 = vmatprep.subr.bf16.mxu0 0
    %2373 = vmatpush1.bf16.msra.mxu0 0
    %2374 = vmatprep.subr.bf16.mxu0 0
    %2375 = vmatpush1.bf16.msra.mxu0 0
    %2376 = vmatprep.subr.bf16.mxu0 0
    %2377 = vmatpush1.bf16.msra.mxu0 0
    %2378 = vmatprep.mubr.bf16.mxu0 0
    %2379 = vmatmul.mubr.bf16.gmra.mrb[0].mxu0 %v2278
    %v2380 = vpop.f32.mrb[0].mxu0
    %v2381 = vadd.f32 %v2332, %v2380
    %v2382 = vpop.f32.mrb[0].mxu0
    %v2383 = vpop.f32.mrb[0].mxu0
    %v2384 = vadd.f32 %v2332, %v2383
    %v2385 = vpop.f32.mrb[0].mxu0
    %2386 = vdwg.mxu0
    %s2387 = scalar_lea.vmem %s7, 64
    %v2388 = vld [vmem:[%s2387] sm:$0xf]
    %v2389 = vld [vmem:[%s2387 + $0x4] sm:$0xf]
    %v2390 = vld [vmem:[%s2387 + $0x8] sm:$0xf]
    %v2391 = vld [vmem:[%s2387 + $0xc] sm:$0xf]
    %s2392 = scalar_lea.vmem %s8, 4
    %v2393 = vld [vmem:[%s2392] sm:$0x1]
    %v2395 = vlaneseq
    %v2396 = vshrl.u32 %v2395, 7
    %v2397 = vsub.s32 0, %v2396
    %v2398 = vrot.slane %v2393, %v2397
    %v2404 = vunpack.c.l.b16 %v2388
    %v2405 = vunpack.c.l.b16 %v2389
    %v2406 = vunpack.c.l.b16 %v2390
    %v2407 = vunpack.c.l.b16 %v2391
    %v2408 = vpack.c.b16 %v2405, %v2404
    %v2409 = vpack.c.b16 %v2407, %v2406
    %2412 = vmatprep.subr.bf16.mxu0 0
    %2413 = vmatpush1.bf16.msra.mxu0 %v2408
    %2414 = vmatprep.subr.bf16.mxu0 0
    %2415 = vmatpush1.bf16.msra.mxu0 %v2409
    %2416 = vmatprep.subr.bf16.mxu0 0
    %2417 = vmatpush1.bf16.msra.mxu0 0
    %2418 = vmatprep.subr.bf16.mxu0 0
    %2419 = vmatpush1.bf16.msra.mxu0 0
    %2420 = vmatprep.subr.bf16.mxu0 0
    %2421 = vmatpush1.bf16.msra.mxu0 0
    %2422 = vmatprep.subr.bf16.mxu0 0
    %2423 = vmatpush1.bf16.msra.mxu0 0
    %2424 = vmatprep.subr.bf16.mxu0 0
    %2425 = vmatpush1.bf16.msra.mxu0 0
    %2426 = vmatprep.subr.bf16.mxu0 0
    %2427 = vmatpush1.bf16.msra.mxu0 0
    %2428 = vmatprep.subr.bf16.mxu0 0
    %2429 = vmatpush1.bf16.msra.mxu0 0
    %2430 = vmatprep.subr.bf16.mxu0 0
    %2431 = vmatpush1.bf16.msra.mxu0 0
    %2432 = vmatprep.subr.bf16.mxu0 0
    %2433 = vmatpush1.bf16.msra.mxu0 0
    %2434 = vmatprep.subr.bf16.mxu0 0
    %2435 = vmatpush1.bf16.msra.mxu0 0
    %2436 = vmatprep.subr.bf16.mxu0 0
    %2437 = vmatpush1.bf16.msra.mxu0 0
    %2438 = vmatprep.subr.bf16.mxu0 0
    %2439 = vmatpush1.bf16.msra.mxu0 0
    %2440 = vmatprep.subr.bf16.mxu0 0
    %2441 = vmatpush1.bf16.msra.mxu0 0
    %2442 = vmatprep.subr.bf16.mxu0 0
    %2443 = vmatpush1.bf16.msra.mxu0 0
    %2444 = vmatprep.mubr.bf16.mxu0 0
    %2445 = vmatmul.mubr.bf16.gmra.mrb[0].mxu0 %v2278
    %v2446 = vpop.f32.mrb[0].mxu0
    %v2447 = vadd.f32 %v2398, %v2446
    %v2448 = vpop.f32.mrb[0].mxu0
    %v2449 = vpop.f32.mrb[0].mxu0
    %v2450 = vadd.f32 %v2398, %v2449
    %v2451 = vpop.f32.mrb[0].mxu0
    %2452 = vdwg.mxu0
    %v2453 = vpack.c.bf16 %v2315, %v2315
    %v2454 = vpack.c.bf16 %v2318, %v2318
    %v2455 = vpack.c.bf16 %v2381, %v2381
    %v2456 = vpack.c.bf16 %v2384, %v2384
    %v2458 = vsel %vm325, %v2453, 0
    %v2461 = vsel %vm325, %v2455, 0
    %2463 = vmatprep.subr.bf16.mxu0 0
    %2464 = vmatpush1.bf16.xpose.msra.mxu0 %v2461
    %2465 = vmatprep.subr.bf16.mxu0 0
    %2466 = vmatpush1.bf16.xpose.msra.mxu0 0
    %2467 = vmatprep.subr.bf16.mxu0 0
    %2468 = vmatpush1.bf16.xpose.msra.mxu0 0
    %2469 = vmatprep.subr.bf16.mxu0 0
    %2470 = vmatpush1.bf16.xpose.msra.mxu0 0
    %2471 = vmatprep.subr.bf16.mxu0 0
    %2472 = vmatpush1.bf16.xpose.msra.mxu0 0
    %2473 = vmatprep.subr.bf16.mxu0 0
    %2474 = vmatpush1.bf16.xpose.msra.mxu0 0
    %2475 = vmatprep.subr.bf16.mxu0 0
    %2476 = vmatpush1.bf16.xpose.msra.mxu0 0
    %2477 = vmatprep.subr.bf16.mxu0 0
    %2478 = vmatpush1.bf16.xpose.msra.mxu0 0
    %2479 = vmatprep.subr.bf16.mxu0 0
    %2480 = vmatpush1.bf16.xpose.msra.mxu0 0
    %2481 = vmatprep.subr.bf16.mxu0 0
    %2482 = vmatpush1.bf16.xpose.msra.mxu0 0
    %2483 = vmatprep.subr.bf16.mxu0 0
    %2484 = vmatpush1.bf16.xpose.msra.mxu0 0
    %2485 = vmatprep.subr.bf16.mxu0 0
    %2486 = vmatpush1.bf16.xpose.msra.mxu0 0
    %2487 = vmatprep.subr.bf16.mxu0 0
    %2488 = vmatpush1.bf16.xpose.msra.mxu0 0
    %2489 = vmatprep.subr.bf16.mxu0 0
    %2490 = vmatpush1.bf16.xpose.msra.mxu0 0
    %2491 = vmatprep.subr.bf16.mxu0 0
    %2492 = vmatpush1.bf16.xpose.msra.mxu0 0
    %2493 = vmatprep.subr.bf16.mxu0 0
    %2494 = vmatpush1.bf16.xpose.msra.mxu0 0
    %2495 = vmatprep.mubr.bf16.mxu0 0
    %2496 = vmatmul.mubr.bf16.gmra.mrb[0].mxu0 %v2458
    %v2497 = vpop.f32.mrb[0].mxu0
    %v2498 = vadd.f32 0.0, %v2497
    %v2499 = vpop.f32.mrb[0].mxu0
    %v2500 = vpop.f32.mrb[0].mxu0
    %v2501 = vpop.f32.mrb[0].mxu0
    %2502 = vdwg.mxu0
    %v2504 = vsel %vm325, %v2454, 0
    %v2507 = vsel %vm325, %v2456, 0
    %2509 = vmatprep.subr.bf16.mxu0 0
    %2510 = vmatpush1.bf16.xpose.msra.mxu0 %v2507
    %2511 = vmatprep.subr.bf16.mxu0 0
    %2512 = vmatpush1.bf16.xpose.msra.mxu0 0
    %2513 = vmatprep.subr.bf16.mxu0 0
    %2514 = vmatpush1.bf16.xpose.msra.mxu0 0
    %2515 = vmatprep.subr.bf16.mxu0 0
    %2516 = vmatpush1.bf16.xpose.msra.mxu0 0
    %2517 = vmatprep.subr.bf16.mxu0 0
    %2518 = vmatpush1.bf16.xpose.msra.mxu0 0
    %2519 = vmatprep.subr.bf16.mxu0 0
    %2520 = vmatpush1.bf16.xpose.msra.mxu0 0
    %2521 = vmatprep.subr.bf16.mxu0 0
    %2522 = vmatpush1.bf16.xpose.msra.mxu0 0
    %2523 = vmatprep.subr.bf16.mxu0 0
    %2524 = vmatpush1.bf16.xpose.msra.mxu0 0
    %2525 = vmatprep.subr.bf16.mxu0 0
    %2526 = vmatpush1.bf16.xpose.msra.mxu0 0
    %2527 = vmatprep.subr.bf16.mxu0 0
    %2528 = vmatpush1.bf16.xpose.msra.mxu0 0
    %2529 = vmatprep.subr.bf16.mxu0 0
    %2530 = vmatpush1.bf16.xpose.msra.mxu0 0
    %2531 = vmatprep.subr.bf16.mxu0 0
    %2532 = vmatpush1.bf16.xpose.msra.mxu0 0
    %2533 = vmatprep.subr.bf16.mxu0 0
    %2534 = vmatpush1.bf16.xpose.msra.mxu0 0
    %2535 = vmatprep.subr.bf16.mxu0 0
    %2536 = vmatpush1.bf16.xpose.msra.mxu0 0
    %2537 = vmatprep.subr.bf16.mxu0 0
    %2538 = vmatpush1.bf16.xpose.msra.mxu0 0
    %2539 = vmatprep.subr.bf16.mxu0 0
    %2540 = vmatpush1.bf16.xpose.msra.mxu0 0
    %2541 = vmatprep.mubr.bf16.mxu0 0
    %2542 = vmatmul.mubr.bf16.gmra.mrb[0].mxu0 %v2504
    %v2543 = vpop.f32.mrb[0].mxu0
    %v2544 = vadd.f32 0.0, %v2543
    %v2545 = vpop.f32.mrb[0].mxu0
    %v2546 = vpop.f32.mrb[0].mxu0
    %v2547 = vpop.f32.mrb[0].mxu0
    %2548 = vdwg.mxu0
    %v2549 = vsel %vm325, %v2498, -inf
    %2550 = vmax.xlane.f32.xlu0 %v2549
    %v2551 = vpop.xlane.xlu0 %2550
    %v2552 = vsel %vm325, %v2544, -inf
    %2553 = vmax.xlane.f32.xlu0 %v2552
    %v2554 = vpop.xlane.xlu0 %2553
    %v2555 = vsub.f32 %v2498, %v2551
    %v2556 = vsub.f32 %v2544, %v2554
    %v2557 = vmul.f32 %v2555, 1.442695
    %v2558 = vpow.pop %v2557
    %v2559 = vmul.f32 %v2556, 1.442695
    %v2560 = vpow.pop %v2559
    %v2561 = vsel %vm325, %v2558, 0.0
    %2562 = vadd.xlane.f32.xlu0 %v2561
    %v2563 = vpop.xlane.xlu0 %2562
    %v2564 = vsel %vm325, %v2560, 0.0
    %2565 = vadd.xlane.f32.xlu0 %v2564
    %v2566 = vpop.xlane.xlu0 %2565
    %v2567 = vrcp.pop %v2563
    %v2568 = vrcp.pop %v2566
    %v2569 = vmul.f32 %v2558, %v2567
    %v2570 = vmul.f32 %v2560, %v2568
    %v2571 = vpack.c.bf16 %v2569, %v2569
    %v2572 = vpack.c.bf16 %v2570, %v2570
    %v2573 = vpack.c.bf16 %v2447, %v2447
    %v2574 = vpack.c.bf16 %v2450, %v2450
    %v2576 = vsel %vm325, %v2571, 0
    %v2579 = vsel %vm447, %v2573, 0
    %2581 = vmatprep.subr.bf16.mxu0 0
    %2582 = vmatpush1.bf16.msra.mxu0 %v2579
    %2583 = vmatprep.subr.bf16.mxu0 0
    %2584 = vmatpush1.bf16.msra.mxu0 0
    %2585 = vmatprep.subr.bf16.mxu0 0
    %2586 = vmatpush1.bf16.msra.mxu0 0
    %2587 = vmatprep.subr.bf16.mxu0 0
    %2588 = vmatpush1.bf16.msra.mxu0 0
    %2589 = vmatprep.subr.bf16.mxu0 0
    %2590 = vmatpush1.bf16.msra.mxu0 0
    %2591 = vmatprep.subr.bf16.mxu0 0
    %2592 = vmatpush1.bf16.msra.mxu0 0
    %2593 = vmatprep.subr.bf16.mxu0 0
    %2594 = vmatpush1.bf16.msra.mxu0 0
    %2595 = vmatprep.subr.bf16.mxu0 0
    %2596 = vmatpush1.bf16.msra.mxu0 0
    %2597 = vmatprep.subr.bf16.mxu0 0
    %2598 = vmatpush1.bf16.msra.mxu0 0
    %2599 = vmatprep.subr.bf16.mxu0 0
    %2600 = vmatpush1.bf16.msra.mxu0 0
    %2601 = vmatprep.subr.bf16.mxu0 0
    %2602 = vmatpush1.bf16.msra.mxu0 0
    %2603 = vmatprep.subr.bf16.mxu0 0
    %2604 = vmatpush1.bf16.msra.mxu0 0
    %2605 = vmatprep.subr.bf16.mxu0 0
    %2606 = vmatpush1.bf16.msra.mxu0 0
    %2607 = vmatprep.subr.bf16.mxu0 0
    %2608 = vmatpush1.bf16.msra.mxu0 0
    %2609 = vmatprep.subr.bf16.mxu0 0
    %2610 = vmatpush1.bf16.msra.mxu0 0
    %2611 = vmatprep.subr.bf16.mxu0 0
    %2612 = vmatpush1.bf16.msra.mxu0 0
    %2613 = vmatprep.mubr.bf16.mxu0 0
    %2614 = vmatmul.mubr.bf16.gmra.mrb[0].mxu0 %v2576
    %v2615 = vpop.f32.mrb[0].mxu0
    %v2616 = vadd.f32 0.0, %v2615
    %v2617 = vpop.f32.mrb[0].mxu0
    %v2618 = vpop.f32.mrb[0].mxu0
    %v2619 = vpop.f32.mrb[0].mxu0
    %2620 = vdwg.mxu0
    %v2622 = vsel %vm325, %v2572, 0
    %v2625 = vsel %vm447, %v2574, 0
    %2627 = vmatprep.subr.bf16.mxu0 0
    %2628 = vmatpush1.bf16.msra.mxu0 %v2625
    %2629 = vmatprep.subr.bf16.mxu0 0
    %2630 = vmatpush1.bf16.msra.mxu0 0
    %2631 = vmatprep.subr.bf16.mxu0 0
    %2632 = vmatpush1.bf16.msra.mxu0 0
    %2633 = vmatprep.subr.bf16.mxu0 0
    %2634 = vmatpush1.bf16.msra.mxu0 0
    %2635 = vmatprep.subr.bf16.mxu0 0
    %2636 = vmatpush1.bf16.msra.mxu0 0
    %2637 = vmatprep.subr.bf16.mxu0 0
    %2638 = vmatpush1.bf16.msra.mxu0 0
    %2639 = vmatprep.subr.bf16.mxu0 0
    %2640 = vmatpush1.bf16.msra.mxu0 0
    %2641 = vmatprep.subr.bf16.mxu0 0
    %2642 = vmatpush1.bf16.msra.mxu0 0
    %2643 = vmatprep.subr.bf16.mxu0 0
    %2644 = vmatpush1.bf16.msra.mxu0 0
    %2645 = vmatprep.subr.bf16.mxu0 0
    %2646 = vmatpush1.bf16.msra.mxu0 0
    %2647 = vmatprep.subr.bf16.mxu0 0
    %2648 = vmatpush1.bf16.msra.mxu0 0
    %2649 = vmatprep.subr.bf16.mxu0 0
    %2650 = vmatpush1.bf16.msra.mxu0 0
    %2651 = vmatprep.subr.bf16.mxu0 0
    %2652 = vmatpush1.bf16.msra.mxu0 0
    %2653 = vmatprep.subr.bf16.mxu0 0
    %2654 = vmatpush1.bf16.msra.mxu0 0
    %2655 = vmatprep.subr.bf16.mxu0 0
    %2656 = vmatpush1.bf16.msra.mxu0 0
    %2657 = vmatprep.subr.bf16.mxu0 0
    %2658 = vmatpush1.bf16.msra.mxu0 0
    %2659 = vmatprep.mubr.bf16.mxu0 0
    %2660 = vmatmul.mubr.bf16.gmra.mrb[0].mxu0 %v2622
    %v2661 = vpop.f32.mrb[0].mxu0
    %v2662 = vadd.f32 0.0, %v2661
    %v2663 = vpop.f32.mrb[0].mxu0
    %v2664 = vpop.f32.mrb[0].mxu0
    %v2665 = vpop.f32.mrb[0].mxu0
    %2666 = vdwg.mxu0
    %s2667 = scalar_lea.vmem %s9, 16
    %v2668 = vld [vmem:[%s2667] sm:$0xf]
    %v2669 = vpack.c.bf16 %v2662, %v2616
    %v2671 = vsel %vm325, %v2669, 0
    %v2674 = vsel %vm447, %v2668, 0
    %2676 = vmatprep.subr.bf16.mxu0 0
    %2677 = vmatpush1.bf16.msra.mxu0 %v2674
    %2678 = vmatprep.subr.bf16.mxu0 0
    %2679 = vmatpush1.bf16.msra.mxu0 0
    %2680 = vmatprep.subr.bf16.mxu0 0
    %2681 = vmatpush1.bf16.msra.mxu0 0
    %2682 = vmatprep.subr.bf16.mxu0 0
    %2683 = vmatpush1.bf16.msra.mxu0 0
    %2684 = vmatprep.subr.bf16.mxu0 0
    %2685 = vmatpush1.bf16.msra.mxu0 0
    %2686 = vmatprep.subr.bf16.mxu0 0
    %2687 = vmatpush1.bf16.msra.mxu0 0
    %2688 = vmatprep.subr.bf16.mxu0 0
    %2689 = vmatpush1.bf16.msra.mxu0 0
    %2690 = vmatprep.subr.bf16.mxu0 0
    %2691 = vmatpush1.bf16.msra.mxu0 0
    %2692 = vmatprep.subr.bf16.mxu0 0
    %2693 = vmatpush1.bf16.msra.mxu0 0
    %2694 = vmatprep.subr.bf16.mxu0 0
    %2695 = vmatpush1.bf16.msra.mxu0 0
    %2696 = vmatprep.subr.bf16.mxu0 0
    %2697 = vmatpush1.bf16.msra.mxu0 0
    %2698 = vmatprep.subr.bf16.mxu0 0
    %2699 = vmatpush1.bf16.msra.mxu0 0
    %2700 = vmatprep.subr.bf16.mxu0 0
    %2701 = vmatpush1.bf16.msra.mxu0 0
    %2702 = vmatprep.subr.bf16.mxu0 0
    %2703 = vmatpush1.bf16.msra.mxu0 0
    %2704 = vmatprep.subr.bf16.mxu0 0
    %2705 = vmatpush1.bf16.msra.mxu0 0
    %2706 = vmatprep.subr.bf16.mxu0 0
    %2707 = vmatpush1.bf16.msra.mxu0 0
    %2708 = vmatprep.mubr.bf16.mxu0 0
    %2709 = vmatmul.mubr.bf16.gmra.mrb[0].mxu0 %v2671
    %v2710 = vpop.f32.mrb[0].mxu0
    %v2711 = vadd.f32 0.0, %v2710
    %v2712 = vpop.f32.mrb[0].mxu0
    %v2713 = vpop.f32.mrb[0].mxu0
    %v2714 = vadd.f32 0.0, %v2713
    %v2715 = vpop.f32.mrb[0].mxu0
    %2716 = vdwg.mxu0
    %v2718 = vlaneseq
    %v2719 = vshrl.u32 %v2718, 7
    %v2720 = vsub.s32 0, %v2719
    %v2721 = vrot.slane %v2250, %v2720
    %v2723 = vadd.f32 %v2721, %v2711
    %v2724 = vadd.f32 %v2721, %v2714
    %s2725 = scalar_lea.vmem %s3, 80
    %v2726 = vld [vmem:[%s2725] sm:$0xf]
    %v2727 = vld [vmem:[%s2725 + $0x4] sm:$0xf]
    %v2728 = vld [vmem:[%s2725 + $0x8] sm:$0xf]
    %v2729 = vld [vmem:[%s2725 + $0xc] sm:$0xf]
    %s2730 = scalar_lea.vmem %s4, 5
    %v2731 = vld [vmem:[%s2730] sm:$0x1]
    %v2733 = vlaneseq
    %v2734 = vshrl.u32 %v2733, 7
    %v2735 = vsub.s32 0, %v2734
    %v2736 = vrot.slane %v2731, %v2735
    %v2742 = vunpack.c.l.b16 %v2726
    %v2743 = vunpack.c.l.b16 %v2727
    %v2744 = vunpack.c.l.b16 %v2728
    %v2745 = vunpack.c.l.b16 %v2729
    %v2746 = vpack.c.b16 %v2743, %v2742
    %v2747 = vpack.c.b16 %v2745, %v2744
    %2750 = vmatprep.subr.bf16.mxu0 0
    %2751 = vmatpush1.bf16.msra.mxu0 %v2746
    %2752 = vmatprep.subr.bf16.mxu0 0
    %2753 = vmatpush1.bf16.msra.mxu0 %v2747
    %2754 = vmatprep.subr.bf16.mxu0 0
    %2755 = vmatpush1.bf16.msra.mxu0 0
    %2756 = vmatprep.subr.bf16.mxu0 0
    %2757 = vmatpush1.bf16.msra.mxu0 0
    %2758 = vmatprep.subr.bf16.mxu0 0
    %2759 = vmatpush1.bf16.msra.mxu0 0
    %2760 = vmatprep.subr.bf16.mxu0 0
    %2761 = vmatpush1.bf16.msra.mxu0 0
    %2762 = vmatprep.subr.bf16.mxu0 0
    %2763 = vmatpush1.bf16.msra.mxu0 0
    %2764 = vmatprep.subr.bf16.mxu0 0
    %2765 = vmatpush1.bf16.msra.mxu0 0
    %2766 = vmatprep.subr.bf16.mxu0 0
    %2767 = vmatpush1.bf16.msra.mxu0 0
    %2768 = vmatprep.subr.bf16.mxu0 0
    %2769 = vmatpush1.bf16.msra.mxu0 0
    %2770 = vmatprep.subr.bf16.mxu0 0
    %2771 = vmatpush1.bf16.msra.mxu0 0
    %2772 = vmatprep.subr.bf16.mxu0 0
    %2773 = vmatpush1.bf16.msra.mxu0 0
    %2774 = vmatprep.subr.bf16.mxu0 0
    %2775 = vmatpush1.bf16.msra.mxu0 0
    %2776 = vmatprep.subr.bf16.mxu0 0
    %2777 = vmatpush1.bf16.msra.mxu0 0
    %2778 = vmatprep.subr.bf16.mxu0 0
    %2779 = vmatpush1.bf16.msra.mxu0 0
    %2780 = vmatprep.subr.bf16.mxu0 0
    %2781 = vmatpush1.bf16.msra.mxu0 0
    %2782 = vmatprep.mubr.bf16.mxu0 0
    %2783 = vmatmul.mubr.bf16.gmra.mrb[0].mxu0 %v2278
    %v2784 = vpop.f32.mrb[0].mxu0
    %v2785 = vadd.f32 %v2736, %v2784
    %v2786 = vpop.f32.mrb[0].mxu0
    %v2787 = vpop.f32.mrb[0].mxu0
    %v2788 = vadd.f32 %v2736, %v2787
    %v2789 = vpop.f32.mrb[0].mxu0
    %2790 = vdwg.mxu0
    %s2791 = scalar_lea.vmem %s5, 80
    %v2792 = vld [vmem:[%s2791] sm:$0xf]
    %v2793 = vld [vmem:[%s2791 + $0x4] sm:$0xf]
    %v2794 = vld [vmem:[%s2791 + $0x8] sm:$0xf]
    %v2795 = vld [vmem:[%s2791 + $0xc] sm:$0xf]
    %s2796 = scalar_lea.vmem %s6, 5
    %v2797 = vld [vmem:[%s2796] sm:$0x1]
    %v2799 = vlaneseq
    %v2800 = vshrl.u32 %v2799, 7
    %v2801 = vsub.s32 0, %v2800
    %v2802 = vrot.slane %v2797, %v2801
    %v2808 = vunpack.c.l.b16 %v2792
    %v2809 = vunpack.c.l.b16 %v2793
    %v2810 = vunpack.c.l.b16 %v2794
    %v2811 = vunpack.c.l.b16 %v2795
    %v2812 = vpack.c.b16 %v2809, %v2808
    %v2813 = vpack.c.b16 %v2811, %v2810
    %2816 = vmatprep.subr.bf16.mxu0 0
    %2817 = vmatpush1.bf16.msra.mxu0 %v2812
    %2818 = vmatprep.subr.bf16.mxu0 0
    %2819 = vmatpush1.bf16.msra.mxu0 %v2813
    %2820 = vmatprep.subr.bf16.mxu0 0
    %2821 = vmatpush1.bf16.msra.mxu0 0
    %2822 = vmatprep.subr.bf16.mxu0 0
    %2823 = vmatpush1.bf16.msra.mxu0 0
    %2824 = vmatprep.subr.bf16.mxu0 0
    %2825 = vmatpush1.bf16.msra.mxu0 0
    %2826 = vmatprep.subr.bf16.mxu0 0
    %2827 = vmatpush1.bf16.msra.mxu0 0
    %2828 = vmatprep.subr.bf16.mxu0 0
    %2829 = vmatpush1.bf16.msra.mxu0 0
    %2830 = vmatprep.subr.bf16.mxu0 0
    %2831 = vmatpush1.bf16.msra.mxu0 0
    %2832 = vmatprep.subr.bf16.mxu0 0
    %2833 = vmatpush1.bf16.msra.mxu0 0
    %2834 = vmatprep.subr.bf16.mxu0 0
    %2835 = vmatpush1.bf16.msra.mxu0 0
    %2836 = vmatprep.subr.bf16.mxu0 0
    %2837 = vmatpush1.bf16.msra.mxu0 0
    %2838 = vmatprep.subr.bf16.mxu0 0
    %2839 = vmatpush1.bf16.msra.mxu0 0
    %2840 = vmatprep.subr.bf16.mxu0 0
    %2841 = vmatpush1.bf16.msra.mxu0 0
    %2842 = vmatprep.subr.bf16.mxu0 0
    %2843 = vmatpush1.bf16.msra.mxu0 0
    %2844 = vmatprep.subr.bf16.mxu0 0
    %2845 = vmatpush1.bf16.msra.mxu0 0
    %2846 = vmatprep.subr.bf16.mxu0 0
    %2847 = vmatpush1.bf16.msra.mxu0 0
    %2848 = vmatprep.mubr.bf16.mxu0 0
    %2849 = vmatmul.mubr.bf16.gmra.mrb[0].mxu0 %v2278
    %v2850 = vpop.f32.mrb[0].mxu0
    %v2851 = vadd.f32 %v2802, %v2850
    %v2852 = vpop.f32.mrb[0].mxu0
    %v2853 = vpop.f32.mrb[0].mxu0
    %v2854 = vadd.f32 %v2802, %v2853
    %v2855 = vpop.f32.mrb[0].mxu0
    %2856 = vdwg.mxu0
    %s2857 = scalar_lea.vmem %s7, 80
    %v2858 = vld [vmem:[%s2857] sm:$0xf]
    %v2859 = vld [vmem:[%s2857 + $0x4] sm:$0xf]
    %v2860 = vld [vmem:[%s2857 + $0x8] sm:$0xf]
    %v2861 = vld [vmem:[%s2857 + $0xc] sm:$0xf]
    %s2862 = scalar_lea.vmem %s8, 5
    %v2863 = vld [vmem:[%s2862] sm:$0x1]
    %v2865 = vlaneseq
    %v2866 = vshrl.u32 %v2865, 7
    %v2867 = vsub.s32 0, %v2866
    %v2868 = vrot.slane %v2863, %v2867
    %v2874 = vunpack.c.l.b16 %v2858
    %v2875 = vunpack.c.l.b16 %v2859
    %v2876 = vunpack.c.l.b16 %v2860
    %v2877 = vunpack.c.l.b16 %v2861
    %v2878 = vpack.c.b16 %v2875, %v2874
    %v2879 = vpack.c.b16 %v2877, %v2876
    %2882 = vmatprep.subr.bf16.mxu0 0
    %2883 = vmatpush1.bf16.msra.mxu0 %v2878
    %2884 = vmatprep.subr.bf16.mxu0 0
    %2885 = vmatpush1.bf16.msra.mxu0 %v2879
    %2886 = vmatprep.subr.bf16.mxu0 0
    %2887 = vmatpush1.bf16.msra.mxu0 0
    %2888 = vmatprep.subr.bf16.mxu0 0
    %2889 = vmatpush1.bf16.msra.mxu0 0
    %2890 = vmatprep.subr.bf16.mxu0 0
    %2891 = vmatpush1.bf16.msra.mxu0 0
    %2892 = vmatprep.subr.bf16.mxu0 0
    %2893 = vmatpush1.bf16.msra.mxu0 0
    %2894 = vmatprep.subr.bf16.mxu0 0
    %2895 = vmatpush1.bf16.msra.mxu0 0
    %2896 = vmatprep.subr.bf16.mxu0 0
    %2897 = vmatpush1.bf16.msra.mxu0 0
    %2898 = vmatprep.subr.bf16.mxu0 0
    %2899 = vmatpush1.bf16.msra.mxu0 0
    %2900 = vmatprep.subr.bf16.mxu0 0
    %2901 = vmatpush1.bf16.msra.mxu0 0
    %2902 = vmatprep.subr.bf16.mxu0 0
    %2903 = vmatpush1.bf16.msra.mxu0 0
    %2904 = vmatprep.subr.bf16.mxu0 0
    %2905 = vmatpush1.bf16.msra.mxu0 0
    %2906 = vmatprep.subr.bf16.mxu0 0
    %2907 = vmatpush1.bf16.msra.mxu0 0
    %2908 = vmatprep.subr.bf16.mxu0 0
    %2909 = vmatpush1.bf16.msra.mxu0 0
    %2910 = vmatprep.subr.bf16.mxu0 0
    %2911 = vmatpush1.bf16.msra.mxu0 0
    %2912 = vmatprep.subr.bf16.mxu0 0
    %2913 = vmatpush1.bf16.msra.mxu0 0
    %2914 = vmatprep.mubr.bf16.mxu0 0
    %2915 = vmatmul.mubr.bf16.gmra.mrb[0].mxu0 %v2278
    %v2916 = vpop.f32.mrb[0].mxu0
    %v2917 = vadd.f32 %v2868, %v2916
    %v2918 = vpop.f32.mrb[0].mxu0
    %v2919 = vpop.f32.mrb[0].mxu0
    %v2920 = vadd.f32 %v2868, %v2919
    %v2921 = vpop.f32.mrb[0].mxu0
    %2922 = vdwg.mxu0
    %v2923 = vpack.c.bf16 %v2785, %v2785
    %v2924 = vpack.c.bf16 %v2788, %v2788
    %v2925 = vpack.c.bf16 %v2851, %v2851
    %v2926 = vpack.c.bf16 %v2854, %v2854
    %v2928 = vsel %vm325, %v2923, 0
    %v2931 = vsel %vm325, %v2925, 0
    %2933 = vmatprep.subr.bf16.mxu0 0
    %2934 = vmatpush1.bf16.xpose.msra.mxu0 %v2931
    %2935 = vmatprep.subr.bf16.mxu0 0
    %2936 = vmatpush1.bf16.xpose.msra.mxu0 0
    %2937 = vmatprep.subr.bf16.mxu0 0
    %2938 = vmatpush1.bf16.xpose.msra.mxu0 0
    %2939 = vmatprep.subr.bf16.mxu0 0
    %2940 = vmatpush1.bf16.xpose.msra.mxu0 0
    %2941 = vmatprep.subr.bf16.mxu0 0
    %2942 = vmatpush1.bf16.xpose.msra.mxu0 0
    %2943 = vmatprep.subr.bf16.mxu0 0
    %2944 = vmatpush1.bf16.xpose.msra.mxu0 0
    %2945 = vmatprep.subr.bf16.mxu0 0
    %2946 = vmatpush1.bf16.xpose.msra.mxu0 0
    %2947 = vmatprep.subr.bf16.mxu0 0
    %2948 = vmatpush1.bf16.xpose.msra.mxu0 0
    %2949 = vmatprep.subr.bf16.mxu0 0
    %2950 = vmatpush1.bf16.xpose.msra.mxu0 0
    %2951 = vmatprep.subr.bf16.mxu0 0
    %2952 = vmatpush1.bf16.xpose.msra.mxu0 0
    %2953 = vmatprep.subr.bf16.mxu0 0
    %2954 = vmatpush1.bf16.xpose.msra.mxu0 0
    %2955 = vmatprep.subr.bf16.mxu0 0
    %2956 = vmatpush1.bf16.xpose.msra.mxu0 0
    %2957 = vmatprep.subr.bf16.mxu0 0
    %2958 = vmatpush1.bf16.xpose.msra.mxu0 0
    %2959 = vmatprep.subr.bf16.mxu0 0
    %2960 = vmatpush1.bf16.xpose.msra.mxu0 0
    %2961 = vmatprep.subr.bf16.mxu0 0
    %2962 = vmatpush1.bf16.xpose.msra.mxu0 0
    %2963 = vmatprep.subr.bf16.mxu0 0
    %2964 = vmatpush1.bf16.xpose.msra.mxu0 0
    %2965 = vmatprep.mubr.bf16.mxu0 0
    %2966 = vmatmul.mubr.bf16.gmra.mrb[0].mxu0 %v2928
    %v2967 = vpop.f32.mrb[0].mxu0
    %v2968 = vadd.f32 0.0, %v2967
    %v2969 = vpop.f32.mrb[0].mxu0
    %v2970 = vpop.f32.mrb[0].mxu0
    %v2971 = vpop.f32.mrb[0].mxu0
    %2972 = vdwg.mxu0
    %v2974 = vsel %vm325, %v2924, 0
    %v2977 = vsel %vm325, %v2926, 0
    %2979 = vmatprep.subr.bf16.mxu0 0
    %2980 = vmatpush1.bf16.xpose.msra.mxu0 %v2977
    %2981 = vmatprep.subr.bf16.mxu0 0
    %2982 = vmatpush1.bf16.xpose.msra.mxu0 0
    %2983 = vmatprep.subr.bf16.mxu0 0
    %2984 = vmatpush1.bf16.xpose.msra.mxu0 0
    %2985 = vmatprep.subr.bf16.mxu0 0
    %2986 = vmatpush1.bf16.xpose.msra.mxu0 0
    %2987 = vmatprep.subr.bf16.mxu0 0
    %2988 = vmatpush1.bf16.xpose.msra.mxu0 0
    %2989 = vmatprep.subr.bf16.mxu0 0
    %2990 = vmatpush1.bf16.xpose.msra.mxu0 0
    %2991 = vmatprep.subr.bf16.mxu0 0
    %2992 = vmatpush1.bf16.xpose.msra.mxu0 0
    %2993 = vmatprep.subr.bf16.mxu0 0
    %2994 = vmatpush1.bf16.xpose.msra.mxu0 0
    %2995 = vmatprep.subr.bf16.mxu0 0
    %2996 = vmatpush1.bf16.xpose.msra.mxu0 0
    %2997 = vmatprep.subr.bf16.mxu0 0
    %2998 = vmatpush1.bf16.xpose.msra.mxu0 0
    %2999 = vmatprep.subr.bf16.mxu0 0
    %3000 = vmatpush1.bf16.xpose.msra.mxu0 0
    %3001 = vmatprep.subr.bf16.mxu0 0
    %3002 = vmatpush1.bf16.xpose.msra.mxu0 0
    %3003 = vmatprep.subr.bf16.mxu0 0
    %3004 = vmatpush1.bf16.xpose.msra.mxu0 0
    %3005 = vmatprep.subr.bf16.mxu0 0
    %3006 = vmatpush1.bf16.xpose.msra.mxu0 0
    %3007 = vmatprep.subr.bf16.mxu0 0
    %3008 = vmatpush1.bf16.xpose.msra.mxu0 0
    %3009 = vmatprep.subr.bf16.mxu0 0
    %3010 = vmatpush1.bf16.xpose.msra.mxu0 0
    %3011 = vmatprep.mubr.bf16.mxu0 0
    %3012 = vmatmul.mubr.bf16.gmra.mrb[0].mxu0 %v2974
    %v3013 = vpop.f32.mrb[0].mxu0
    %v3014 = vadd.f32 0.0, %v3013
    %v3015 = vpop.f32.mrb[0].mxu0
    %v3016 = vpop.f32.mrb[0].mxu0
    %v3017 = vpop.f32.mrb[0].mxu0
    %3018 = vdwg.mxu0
    %v3019 = vsel %vm325, %v2968, -inf
    %3020 = vmax.xlane.f32.xlu0 %v3019
    %v3021 = vpop.xlane.xlu0 %3020
    %v3022 = vsel %vm325, %v3014, -inf
    %3023 = vmax.xlane.f32.xlu0 %v3022
    %v3024 = vpop.xlane.xlu0 %3023
    %v3025 = vsub.f32 %v2968, %v3021
    %v3026 = vsub.f32 %v3014, %v3024
    %v3027 = vmul.f32 %v3025, 1.442695
    %v3028 = vpow.pop %v3027
    %v3029 = vmul.f32 %v3026, 1.442695
    %v3030 = vpow.pop %v3029
    %v3031 = vsel %vm325, %v3028, 0.0
    %3032 = vadd.xlane.f32.xlu0 %v3031
    %v3033 = vpop.xlane.xlu0 %3032
    %v3034 = vsel %vm325, %v3030, 0.0
    %3035 = vadd.xlane.f32.xlu0 %v3034
    %v3036 = vpop.xlane.xlu0 %3035
    %v3037 = vrcp.pop %v3033
    %v3038 = vrcp.pop %v3036
    %v3039 = vmul.f32 %v3028, %v3037
    %v3040 = vmul.f32 %v3030, %v3038
    %v3041 = vpack.c.bf16 %v3039, %v3039
    %v3042 = vpack.c.bf16 %v3040, %v3040
    %v3043 = vpack.c.bf16 %v2917, %v2917
    %v3044 = vpack.c.bf16 %v2920, %v2920
    %v3046 = vsel %vm325, %v3041, 0
    %v3049 = vsel %vm447, %v3043, 0
    %3051 = vmatprep.subr.bf16.mxu0 0
    %3052 = vmatpush1.bf16.msra.mxu0 %v3049
    %3053 = vmatprep.subr.bf16.mxu0 0
    %3054 = vmatpush1.bf16.msra.mxu0 0
    %3055 = vmatprep.subr.bf16.mxu0 0
    %3056 = vmatpush1.bf16.msra.mxu0 0
    %3057 = vmatprep.subr.bf16.mxu0 0
    %3058 = vmatpush1.bf16.msra.mxu0 0
    %3059 = vmatprep.subr.bf16.mxu0 0
    %3060 = vmatpush1.bf16.msra.mxu0 0
    %3061 = vmatprep.subr.bf16.mxu0 0
    %3062 = vmatpush1.bf16.msra.mxu0 0
    %3063 = vmatprep.subr.bf16.mxu0 0
    %3064 = vmatpush1.bf16.msra.mxu0 0
    %3065 = vmatprep.subr.bf16.mxu0 0
    %3066 = vmatpush1.bf16.msra.mxu0 0
    %3067 = vmatprep.subr.bf16.mxu0 0
    %3068 = vmatpush1.bf16.msra.mxu0 0
    %3069 = vmatprep.subr.bf16.mxu0 0
    %3070 = vmatpush1.bf16.msra.mxu0 0
    %3071 = vmatprep.subr.bf16.mxu0 0
    %3072 = vmatpush1.bf16.msra.mxu0 0
    %3073 = vmatprep.subr.bf16.mxu0 0
    %3074 = vmatpush1.bf16.msra.mxu0 0
    %3075 = vmatprep.subr.bf16.mxu0 0
    %3076 = vmatpush1.bf16.msra.mxu0 0
    %3077 = vmatprep.subr.bf16.mxu0 0
    %3078 = vmatpush1.bf16.msra.mxu0 0
    %3079 = vmatprep.subr.bf16.mxu0 0
    %3080 = vmatpush1.bf16.msra.mxu0 0
    %3081 = vmatprep.subr.bf16.mxu0 0
    %3082 = vmatpush1.bf16.msra.mxu0 0
    %3083 = vmatprep.mubr.bf16.mxu0 0
    %3084 = vmatmul.mubr.bf16.gmra.mrb[0].mxu0 %v3046
    %v3085 = vpop.f32.mrb[0].mxu0
    %v3086 = vadd.f32 0.0, %v3085
    %v3087 = vpop.f32.mrb[0].mxu0
    %v3088 = vpop.f32.mrb[0].mxu0
    %v3089 = vpop.f32.mrb[0].mxu0
    %3090 = vdwg.mxu0
    %v3092 = vsel %vm325, %v3042, 0
    %v3095 = vsel %vm447, %v3044, 0
    %3097 = vmatprep.subr.bf16.mxu0 0
    %3098 = vmatpush1.bf16.msra.mxu0 %v3095
    %3099 = vmatprep.subr.bf16.mxu0 0
    %3100 = vmatpush1.bf16.msra.mxu0 0
    %3101 = vmatprep.subr.bf16.mxu0 0
    %3102 = vmatpush1.bf16.msra.mxu0 0
    %3103 = vmatprep.subr.bf16.mxu0 0
    %3104 = vmatpush1.bf16.msra.mxu0 0
    %3105 = vmatprep.subr.bf16.mxu0 0
    %3106 = vmatpush1.bf16.msra.mxu0 0
    %3107 = vmatprep.subr.bf16.mxu0 0
    %3108 = vmatpush1.bf16.msra.mxu0 0
    %3109 = vmatprep.subr.bf16.mxu0 0
    %3110 = vmatpush1.bf16.msra.mxu0 0
    %3111 = vmatprep.subr.bf16.mxu0 0
    %3112 = vmatpush1.bf16.msra.mxu0 0
    %3113 = vmatprep.subr.bf16.mxu0 0
    %3114 = vmatpush1.bf16.msra.mxu0 0
    %3115 = vmatprep.subr.bf16.mxu0 0
    %3116 = vmatpush1.bf16.msra.mxu0 0
    %3117 = vmatprep.subr.bf16.mxu0 0
    %3118 = vmatpush1.bf16.msra.mxu0 0
    %3119 = vmatprep.subr.bf16.mxu0 0
    %3120 = vmatpush1.bf16.msra.mxu0 0
    %3121 = vmatprep.subr.bf16.mxu0 0
    %3122 = vmatpush1.bf16.msra.mxu0 0
    %3123 = vmatprep.subr.bf16.mxu0 0
    %3124 = vmatpush1.bf16.msra.mxu0 0
    %3125 = vmatprep.subr.bf16.mxu0 0
    %3126 = vmatpush1.bf16.msra.mxu0 0
    %3127 = vmatprep.subr.bf16.mxu0 0
    %3128 = vmatpush1.bf16.msra.mxu0 0
    %3129 = vmatprep.mubr.bf16.mxu0 0
    %3130 = vmatmul.mubr.bf16.gmra.mrb[0].mxu0 %v3092
    %v3131 = vpop.f32.mrb[0].mxu0
    %v3132 = vadd.f32 0.0, %v3131
    %v3133 = vpop.f32.mrb[0].mxu0
    %v3134 = vpop.f32.mrb[0].mxu0
    %v3135 = vpop.f32.mrb[0].mxu0
    %3136 = vdwg.mxu0
    %s3137 = scalar_lea.vmem %s9, 20
    %v3138 = vld [vmem:[%s3137] sm:$0xf]
    %v3139 = vpack.c.bf16 %v3132, %v3086
    %v3141 = vsel %vm325, %v3139, 0
    %v3144 = vsel %vm447, %v3138, 0
    %3146 = vmatprep.subr.bf16.mxu0 0
    %3147 = vmatpush1.bf16.msra.mxu0 %v3144
    %3148 = vmatprep.subr.bf16.mxu0 0
    %3149 = vmatpush1.bf16.msra.mxu0 0
    %3150 = vmatprep.subr.bf16.mxu0 0
    %3151 = vmatpush1.bf16.msra.mxu0 0
    %3152 = vmatprep.subr.bf16.mxu0 0
    %3153 = vmatpush1.bf16.msra.mxu0 0
    %3154 = vmatprep.subr.bf16.mxu0 0
    %3155 = vmatpush1.bf16.msra.mxu0 0
    %3156 = vmatprep.subr.bf16.mxu0 0
    %3157 = vmatpush1.bf16.msra.mxu0 0
    %3158 = vmatprep.subr.bf16.mxu0 0
    %3159 = vmatpush1.bf16.msra.mxu0 0
    %3160 = vmatprep.subr.bf16.mxu0 0
    %3161 = vmatpush1.bf16.msra.mxu0 0
    %3162 = vmatprep.subr.bf16.mxu0 0
    %3163 = vmatpush1.bf16.msra.mxu0 0
    %3164 = vmatprep.subr.bf16.mxu0 0
    %3165 = vmatpush1.bf16.msra.mxu0 0
    %3166 = vmatprep.subr.bf16.mxu0 0
    %3167 = vmatpush1.bf16.msra.mxu0 0
    %3168 = vmatprep.subr.bf16.mxu0 0
    %3169 = vmatpush1.bf16.msra.mxu0 0
    %3170 = vmatprep.subr.bf16.mxu0 0
    %3171 = vmatpush1.bf16.msra.mxu0 0
    %3172 = vmatprep.subr.bf16.mxu0 0
    %3173 = vmatpush1.bf16.msra.mxu0 0
    %3174 = vmatprep.subr.bf16.mxu0 0
    %3175 = vmatpush1.bf16.msra.mxu0 0
    %3176 = vmatprep.subr.bf16.mxu0 0
    %3177 = vmatpush1.bf16.msra.mxu0 0
    %3178 = vmatprep.mubr.bf16.mxu0 0
    %3179 = vmatmul.mubr.bf16.gmra.mrb[0].mxu0 %v3141
    %v3180 = vpop.f32.mrb[0].mxu0
    %v3181 = vadd.f32 0.0, %v3180
    %v3182 = vpop.f32.mrb[0].mxu0
    %v3183 = vpop.f32.mrb[0].mxu0
    %v3184 = vadd.f32 0.0, %v3183
    %v3185 = vpop.f32.mrb[0].mxu0
    %3186 = vdwg.mxu0
    %v3187 = vadd.f32 %v2723, %v3181
    %v3188 = vadd.f32 %v2724, %v3184
    %s3189 = scalar_lea.vmem %s3, 96
    %v3190 = vld [vmem:[%s3189] sm:$0xf]
    %v3191 = vld [vmem:[%s3189 + $0x4] sm:$0xf]
    %v3192 = vld [vmem:[%s3189 + $0x8] sm:$0xf]
    %v3193 = vld [vmem:[%s3189 + $0xc] sm:$0xf]
    %s3194 = scalar_lea.vmem %s4, 6
    %v3195 = vld [vmem:[%s3194] sm:$0x1]
    %v3197 = vlaneseq
    %v3198 = vshrl.u32 %v3197, 7
    %v3199 = vsub.s32 0, %v3198
    %v3200 = vrot.slane %v3195, %v3199
    %v3206 = vunpack.c.l.b16 %v3190
    %v3207 = vunpack.c.l.b16 %v3191
    %v3208 = vunpack.c.l.b16 %v3192
    %v3209 = vunpack.c.l.b16 %v3193
    %v3210 = vpack.c.b16 %v3207, %v3206
    %v3211 = vpack.c.b16 %v3209, %v3208
    %3214 = vmatprep.subr.bf16.mxu0 0
    %3215 = vmatpush1.bf16.msra.mxu0 %v3210
    %3216 = vmatprep.subr.bf16.mxu0 0
    %3217 = vmatpush1.bf16.msra.mxu0 %v3211
    %3218 = vmatprep.subr.bf16.mxu0 0
    %3219 = vmatpush1.bf16.msra.mxu0 0
    %3220 = vmatprep.subr.bf16.mxu0 0
    %3221 = vmatpush1.bf16.msra.mxu0 0
    %3222 = vmatprep.subr.bf16.mxu0 0
    %3223 = vmatpush1.bf16.msra.mxu0 0
    %3224 = vmatprep.subr.bf16.mxu0 0
    %3225 = vmatpush1.bf16.msra.mxu0 0
    %3226 = vmatprep.subr.bf16.mxu0 0
    %3227 = vmatpush1.bf16.msra.mxu0 0
    %3228 = vmatprep.subr.bf16.mxu0 0
    %3229 = vmatpush1.bf16.msra.mxu0 0
    %3230 = vmatprep.subr.bf16.mxu0 0
    %3231 = vmatpush1.bf16.msra.mxu0 0
    %3232 = vmatprep.subr.bf16.mxu0 0
    %3233 = vmatpush1.bf16.msra.mxu0 0
    %3234 = vmatprep.subr.bf16.mxu0 0
    %3235 = vmatpush1.bf16.msra.mxu0 0
    %3236 = vmatprep.subr.bf16.mxu0 0
    %3237 = vmatpush1.bf16.msra.mxu0 0
    %3238 = vmatprep.subr.bf16.mxu0 0
    %3239 = vmatpush1.bf16.msra.mxu0 0
    %3240 = vmatprep.subr.bf16.mxu0 0
    %3241 = vmatpush1.bf16.msra.mxu0 0
    %3242 = vmatprep.subr.bf16.mxu0 0
    %3243 = vmatpush1.bf16.msra.mxu0 0
    %3244 = vmatprep.subr.bf16.mxu0 0
    %3245 = vmatpush1.bf16.msra.mxu0 0
    %3246 = vmatprep.mubr.bf16.mxu0 0
    %3247 = vmatmul.mubr.bf16.gmra.mrb[0].mxu0 %v2278
    %v3248 = vpop.f32.mrb[0].mxu0
    %v3249 = vadd.f32 %v3200, %v3248
    %v3250 = vpop.f32.mrb[0].mxu0
    %v3251 = vpop.f32.mrb[0].mxu0
    %v3252 = vadd.f32 %v3200, %v3251
    %v3253 = vpop.f32.mrb[0].mxu0
    %3254 = vdwg.mxu0
    %s3255 = scalar_lea.vmem %s5, 96
    %v3256 = vld [vmem:[%s3255] sm:$0xf]
    %v3257 = vld [vmem:[%s3255 + $0x4] sm:$0xf]
    %v3258 = vld [vmem:[%s3255 + $0x8] sm:$0xf]
    %v3259 = vld [vmem:[%s3255 + $0xc] sm:$0xf]
    %s3260 = scalar_lea.vmem %s6, 6
    %v3261 = vld [vmem:[%s3260] sm:$0x1]
    %v3263 = vlaneseq
    %v3264 = vshrl.u32 %v3263, 7
    %v3265 = vsub.s32 0, %v3264
    %v3266 = vrot.slane %v3261, %v3265
    %v3272 = vunpack.c.l.b16 %v3256
    %v3273 = vunpack.c.l.b16 %v3257
    %v3274 = vunpack.c.l.b16 %v3258
    %v3275 = vunpack.c.l.b16 %v3259
    %v3276 = vpack.c.b16 %v3273, %v3272
    %v3277 = vpack.c.b16 %v3275, %v3274
    %3280 = vmatprep.subr.bf16.mxu0 0
    %3281 = vmatpush1.bf16.msra.mxu0 %v3276
    %3282 = vmatprep.subr.bf16.mxu0 0
    %3283 = vmatpush1.bf16.msra.mxu0 %v3277
    %3284 = vmatprep.subr.bf16.mxu0 0
    %3285 = vmatpush1.bf16.msra.mxu0 0
    %3286 = vmatprep.subr.bf16.mxu0 0
    %3287 = vmatpush1.bf16.msra.mxu0 0
    %3288 = vmatprep.subr.bf16.mxu0 0
    %3289 = vmatpush1.bf16.msra.mxu0 0
    %3290 = vmatprep.subr.bf16.mxu0 0
    %3291 = vmatpush1.bf16.msra.mxu0 0
    %3292 = vmatprep.subr.bf16.mxu0 0
    %3293 = vmatpush1.bf16.msra.mxu0 0
    %3294 = vmatprep.subr.bf16.mxu0 0
    %3295 = vmatpush1.bf16.msra.mxu0 0
    %3296 = vmatprep.subr.bf16.mxu0 0
    %3297 = vmatpush1.bf16.msra.mxu0 0
    %3298 = vmatprep.subr.bf16.mxu0 0
    %3299 = vmatpush1.bf16.msra.mxu0 0
    %3300 = vmatprep.subr.bf16.mxu0 0
    %3301 = vmatpush1.bf16.msra.mxu0 0
    %3302 = vmatprep.subr.bf16.mxu0 0
    %3303 = vmatpush1.bf16.msra.mxu0 0
    %3304 = vmatprep.subr.bf16.mxu0 0
    %3305 = vmatpush1.bf16.msra.mxu0 0
    %3306 = vmatprep.subr.bf16.mxu0 0
    %3307 = vmatpush1.bf16.msra.mxu0 0
    %3308 = vmatprep.subr.bf16.mxu0 0
    %3309 = vmatpush1.bf16.msra.mxu0 0
    %3310 = vmatprep.subr.bf16.mxu0 0
    %3311 = vmatpush1.bf16.msra.mxu0 0
    %3312 = vmatprep.mubr.bf16.mxu0 0
    %3313 = vmatmul.mubr.bf16.gmra.mrb[0].mxu0 %v2278
    %v3314 = vpop.f32.mrb[0].mxu0
    %v3315 = vadd.f32 %v3266, %v3314
    %v3316 = vpop.f32.mrb[0].mxu0
    %v3317 = vpop.f32.mrb[0].mxu0
    %v3318 = vadd.f32 %v3266, %v3317
    %v3319 = vpop.f32.mrb[0].mxu0
    %3320 = vdwg.mxu0
    %s3321 = scalar_lea.vmem %s7, 96
    %v3322 = vld [vmem:[%s3321] sm:$0xf]
    %v3323 = vld [vmem:[%s3321 + $0x4] sm:$0xf]
    %v3324 = vld [vmem:[%s3321 + $0x8] sm:$0xf]
    %v3325 = vld [vmem:[%s3321 + $0xc] sm:$0xf]
    %s3326 = scalar_lea.vmem %s8, 6
    %v3327 = vld [vmem:[%s3326] sm:$0x1]
    %v3329 = vlaneseq
    %v3330 = vshrl.u32 %v3329, 7
    %v3331 = vsub.s32 0, %v3330
    %v3332 = vrot.slane %v3327, %v3331
    %v3338 = vunpack.c.l.b16 %v3322
    %v3339 = vunpack.c.l.b16 %v3323
    %v3340 = vunpack.c.l.b16 %v3324
    %v3341 = vunpack.c.l.b16 %v3325
    %v3342 = vpack.c.b16 %v3339, %v3338
    %v3343 = vpack.c.b16 %v3341, %v3340
    %3346 = vmatprep.subr.bf16.mxu0 0
    %3347 = vmatpush1.bf16.msra.mxu0 %v3342
    %3348 = vmatprep.subr.bf16.mxu0 0
    %3349 = vmatpush1.bf16.msra.mxu0 %v3343
    %3350 = vmatprep.subr.bf16.mxu0 0
    %3351 = vmatpush1.bf16.msra.mxu0 0
    %3352 = vmatprep.subr.bf16.mxu0 0
    %3353 = vmatpush1.bf16.msra.mxu0 0
    %3354 = vmatprep.subr.bf16.mxu0 0
    %3355 = vmatpush1.bf16.msra.mxu0 0
    %3356 = vmatprep.subr.bf16.mxu0 0
    %3357 = vmatpush1.bf16.msra.mxu0 0
    %3358 = vmatprep.subr.bf16.mxu0 0
    %3359 = vmatpush1.bf16.msra.mxu0 0
    %3360 = vmatprep.subr.bf16.mxu0 0
    %3361 = vmatpush1.bf16.msra.mxu0 0
    %3362 = vmatprep.subr.bf16.mxu0 0
    %3363 = vmatpush1.bf16.msra.mxu0 0
    %3364 = vmatprep.subr.bf16.mxu0 0
    %3365 = vmatpush1.bf16.msra.mxu0 0
    %3366 = vmatprep.subr.bf16.mxu0 0
    %3367 = vmatpush1.bf16.msra.mxu0 0
    %3368 = vmatprep.subr.bf16.mxu0 0
    %3369 = vmatpush1.bf16.msra.mxu0 0
    %3370 = vmatprep.subr.bf16.mxu0 0
    %3371 = vmatpush1.bf16.msra.mxu0 0
    %3372 = vmatprep.subr.bf16.mxu0 0
    %3373 = vmatpush1.bf16.msra.mxu0 0
    %3374 = vmatprep.subr.bf16.mxu0 0
    %3375 = vmatpush1.bf16.msra.mxu0 0
    %3376 = vmatprep.subr.bf16.mxu0 0
    %3377 = vmatpush1.bf16.msra.mxu0 0
    %3378 = vmatprep.mubr.bf16.mxu0 0
    %3379 = vmatmul.mubr.bf16.gmra.mrb[0].mxu0 %v2278
    %v3380 = vpop.f32.mrb[0].mxu0
    %v3381 = vadd.f32 %v3332, %v3380
    %v3382 = vpop.f32.mrb[0].mxu0
    %v3383 = vpop.f32.mrb[0].mxu0
    %v3384 = vadd.f32 %v3332, %v3383
    %v3385 = vpop.f32.mrb[0].mxu0
    %3386 = vdwg.mxu0
    %v3387 = vpack.c.bf16 %v3249, %v3249
    %v3388 = vpack.c.bf16 %v3252, %v3252
    %v3389 = vpack.c.bf16 %v3315, %v3315
    %v3390 = vpack.c.bf16 %v3318, %v3318
    %v3392 = vsel %vm325, %v3387, 0
    %v3395 = vsel %vm325, %v3389, 0
    %3397 = vmatprep.subr.bf16.mxu0 0
    %3398 = vmatpush1.bf16.xpose.msra.mxu0 %v3395
    %3399 = vmatprep.subr.bf16.mxu0 0
    %3400 = vmatpush1.bf16.xpose.msra.mxu0 0
    %3401 = vmatprep.subr.bf16.mxu0 0
    %3402 = vmatpush1.bf16.xpose.msra.mxu0 0
    %3403 = vmatprep.subr.bf16.mxu0 0
    %3404 = vmatpush1.bf16.xpose.msra.mxu0 0
    %3405 = vmatprep.subr.bf16.mxu0 0
    %3406 = vmatpush1.bf16.xpose.msra.mxu0 0
    %3407 = vmatprep.subr.bf16.mxu0 0
    %3408 = vmatpush1.bf16.xpose.msra.mxu0 0
    %3409 = vmatprep.subr.bf16.mxu0 0
    %3410 = vmatpush1.bf16.xpose.msra.mxu0 0
    %3411 = vmatprep.subr.bf16.mxu0 0
    %3412 = vmatpush1.bf16.xpose.msra.mxu0 0
    %3413 = vmatprep.subr.bf16.mxu0 0
    %3414 = vmatpush1.bf16.xpose.msra.mxu0 0
    %3415 = vmatprep.subr.bf16.mxu0 0
    %3416 = vmatpush1.bf16.xpose.msra.mxu0 0
    %3417 = vmatprep.subr.bf16.mxu0 0
    %3418 = vmatpush1.bf16.xpose.msra.mxu0 0
    %3419 = vmatprep.subr.bf16.mxu0 0
    %3420 = vmatpush1.bf16.xpose.msra.mxu0 0
    %3421 = vmatprep.subr.bf16.mxu0 0
    %3422 = vmatpush1.bf16.xpose.msra.mxu0 0
    %3423 = vmatprep.subr.bf16.mxu0 0
    %3424 = vmatpush1.bf16.xpose.msra.mxu0 0
    %3425 = vmatprep.subr.bf16.mxu0 0
    %3426 = vmatpush1.bf16.xpose.msra.mxu0 0
    %3427 = vmatprep.subr.bf16.mxu0 0
    %3428 = vmatpush1.bf16.xpose.msra.mxu0 0
    %3429 = vmatprep.mubr.bf16.mxu0 0
    %3430 = vmatmul.mubr.bf16.gmra.mrb[0].mxu0 %v3392
    %v3431 = vpop.f32.mrb[0].mxu0
    %v3432 = vadd.f32 0.0, %v3431
    %v3433 = vpop.f32.mrb[0].mxu0
    %v3434 = vpop.f32.mrb[0].mxu0
    %v3435 = vpop.f32.mrb[0].mxu0
    %3436 = vdwg.mxu0
    %v3438 = vsel %vm325, %v3388, 0
    %v3441 = vsel %vm325, %v3390, 0
    %3443 = vmatprep.subr.bf16.mxu0 0
    %3444 = vmatpush1.bf16.xpose.msra.mxu0 %v3441
    %3445 = vmatprep.subr.bf16.mxu0 0
    %3446 = vmatpush1.bf16.xpose.msra.mxu0 0
    %3447 = vmatprep.subr.bf16.mxu0 0
    %3448 = vmatpush1.bf16.xpose.msra.mxu0 0
    %3449 = vmatprep.subr.bf16.mxu0 0
    %3450 = vmatpush1.bf16.xpose.msra.mxu0 0
    %3451 = vmatprep.subr.bf16.mxu0 0
    %3452 = vmatpush1.bf16.xpose.msra.mxu0 0
    %3453 = vmatprep.subr.bf16.mxu0 0
    %3454 = vmatpush1.bf16.xpose.msra.mxu0 0
    %3455 = vmatprep.subr.bf16.mxu0 0
    %3456 = vmatpush1.bf16.xpose.msra.mxu0 0
    %3457 = vmatprep.subr.bf16.mxu0 0
    %3458 = vmatpush1.bf16.xpose.msra.mxu0 0
    %3459 = vmatprep.subr.bf16.mxu0 0
    %3460 = vmatpush1.bf16.xpose.msra.mxu0 0
    %3461 = vmatprep.subr.bf16.mxu0 0
    %3462 = vmatpush1.bf16.xpose.msra.mxu0 0
    %3463 = vmatprep.subr.bf16.mxu0 0
    %3464 = vmatpush1.bf16.xpose.msra.mxu0 0
    %3465 = vmatprep.subr.bf16.mxu0 0
    %3466 = vmatpush1.bf16.xpose.msra.mxu0 0
    %3467 = vmatprep.subr.bf16.mxu0 0
    %3468 = vmatpush1.bf16.xpose.msra.mxu0 0
    %3469 = vmatprep.subr.bf16.mxu0 0
    %3470 = vmatpush1.bf16.xpose.msra.mxu0 0
    %3471 = vmatprep.subr.bf16.mxu0 0
    %3472 = vmatpush1.bf16.xpose.msra.mxu0 0
    %3473 = vmatprep.subr.bf16.mxu0 0
    %3474 = vmatpush1.bf16.xpose.msra.mxu0 0
    %3475 = vmatprep.mubr.bf16.mxu0 0
    %3476 = vmatmul.mubr.bf16.gmra.mrb[0].mxu0 %v3438
    %v3477 = vpop.f32.mrb[0].mxu0
    %v3478 = vadd.f32 0.0, %v3477
    %v3479 = vpop.f32.mrb[0].mxu0
    %v3480 = vpop.f32.mrb[0].mxu0
    %v3481 = vpop.f32.mrb[0].mxu0
    %3482 = vdwg.mxu0
    %v3483 = vsel %vm325, %v3432, -inf
    %3484 = vmax.xlane.f32.xlu0 %v3483
    %v3485 = vpop.xlane.xlu0 %3484
    %v3486 = vsel %vm325, %v3478, -inf
    %3487 = vmax.xlane.f32.xlu0 %v3486
    %v3488 = vpop.xlane.xlu0 %3487
    %v3489 = vsub.f32 %v3432, %v3485
    %v3490 = vsub.f32 %v3478, %v3488
    %v3491 = vmul.f32 %v3489, 1.442695
    %v3492 = vpow.pop %v3491
    %v3493 = vmul.f32 %v3490, 1.442695
    %v3494 = vpow.pop %v3493
    %v3495 = vsel %vm325, %v3492, 0.0
    %3496 = vadd.xlane.f32.xlu0 %v3495
    %v3497 = vpop.xlane.xlu0 %3496
    %v3498 = vsel %vm325, %v3494, 0.0
    %3499 = vadd.xlane.f32.xlu0 %v3498
    %v3500 = vpop.xlane.xlu0 %3499
    %v3501 = vrcp.pop %v3497
    %v3502 = vrcp.pop %v3500
    %v3503 = vmul.f32 %v3492, %v3501
    %v3504 = vmul.f32 %v3494, %v3502
    %v3505 = vpack.c.bf16 %v3503, %v3503
    %v3506 = vpack.c.bf16 %v3504, %v3504
    %v3507 = vpack.c.bf16 %v3381, %v3381
    %v3508 = vpack.c.bf16 %v3384, %v3384
    %v3510 = vsel %vm325, %v3505, 0
    %v3513 = vsel %vm447, %v3507, 0
    %3515 = vmatprep.subr.bf16.mxu0 0
    %3516 = vmatpush1.bf16.msra.mxu0 %v3513
    %3517 = vmatprep.subr.bf16.mxu0 0
    %3518 = vmatpush1.bf16.msra.mxu0 0
    %3519 = vmatprep.subr.bf16.mxu0 0
    %3520 = vmatpush1.bf16.msra.mxu0 0
    %3521 = vmatprep.subr.bf16.mxu0 0
    %3522 = vmatpush1.bf16.msra.mxu0 0
    %3523 = vmatprep.subr.bf16.mxu0 0
    %3524 = vmatpush1.bf16.msra.mxu0 0
    %3525 = vmatprep.subr.bf16.mxu0 0
    %3526 = vmatpush1.bf16.msra.mxu0 0
    %3527 = vmatprep.subr.bf16.mxu0 0
    %3528 = vmatpush1.bf16.msra.mxu0 0
    %3529 = vmatprep.subr.bf16.mxu0 0
    %3530 = vmatpush1.bf16.msra.mxu0 0
    %3531 = vmatprep.subr.bf16.mxu0 0
    %3532 = vmatpush1.bf16.msra.mxu0 0
    %3533 = vmatprep.subr.bf16.mxu0 0
    %3534 = vmatpush1.bf16.msra.mxu0 0
    %3535 = vmatprep.subr.bf16.mxu0 0
    %3536 = vmatpush1.bf16.msra.mxu0 0
    %3537 = vmatprep.subr.bf16.mxu0 0
    %3538 = vmatpush1.bf16.msra.mxu0 0
    %3539 = vmatprep.subr.bf16.mxu0 0
    %3540 = vmatpush1.bf16.msra.mxu0 0
    %3541 = vmatprep.subr.bf16.mxu0 0
    %3542 = vmatpush1.bf16.msra.mxu0 0
    %3543 = vmatprep.subr.bf16.mxu0 0
    %3544 = vmatpush1.bf16.msra.mxu0 0
    %3545 = vmatprep.subr.bf16.mxu0 0
    %3546 = vmatpush1.bf16.msra.mxu0 0
    %3547 = vmatprep.mubr.bf16.mxu0 0
    %3548 = vmatmul.mubr.bf16.gmra.mrb[0].mxu0 %v3510
    %v3549 = vpop.f32.mrb[0].mxu0
    %v3550 = vadd.f32 0.0, %v3549
    %v3551 = vpop.f32.mrb[0].mxu0
    %v3552 = vpop.f32.mrb[0].mxu0
    %v3553 = vpop.f32.mrb[0].mxu0
    %3554 = vdwg.mxu0
    %v3556 = vsel %vm325, %v3506, 0
    %v3559 = vsel %vm447, %v3508, 0
    %3561 = vmatprep.subr.bf16.mxu0 0
    %3562 = vmatpush1.bf16.msra.mxu0 %v3559
    %3563 = vmatprep.subr.bf16.mxu0 0
    %3564 = vmatpush1.bf16.msra.mxu0 0
    %3565 = vmatprep.subr.bf16.mxu0 0
    %3566 = vmatpush1.bf16.msra.mxu0 0
    %3567 = vmatprep.subr.bf16.mxu0 0
    %3568 = vmatpush1.bf16.msra.mxu0 0
    %3569 = vmatprep.subr.bf16.mxu0 0
    %3570 = vmatpush1.bf16.msra.mxu0 0
    %3571 = vmatprep.subr.bf16.mxu0 0
    %3572 = vmatpush1.bf16.msra.mxu0 0
    %3573 = vmatprep.subr.bf16.mxu0 0
    %3574 = vmatpush1.bf16.msra.mxu0 0
    %3575 = vmatprep.subr.bf16.mxu0 0
    %3576 = vmatpush1.bf16.msra.mxu0 0
    %3577 = vmatprep.subr.bf16.mxu0 0
    %3578 = vmatpush1.bf16.msra.mxu0 0
    %3579 = vmatprep.subr.bf16.mxu0 0
    %3580 = vmatpush1.bf16.msra.mxu0 0
    %3581 = vmatprep.subr.bf16.mxu0 0
    %3582 = vmatpush1.bf16.msra.mxu0 0
    %3583 = vmatprep.subr.bf16.mxu0 0
    %3584 = vmatpush1.bf16.msra.mxu0 0
    %3585 = vmatprep.subr.bf16.mxu0 0
    %3586 = vmatpush1.bf16.msra.mxu0 0
    %3587 = vmatprep.subr.bf16.mxu0 0
    %3588 = vmatpush1.bf16.msra.mxu0 0
    %3589 = vmatprep.subr.bf16.mxu0 0
    %3590 = vmatpush1.bf16.msra.mxu0 0
    %3591 = vmatprep.subr.bf16.mxu0 0
    %3592 = vmatpush1.bf16.msra.mxu0 0
    %3593 = vmatprep.mubr.bf16.mxu0 0
    %3594 = vmatmul.mubr.bf16.gmra.mrb[0].mxu0 %v3556
    %v3595 = vpop.f32.mrb[0].mxu0
    %v3596 = vadd.f32 0.0, %v3595
    %v3597 = vpop.f32.mrb[0].mxu0
    %v3598 = vpop.f32.mrb[0].mxu0
    %v3599 = vpop.f32.mrb[0].mxu0
    %3600 = vdwg.mxu0
    %s3601 = scalar_lea.vmem %s9, 24
    %v3602 = vld [vmem:[%s3601] sm:$0xf]
    %v3603 = vpack.c.bf16 %v3596, %v3550
    %v3605 = vsel %vm325, %v3603, 0
    %v3608 = vsel %vm447, %v3602, 0
    %3610 = vmatprep.subr.bf16.mxu0 0
    %3611 = vmatpush1.bf16.msra.mxu0 %v3608
    %3612 = vmatprep.subr.bf16.mxu0 0
    %3613 = vmatpush1.bf16.msra.mxu0 0
    %3614 = vmatprep.subr.bf16.mxu0 0
    %3615 = vmatpush1.bf16.msra.mxu0 0
    %3616 = vmatprep.subr.bf16.mxu0 0
    %3617 = vmatpush1.bf16.msra.mxu0 0
    %3618 = vmatprep.subr.bf16.mxu0 0
    %3619 = vmatpush1.bf16.msra.mxu0 0
    %3620 = vmatprep.subr.bf16.mxu0 0
    %3621 = vmatpush1.bf16.msra.mxu0 0
    %3622 = vmatprep.subr.bf16.mxu0 0
    %3623 = vmatpush1.bf16.msra.mxu0 0
    %3624 = vmatprep.subr.bf16.mxu0 0
    %3625 = vmatpush1.bf16.msra.mxu0 0
    %3626 = vmatprep.subr.bf16.mxu0 0
    %3627 = vmatpush1.bf16.msra.mxu0 0
    %3628 = vmatprep.subr.bf16.mxu0 0
    %3629 = vmatpush1.bf16.msra.mxu0 0
    %3630 = vmatprep.subr.bf16.mxu0 0
    %3631 = vmatpush1.bf16.msra.mxu0 0
    %3632 = vmatprep.subr.bf16.mxu0 0
    %3633 = vmatpush1.bf16.msra.mxu0 0
    %3634 = vmatprep.subr.bf16.mxu0 0
    %3635 = vmatpush1.bf16.msra.mxu0 0
    %3636 = vmatprep.subr.bf16.mxu0 0
    %3637 = vmatpush1.bf16.msra.mxu0 0
    %3638 = vmatprep.subr.bf16.mxu0 0
    %3639 = vmatpush1.bf16.msra.mxu0 0
    %3640 = vmatprep.subr.bf16.mxu0 0
    %3641 = vmatpush1.bf16.msra.mxu0 0
    %3642 = vmatprep.mubr.bf16.mxu0 0
    %3643 = vmatmul.mubr.bf16.gmra.mrb[0].mxu0 %v3605
    %v3644 = vpop.f32.mrb[0].mxu0
    %v3645 = vadd.f32 0.0, %v3644
    %v3646 = vpop.f32.mrb[0].mxu0
    %v3647 = vpop.f32.mrb[0].mxu0
    %v3648 = vadd.f32 0.0, %v3647
    %v3649 = vpop.f32.mrb[0].mxu0
    %3650 = vdwg.mxu0
    %v3651 = vadd.f32 %v3187, %v3645
    %v3652 = vadd.f32 %v3188, %v3648
    %s3653 = scalar_lea.vmem %s3, 112
    %v3654 = vld [vmem:[%s3653] sm:$0xf]
    %v3655 = vld [vmem:[%s3653 + $0x4] sm:$0xf]
    %v3656 = vld [vmem:[%s3653 + $0x8] sm:$0xf]
    %v3657 = vld [vmem:[%s3653 + $0xc] sm:$0xf]
    %s3658 = scalar_lea.vmem %s4, 7
    %v3659 = vld [vmem:[%s3658] sm:$0x1]
    %v3661 = vlaneseq
    %v3662 = vshrl.u32 %v3661, 7
    %v3663 = vsub.s32 0, %v3662
    %v3664 = vrot.slane %v3659, %v3663
    %v3670 = vunpack.c.l.b16 %v3654
    %v3671 = vunpack.c.l.b16 %v3655
    %v3672 = vunpack.c.l.b16 %v3656
    %v3673 = vunpack.c.l.b16 %v3657
    %v3674 = vpack.c.b16 %v3671, %v3670
    %v3675 = vpack.c.b16 %v3673, %v3672
    %3678 = vmatprep.subr.bf16.mxu0 0
    %3679 = vmatpush1.bf16.msra.mxu0 %v3674
    %3680 = vmatprep.subr.bf16.mxu0 0
    %3681 = vmatpush1.bf16.msra.mxu0 %v3675
    %3682 = vmatprep.subr.bf16.mxu0 0
    %3683 = vmatpush1.bf16.msra.mxu0 0
    %3684 = vmatprep.subr.bf16.mxu0 0
    %3685 = vmatpush1.bf16.msra.mxu0 0
    %3686 = vmatprep.subr.bf16.mxu0 0
    %3687 = vmatpush1.bf16.msra.mxu0 0
    %3688 = vmatprep.subr.bf16.mxu0 0
    %3689 = vmatpush1.bf16.msra.mxu0 0
    %3690 = vmatprep.subr.bf16.mxu0 0
    %3691 = vmatpush1.bf16.msra.mxu0 0
    %3692 = vmatprep.subr.bf16.mxu0 0
    %3693 = vmatpush1.bf16.msra.mxu0 0
    %3694 = vmatprep.subr.bf16.mxu0 0
    %3695 = vmatpush1.bf16.msra.mxu0 0
    %3696 = vmatprep.subr.bf16.mxu0 0
    %3697 = vmatpush1.bf16.msra.mxu0 0
    %3698 = vmatprep.subr.bf16.mxu0 0
    %3699 = vmatpush1.bf16.msra.mxu0 0
    %3700 = vmatprep.subr.bf16.mxu0 0
    %3701 = vmatpush1.bf16.msra.mxu0 0
    %3702 = vmatprep.subr.bf16.mxu0 0
    %3703 = vmatpush1.bf16.msra.mxu0 0
    %3704 = vmatprep.subr.bf16.mxu0 0
    %3705 = vmatpush1.bf16.msra.mxu0 0
    %3706 = vmatprep.subr.bf16.mxu0 0
    %3707 = vmatpush1.bf16.msra.mxu0 0
    %3708 = vmatprep.subr.bf16.mxu0 0
    %3709 = vmatpush1.bf16.msra.mxu0 0
    %3710 = vmatprep.mubr.bf16.mxu0 0
    %3711 = vmatmul.mubr.bf16.gmra.mrb[0].mxu0 %v2278
    %v3712 = vpop.f32.mrb[0].mxu0
    %v3713 = vadd.f32 %v3664, %v3712
    %v3714 = vpop.f32.mrb[0].mxu0
    %v3715 = vpop.f32.mrb[0].mxu0
    %v3716 = vadd.f32 %v3664, %v3715
    %v3717 = vpop.f32.mrb[0].mxu0
    %3718 = vdwg.mxu0
    %s3719 = scalar_lea.vmem %s5, 112
    %v3720 = vld [vmem:[%s3719] sm:$0xf]
    %v3721 = vld [vmem:[%s3719 + $0x4] sm:$0xf]
    %v3722 = vld [vmem:[%s3719 + $0x8] sm:$0xf]
    %v3723 = vld [vmem:[%s3719 + $0xc] sm:$0xf]
    %s3724 = scalar_lea.vmem %s6, 7
    %v3725 = vld [vmem:[%s3724] sm:$0x1]
    %v3727 = vlaneseq
    %v3728 = vshrl.u32 %v3727, 7
    %v3729 = vsub.s32 0, %v3728
    %v3730 = vrot.slane %v3725, %v3729
    %v3736 = vunpack.c.l.b16 %v3720
    %v3737 = vunpack.c.l.b16 %v3721
    %v3738 = vunpack.c.l.b16 %v3722
    %v3739 = vunpack.c.l.b16 %v3723
    %v3740 = vpack.c.b16 %v3737, %v3736
    %v3741 = vpack.c.b16 %v3739, %v3738
    %3744 = vmatprep.subr.bf16.mxu0 0
    %3745 = vmatpush1.bf16.msra.mxu0 %v3740
    %3746 = vmatprep.subr.bf16.mxu0 0
    %3747 = vmatpush1.bf16.msra.mxu0 %v3741
    %3748 = vmatprep.subr.bf16.mxu0 0
    %3749 = vmatpush1.bf16.msra.mxu0 0
    %3750 = vmatprep.subr.bf16.mxu0 0
    %3751 = vmatpush1.bf16.msra.mxu0 0
    %3752 = vmatprep.subr.bf16.mxu0 0
    %3753 = vmatpush1.bf16.msra.mxu0 0
    %3754 = vmatprep.subr.bf16.mxu0 0
    %3755 = vmatpush1.bf16.msra.mxu0 0
    %3756 = vmatprep.subr.bf16.mxu0 0
    %3757 = vmatpush1.bf16.msra.mxu0 0
    %3758 = vmatprep.subr.bf16.mxu0 0
    %3759 = vmatpush1.bf16.msra.mxu0 0
    %3760 = vmatprep.subr.bf16.mxu0 0
    %3761 = vmatpush1.bf16.msra.mxu0 0
    %3762 = vmatprep.subr.bf16.mxu0 0
    %3763 = vmatpush1.bf16.msra.mxu0 0
    %3764 = vmatprep.subr.bf16.mxu0 0
    %3765 = vmatpush1.bf16.msra.mxu0 0
    %3766 = vmatprep.subr.bf16.mxu0 0
    %3767 = vmatpush1.bf16.msra.mxu0 0
    %3768 = vmatprep.subr.bf16.mxu0 0
    %3769 = vmatpush1.bf16.msra.mxu0 0
    %3770 = vmatprep.subr.bf16.mxu0 0
    %3771 = vmatpush1.bf16.msra.mxu0 0
    %3772 = vmatprep.subr.bf16.mxu0 0
    %3773 = vmatpush1.bf16.msra.mxu0 0
    %3774 = vmatprep.subr.bf16.mxu0 0
    %3775 = vmatpush1.bf16.msra.mxu0 0
    %3776 = vmatprep.mubr.bf16.mxu0 0
    %3777 = vmatmul.mubr.bf16.gmra.mrb[0].mxu0 %v2278
    %v3778 = vpop.f32.mrb[0].mxu0
    %v3779 = vadd.f32 %v3730, %v3778
    %v3780 = vpop.f32.mrb[0].mxu0
    %v3781 = vpop.f32.mrb[0].mxu0
    %v3782 = vadd.f32 %v3730, %v3781
    %v3783 = vpop.f32.mrb[0].mxu0
    %3784 = vdwg.mxu0
    %s3785 = scalar_lea.vmem %s7, 112
    %v3786 = vld [vmem:[%s3785] sm:$0xf]
    %v3787 = vld [vmem:[%s3785 + $0x4] sm:$0xf]
    %v3788 = vld [vmem:[%s3785 + $0x8] sm:$0xf]
    %v3789 = vld [vmem:[%s3785 + $0xc] sm:$0xf]
    %s3790 = scalar_lea.vmem %s8, 7
    %v3791 = vld [vmem:[%s3790] sm:$0x1]
    %v3793 = vlaneseq
    %v3794 = vshrl.u32 %v3793, 7
    %v3795 = vsub.s32 0, %v3794
    %v3796 = vrot.slane %v3791, %v3795
    %v3802 = vunpack.c.l.b16 %v3786
    %v3803 = vunpack.c.l.b16 %v3787
    %v3804 = vunpack.c.l.b16 %v3788
    %v3805 = vunpack.c.l.b16 %v3789
    %v3806 = vpack.c.b16 %v3803, %v3802
    %v3807 = vpack.c.b16 %v3805, %v3804
    %3810 = vmatprep.subr.bf16.mxu0 0
    %3811 = vmatpush1.bf16.msra.mxu0 %v3806
    %3812 = vmatprep.subr.bf16.mxu0 0
    %3813 = vmatpush1.bf16.msra.mxu0 %v3807
    %3814 = vmatprep.subr.bf16.mxu0 0
    %3815 = vmatpush1.bf16.msra.mxu0 0
    %3816 = vmatprep.subr.bf16.mxu0 0
    %3817 = vmatpush1.bf16.msra.mxu0 0
    %3818 = vmatprep.subr.bf16.mxu0 0
    %3819 = vmatpush1.bf16.msra.mxu0 0
    %3820 = vmatprep.subr.bf16.mxu0 0
    %3821 = vmatpush1.bf16.msra.mxu0 0
    %3822 = vmatprep.subr.bf16.mxu0 0
    %3823 = vmatpush1.bf16.msra.mxu0 0
    %3824 = vmatprep.subr.bf16.mxu0 0
    %3825 = vmatpush1.bf16.msra.mxu0 0
    %3826 = vmatprep.subr.bf16.mxu0 0
    %3827 = vmatpush1.bf16.msra.mxu0 0
    %3828 = vmatprep.subr.bf16.mxu0 0
    %3829 = vmatpush1.bf16.msra.mxu0 0
    %3830 = vmatprep.subr.bf16.mxu0 0
    %3831 = vmatpush1.bf16.msra.mxu0 0
    %3832 = vmatprep.subr.bf16.mxu0 0
    %3833 = vmatpush1.bf16.msra.mxu0 0
    %3834 = vmatprep.subr.bf16.mxu0 0
    %3835 = vmatpush1.bf16.msra.mxu0 0
    %3836 = vmatprep.subr.bf16.mxu0 0
    %3837 = vmatpush1.bf16.msra.mxu0 0
    %3838 = vmatprep.subr.bf16.mxu0 0
    %3839 = vmatpush1.bf16.msra.mxu0 0
    %3840 = vmatprep.subr.bf16.mxu0 0
    %3841 = vmatpush1.bf16.msra.mxu0 0
    %3842 = vmatprep.mubr.bf16.mxu0 0
    %3843 = vmatmul.mubr.bf16.gmra.mrb[0].mxu0 %v2278
    %v3844 = vpop.f32.mrb[0].mxu0
    %v3845 = vadd.f32 %v3796, %v3844
    %v3846 = vpop.f32.mrb[0].mxu0
    %v3847 = vpop.f32.mrb[0].mxu0
    %v3848 = vadd.f32 %v3796, %v3847
    %v3849 = vpop.f32.mrb[0].mxu0
    %3850 = vdwg.mxu0
    %v3851 = vpack.c.bf16 %v3713, %v3713
    %v3852 = vpack.c.bf16 %v3716, %v3716
    %v3853 = vpack.c.bf16 %v3779, %v3779
    %v3854 = vpack.c.bf16 %v3782, %v3782
    %v3856 = vsel %vm325, %v3851, 0
    %v3859 = vsel %vm325, %v3853, 0
    %3861 = vmatprep.subr.bf16.mxu0 0
    %3862 = vmatpush1.bf16.xpose.msra.mxu0 %v3859
    %3863 = vmatprep.subr.bf16.mxu0 0
    %3864 = vmatpush1.bf16.xpose.msra.mxu0 0
    %3865 = vmatprep.subr.bf16.mxu0 0
    %3866 = vmatpush1.bf16.xpose.msra.mxu0 0
    %3867 = vmatprep.subr.bf16.mxu0 0
    %3868 = vmatpush1.bf16.xpose.msra.mxu0 0
    %3869 = vmatprep.subr.bf16.mxu0 0
    %3870 = vmatpush1.bf16.xpose.msra.mxu0 0
    %3871 = vmatprep.subr.bf16.mxu0 0
    %3872 = vmatpush1.bf16.xpose.msra.mxu0 0
    %3873 = vmatprep.subr.bf16.mxu0 0
    %3874 = vmatpush1.bf16.xpose.msra.mxu0 0
    %3875 = vmatprep.subr.bf16.mxu0 0
    %3876 = vmatpush1.bf16.xpose.msra.mxu0 0
    %3877 = vmatprep.subr.bf16.mxu0 0
    %3878 = vmatpush1.bf16.xpose.msra.mxu0 0
    %3879 = vmatprep.subr.bf16.mxu0 0
    %3880 = vmatpush1.bf16.xpose.msra.mxu0 0
    %3881 = vmatprep.subr.bf16.mxu0 0
    %3882 = vmatpush1.bf16.xpose.msra.mxu0 0
    %3883 = vmatprep.subr.bf16.mxu0 0
    %3884 = vmatpush1.bf16.xpose.msra.mxu0 0
    %3885 = vmatprep.subr.bf16.mxu0 0
    %3886 = vmatpush1.bf16.xpose.msra.mxu0 0
    %3887 = vmatprep.subr.bf16.mxu0 0
    %3888 = vmatpush1.bf16.xpose.msra.mxu0 0
    %3889 = vmatprep.subr.bf16.mxu0 0
    %3890 = vmatpush1.bf16.xpose.msra.mxu0 0
    %3891 = vmatprep.subr.bf16.mxu0 0
    %3892 = vmatpush1.bf16.xpose.msra.mxu0 0
    %3893 = vmatprep.mubr.bf16.mxu0 0
    %3894 = vmatmul.mubr.bf16.gmra.mrb[0].mxu0 %v3856
    %v3895 = vpop.f32.mrb[0].mxu0
    %v3896 = vadd.f32 0.0, %v3895
    %v3897 = vpop.f32.mrb[0].mxu0
    %v3898 = vpop.f32.mrb[0].mxu0
    %v3899 = vpop.f32.mrb[0].mxu0
    %3900 = vdwg.mxu0
    %v3902 = vsel %vm325, %v3852, 0
    %v3905 = vsel %vm325, %v3854, 0
    %3907 = vmatprep.subr.bf16.mxu0 0
    %3908 = vmatpush1.bf16.xpose.msra.mxu0 %v3905
    %3909 = vmatprep.subr.bf16.mxu0 0
    %3910 = vmatpush1.bf16.xpose.msra.mxu0 0
    %3911 = vmatprep.subr.bf16.mxu0 0
    %3912 = vmatpush1.bf16.xpose.msra.mxu0 0
    %3913 = vmatprep.subr.bf16.mxu0 0
    %3914 = vmatpush1.bf16.xpose.msra.mxu0 0
    %3915 = vmatprep.subr.bf16.mxu0 0
    %3916 = vmatpush1.bf16.xpose.msra.mxu0 0
    %3917 = vmatprep.subr.bf16.mxu0 0
    %3918 = vmatpush1.bf16.xpose.msra.mxu0 0
    %3919 = vmatprep.subr.bf16.mxu0 0
    %3920 = vmatpush1.bf16.xpose.msra.mxu0 0
    %3921 = vmatprep.subr.bf16.mxu0 0
    %3922 = vmatpush1.bf16.xpose.msra.mxu0 0
    %3923 = vmatprep.subr.bf16.mxu0 0
    %3924 = vmatpush1.bf16.xpose.msra.mxu0 0
    %3925 = vmatprep.subr.bf16.mxu0 0
    %3926 = vmatpush1.bf16.xpose.msra.mxu0 0
    %3927 = vmatprep.subr.bf16.mxu0 0
    %3928 = vmatpush1.bf16.xpose.msra.mxu0 0
    %3929 = vmatprep.subr.bf16.mxu0 0
    %3930 = vmatpush1.bf16.xpose.msra.mxu0 0
    %3931 = vmatprep.subr.bf16.mxu0 0
    %3932 = vmatpush1.bf16.xpose.msra.mxu0 0
    %3933 = vmatprep.subr.bf16.mxu0 0
    %3934 = vmatpush1.bf16.xpose.msra.mxu0 0
    %3935 = vmatprep.subr.bf16.mxu0 0
    %3936 = vmatpush1.bf16.xpose.msra.mxu0 0
    %3937 = vmatprep.subr.bf16.mxu0 0
    %3938 = vmatpush1.bf16.xpose.msra.mxu0 0
    %3939 = vmatprep.mubr.bf16.mxu0 0
    %3940 = vmatmul.mubr.bf16.gmra.mrb[0].mxu0 %v3902
    %v3941 = vpop.f32.mrb[0].mxu0
    %v3942 = vadd.f32 0.0, %v3941
    %v3943 = vpop.f32.mrb[0].mxu0
    %v3944 = vpop.f32.mrb[0].mxu0
    %v3945 = vpop.f32.mrb[0].mxu0
    %3946 = vdwg.mxu0
    %v3947 = vsel %vm325, %v3896, -inf
    %3948 = vmax.xlane.f32.xlu0 %v3947
    %v3949 = vpop.xlane.xlu0 %3948
    %v3950 = vsel %vm325, %v3942, -inf
    %3951 = vmax.xlane.f32.xlu0 %v3950
    %v3952 = vpop.xlane.xlu0 %3951
    %v3953 = vsub.f32 %v3896, %v3949
    %v3954 = vsub.f32 %v3942, %v3952
    %v3955 = vmul.f32 %v3953, 1.442695
    %v3956 = vpow.pop %v3955
    %v3957 = vmul.f32 %v3954, 1.442695
    %v3958 = vpow.pop %v3957
    %v3959 = vsel %vm325, %v3956, 0.0
    %3960 = vadd.xlane.f32.xlu0 %v3959
    %v3961 = vpop.xlane.xlu0 %3960
    %v3962 = vsel %vm325, %v3958, 0.0
    %3963 = vadd.xlane.f32.xlu0 %v3962
    %v3964 = vpop.xlane.xlu0 %3963
    %v3965 = vrcp.pop %v3961
    %v3966 = vrcp.pop %v3964
    %v3967 = vmul.f32 %v3956, %v3965
    %v3968 = vmul.f32 %v3958, %v3966
    %v3969 = vpack.c.bf16 %v3967, %v3967
    %v3970 = vpack.c.bf16 %v3968, %v3968
    %v3971 = vpack.c.bf16 %v3845, %v3845
    %v3972 = vpack.c.bf16 %v3848, %v3848
    %v3974 = vsel %vm325, %v3969, 0
    %v3977 = vsel %vm447, %v3971, 0
    %3979 = vmatprep.subr.bf16.mxu0 0
    %3980 = vmatpush1.bf16.msra.mxu0 %v3977
    %3981 = vmatprep.subr.bf16.mxu0 0
    %3982 = vmatpush1.bf16.msra.mxu0 0
    %3983 = vmatprep.subr.bf16.mxu0 0
    %3984 = vmatpush1.bf16.msra.mxu0 0
    %3985 = vmatprep.subr.bf16.mxu0 0
    %3986 = vmatpush1.bf16.msra.mxu0 0
    %3987 = vmatprep.subr.bf16.mxu0 0
    %3988 = vmatpush1.bf16.msra.mxu0 0
    %3989 = vmatprep.subr.bf16.mxu0 0
    %3990 = vmatpush1.bf16.msra.mxu0 0
    %3991 = vmatprep.subr.bf16.mxu0 0
    %3992 = vmatpush1.bf16.msra.mxu0 0
    %3993 = vmatprep.subr.bf16.mxu0 0
    %3994 = vmatpush1.bf16.msra.mxu0 0
    %3995 = vmatprep.subr.bf16.mxu0 0
    %3996 = vmatpush1.bf16.msra.mxu0 0
    %3997 = vmatprep.subr.bf16.mxu0 0
    %3998 = vmatpush1.bf16.msra.mxu0 0
    %3999 = vmatprep.subr.bf16.mxu0 0
    %4000 = vmatpush1.bf16.msra.mxu0 0
    %4001 = vmatprep.subr.bf16.mxu0 0
    %4002 = vmatpush1.bf16.msra.mxu0 0
    %4003 = vmatprep.subr.bf16.mxu0 0
    %4004 = vmatpush1.bf16.msra.mxu0 0
    %4005 = vmatprep.subr.bf16.mxu0 0
    %4006 = vmatpush1.bf16.msra.mxu0 0
    %4007 = vmatprep.subr.bf16.mxu0 0
    %4008 = vmatpush1.bf16.msra.mxu0 0
    %4009 = vmatprep.subr.bf16.mxu0 0
    %4010 = vmatpush1.bf16.msra.mxu0 0
    %4011 = vmatprep.mubr.bf16.mxu0 0
    %4012 = vmatmul.mubr.bf16.gmra.mrb[0].mxu0 %v3974
    %v4013 = vpop.f32.mrb[0].mxu0
    %v4014 = vadd.f32 0.0, %v4013
    %v4015 = vpop.f32.mrb[0].mxu0
    %v4016 = vpop.f32.mrb[0].mxu0
    %v4017 = vpop.f32.mrb[0].mxu0
    %4018 = vdwg.mxu0
    %v4020 = vsel %vm325, %v3970, 0
    %v4023 = vsel %vm447, %v3972, 0
    %4025 = vmatprep.subr.bf16.mxu0 0
    %4026 = vmatpush1.bf16.msra.mxu0 %v4023
    %4027 = vmatprep.subr.bf16.mxu0 0
    %4028 = vmatpush1.bf16.msra.mxu0 0
    %4029 = vmatprep.subr.bf16.mxu0 0
    %4030 = vmatpush1.bf16.msra.mxu0 0
    %4031 = vmatprep.subr.bf16.mxu0 0
    %4032 = vmatpush1.bf16.msra.mxu0 0
    %4033 = vmatprep.subr.bf16.mxu0 0
    %4034 = vmatpush1.bf16.msra.mxu0 0
    %4035 = vmatprep.subr.bf16.mxu0 0
    %4036 = vmatpush1.bf16.msra.mxu0 0
    %4037 = vmatprep.subr.bf16.mxu0 0
    %4038 = vmatpush1.bf16.msra.mxu0 0
    %4039 = vmatprep.subr.bf16.mxu0 0
    %4040 = vmatpush1.bf16.msra.mxu0 0
    %4041 = vmatprep.subr.bf16.mxu0 0
    %4042 = vmatpush1.bf16.msra.mxu0 0
    %4043 = vmatprep.subr.bf16.mxu0 0
    %4044 = vmatpush1.bf16.msra.mxu0 0
    %4045 = vmatprep.subr.bf16.mxu0 0
    %4046 = vmatpush1.bf16.msra.mxu0 0
    %4047 = vmatprep.subr.bf16.mxu0 0
    %4048 = vmatpush1.bf16.msra.mxu0 0
    %4049 = vmatprep.subr.bf16.mxu0 0
    %4050 = vmatpush1.bf16.msra.mxu0 0
    %4051 = vmatprep.subr.bf16.mxu0 0
    %4052 = vmatpush1.bf16.msra.mxu0 0
    %4053 = vmatprep.subr.bf16.mxu0 0
    %4054 = vmatpush1.bf16.msra.mxu0 0
    %4055 = vmatprep.subr.bf16.mxu0 0
    %4056 = vmatpush1.bf16.msra.mxu0 0
    %4057 = vmatprep.mubr.bf16.mxu0 0
    %4058 = vmatmul.mubr.bf16.gmra.mrb[0].mxu0 %v4020
    %v4059 = vpop.f32.mrb[0].mxu0
    %v4060 = vadd.f32 0.0, %v4059
    %v4061 = vpop.f32.mrb[0].mxu0
    %v4062 = vpop.f32.mrb[0].mxu0
    %v4063 = vpop.f32.mrb[0].mxu0
    %4064 = vdwg.mxu0
    %s4065 = scalar_lea.vmem %s9, 28
    %v4066 = vld [vmem:[%s4065] sm:$0xf]
    %v4067 = vpack.c.bf16 %v4060, %v4014
    %v4069 = vsel %vm325, %v4067, 0
    %v4072 = vsel %vm447, %v4066, 0
    %4074 = vmatprep.subr.bf16.mxu0 0
    %4075 = vmatpush1.bf16.msra.mxu0 %v4072
    %4076 = vmatprep.subr.bf16.mxu0 0
    %4077 = vmatpush1.bf16.msra.mxu0 0
    %4078 = vmatprep.subr.bf16.mxu0 0
    %4079 = vmatpush1.bf16.msra.mxu0 0
    %4080 = vmatprep.subr.bf16.mxu0 0
    %4081 = vmatpush1.bf16.msra.mxu0 0
    %4082 = vmatprep.subr.bf16.mxu0 0
    %4083 = vmatpush1.bf16.msra.mxu0 0
    %4084 = vmatprep.subr.bf16.mxu0 0
    %4085 = vmatpush1.bf16.msra.mxu0 0
    %4086 = vmatprep.subr.bf16.mxu0 0
    %4087 = vmatpush1.bf16.msra.mxu0 0
    %4088 = vmatprep.subr.bf16.mxu0 0
    %4089 = vmatpush1.bf16.msra.mxu0 0
    %4090 = vmatprep.subr.bf16.mxu0 0
    %4091 = vmatpush1.bf16.msra.mxu0 0
    %4092 = vmatprep.subr.bf16.mxu0 0
    %4093 = vmatpush1.bf16.msra.mxu0 0
    %4094 = vmatprep.subr.bf16.mxu0 0
    %4095 = vmatpush1.bf16.msra.mxu0 0
    %4096 = vmatprep.subr.bf16.mxu0 0
    %4097 = vmatpush1.bf16.msra.mxu0 0
    %4098 = vmatprep.subr.bf16.mxu0 0
    %4099 = vmatpush1.bf16.msra.mxu0 0
    %4100 = vmatprep.subr.bf16.mxu0 0
    %4101 = vmatpush1.bf16.msra.mxu0 0
    %4102 = vmatprep.subr.bf16.mxu0 0
    %4103 = vmatpush1.bf16.msra.mxu0 0
    %4104 = vmatprep.subr.bf16.mxu0 0
    %4105 = vmatpush1.bf16.msra.mxu0 0
    %4106 = vmatprep.mubr.bf16.mxu0 0
    %4107 = vmatmul.mubr.bf16.gmra.mrb[0].mxu0 %v4069
    %v4108 = vpop.f32.mrb[0].mxu0
    %v4109 = vadd.f32 0.0, %v4108
    %v4110 = vpop.f32.mrb[0].mxu0
    %v4111 = vpop.f32.mrb[0].mxu0
    %v4112 = vadd.f32 0.0, %v4111
    %v4113 = vpop.f32.mrb[0].mxu0
    %4114 = vdwg.mxu0
    %v4115 = vadd.f32 %v3651, %v4109
    %v4116 = vadd.f32 %v3652, %v4112
    %v4117 = vadd.f32 %v2247, %v4115
    %v4118 = vadd.f32 %v2248, %v4116
    %s4119 = scalar_lea.vmem %s11, 1
    %v4120 = vld [vmem:[%s4119] sm:$0x1]
    %s4121 = scalar_lea.vmem %s12, 1
    %v4122 = vld [vmem:[%s4121] sm:$0x1]
    %v4123 = vsel %vm80, %v4117, 0.0
    %4124 = vadd.xlane.f32.xlu0 %v4123
    %v4125 = vpop.xlane.xlu0 %4124
    %v4126 = vsel %vm80, %v4118, 0.0
    %4127 = vadd.xlane.f32.xlu0 %v4126
    %v4128 = vpop.xlane.xlu0 %4127
    %v4129 = vmul.f32 %v4125, %v87
    %v4130 = vmul.f32 %v4128, %v87
    %v4131 = vsub.f32 %v4117, %v4129
    %v4132 = vsub.f32 %v4118, %v4130
    %v4133 = vmul.f32 %v4131, %v4131
    %v4134 = vmul.f32 %v4132, %v4132
    %v4135 = vsel %vm80, %v4133, 0.0
    %4136 = vadd.xlane.f32.xlu0 %v4135
    %v4137 = vpop.xlane.xlu0 %4136
    %v4138 = vsel %vm80, %v4134, 0.0
    %4139 = vadd.xlane.f32.xlu0 %v4138
    %v4140 = vpop.xlane.xlu0 %4139
    %v4141 = vmul.f32 %v4137, %v87
    %v4142 = vmul.f32 %v4140, %v87
    %v4143 = vadd.f32 %v4141, 1e-12
    %v4144 = vadd.f32 %v4142, 1e-12
    %v4145 = vrsqrt.pop %v4143
    %v4146 = vrsqrt.pop %v4144
    %v4147 = vmul.f32 %v4131, %v4145
    %v4148 = vmul.f32 %v4132, %v4146
    %v4150 = vlaneseq
    %v4151 = vshrl.u32 %v4150, 7
    %v4152 = vsub.s32 0, %v4151
    %v4153 = vrot.slane %v4120, %v4152
    %v4155 = vmul.f32 %v4153, %v4147
    %v4156 = vmul.f32 %v4153, %v4148
    %v4158 = vlaneseq
    %v4159 = vshrl.u32 %v4158, 7
    %v4160 = vsub.s32 0, %v4159
    %v4161 = vrot.slane %v4122, %v4160
    %v4163 = vadd.f32 %v4155, %v4161
    %v4164 = vadd.f32 %v4156, %v4161
    %s4165 = scalar_lea.vmem %s13, 16
    %v4166 = vld [vmem:[%s4165] sm:$0xf]
    %v4167 = vld [vmem:[%s4165 + $0x4] sm:$0xf]
    %v4168 = vld [vmem:[%s4165 + $0x8] sm:$0xf]
    %v4169 = vld [vmem:[%s4165 + $0xc] sm:$0xf]
    %v4170 = vpack.c.bf16 %v4164, %v4163
    %s4171 = scalar_lea.vmem %s14, 1
    %v4172 = vld [vmem:[%s4171] sm:$0x1]
    %v4174 = vlaneseq
    %v4175 = vshrl.u32 %v4174, 7
    %v4176 = vsub.s32 0, %v4175
    %v4177 = vrot.slane %v4172, %v4176
    %v4183 = vunpack.c.l.b16 %v4166
    %v4184 = vunpack.c.l.b16 %v4167
    %v4185 = vunpack.c.l.b16 %v4168
    %v4186 = vunpack.c.l.b16 %v4169
    %v4187 = vpack.c.b16 %v4184, %v4183
    %v4188 = vpack.c.b16 %v4186, %v4185
    %v4192 = vsel %vm80, %v4170, 0
    %4194 = vmatprep.subr.bf16.mxu0 0
    %4195 = vmatpush1.bf16.msra.mxu0 %v4187
    %4196 = vmatprep.subr.bf16.mxu0 0
    %4197 = vmatpush1.bf16.msra.mxu0 %v4188
    %4198 = vmatprep.subr.bf16.mxu0 0
    %4199 = vmatpush1.bf16.msra.mxu0 0
    %4200 = vmatprep.subr.bf16.mxu0 0
    %4201 = vmatpush1.bf16.msra.mxu0 0
    %4202 = vmatprep.subr.bf16.mxu0 0
    %4203 = vmatpush1.bf16.msra.mxu0 0
    %4204 = vmatprep.subr.bf16.mxu0 0
    %4205 = vmatpush1.bf16.msra.mxu0 0
    %4206 = vmatprep.subr.bf16.mxu0 0
    %4207 = vmatpush1.bf16.msra.mxu0 0
    %4208 = vmatprep.subr.bf16.mxu0 0
    %4209 = vmatpush1.bf16.msra.mxu0 0
    %4210 = vmatprep.subr.bf16.mxu0 0
    %4211 = vmatpush1.bf16.msra.mxu0 0
    %4212 = vmatprep.subr.bf16.mxu0 0
    %4213 = vmatpush1.bf16.msra.mxu0 0
    %4214 = vmatprep.subr.bf16.mxu0 0
    %4215 = vmatpush1.bf16.msra.mxu0 0
    %4216 = vmatprep.subr.bf16.mxu0 0
    %4217 = vmatpush1.bf16.msra.mxu0 0
    %4218 = vmatprep.subr.bf16.mxu0 0
    %4219 = vmatpush1.bf16.msra.mxu0 0
    %4220 = vmatprep.subr.bf16.mxu0 0
    %4221 = vmatpush1.bf16.msra.mxu0 0
    %4222 = vmatprep.subr.bf16.mxu0 0
    %4223 = vmatpush1.bf16.msra.mxu0 0
    %4224 = vmatprep.subr.bf16.mxu0 0
    %4225 = vmatpush1.bf16.msra.mxu0 0
    %4226 = vmatprep.mubr.bf16.mxu0 0
    %4227 = vmatmul.mubr.bf16.gmra.mrb[0].mxu0 %v4192
    %v4228 = vpop.f32.mrb[0].mxu0
    %v4229 = vadd.f32 %v4177, %v4228
    %v4230 = vpop.f32.mrb[0].mxu0
    %v4231 = vpop.f32.mrb[0].mxu0
    %v4232 = vadd.f32 %v4177, %v4231
    %v4233 = vpop.f32.mrb[0].mxu0
    %4234 = vdwg.mxu0
    %v4235 = vmul.f32 %v4229, %v4229
    %v4236 = vmul.f32 %v4232, %v4232
    %v4237 = vmul.f32 %v4229, %v4235
    %v4238 = vmul.f32 %v4232, %v4236
    %v4239 = vmul.f32 %v4237, 0.044715
    %v4240 = vmul.f32 %v4238, 0.044715
    %v4241 = vadd.f32 %v4229, %v4239
    %v4242 = vadd.f32 %v4232, %v4240
    %v4243 = vmul.f32 %v4241, 0.7978846
    %v4244 = vmul.f32 %v4242, 0.7978846
    %v4245 = vtanh.pop %v4243
    %v4246 = vtanh.pop %v4244
    %v4247 = vadd.f32 %v4245, 1.0
    %v4248 = vadd.f32 %v4246, 1.0
    %v4249 = vmul.f32 %v4247, 0.5
    %v4250 = vmul.f32 %v4248, 0.5
    %v4251 = vmul.f32 %v4229, %v4249
    %v4252 = vmul.f32 %v4232, %v4250
    %s4253 = scalar_lea.vmem %s15, 32
    %v4254 = vld [vmem:[%s4253] sm:$0xf]
    %v4255 = vld [vmem:[%s4253 + $0x4] sm:$0xf]
    %v4256 = vld [vmem:[%s4253 + $0x8] sm:$0xf]
    %v4257 = vld [vmem:[%s4253 + $0xc] sm:$0xf]
    %v4258 = vld [vmem:[%s4253 + $0x10] sm:$0xf]
    %v4259 = vld [vmem:[%s4253 + $0x14] sm:$0xf]
    %v4260 = vld [vmem:[%s4253 + $0x18] sm:$0xf]
    %v4261 = vld [vmem:[%s4253 + $0x1c] sm:$0xf]
    %v4262 = vpack.c.bf16 %v4252, %v4251
    %s4263 = scalar_lea.vmem %s16, 1
    %v4264 = vld [vmem:[%s4263] sm:$0x1]
    %v4266 = vlaneseq
    %v4267 = vshrl.u32 %v4266, 7
    %v4268 = vsub.s32 0, %v4267
    %v4269 = vrot.slane %v4264, %v4268
    %v4279 = vunpack.c.l.b16 %v4254
    %v4280 = vunpack.c.l.b16 %v4255
    %v4281 = vunpack.c.l.b16 %v4256
    %v4282 = vunpack.c.l.b16 %v4257
    %v4283 = vunpack.c.l.b16 %v4258
    %v4284 = vunpack.c.l.b16 %v4259
    %v4285 = vunpack.c.l.b16 %v4260
    %v4286 = vunpack.c.l.b16 %v4261
    %v4287 = vpack.c.b16 %v4280, %v4279
    %v4288 = vpack.c.b16 %v4282, %v4281
    %v4289 = vpack.c.b16 %v4284, %v4283
    %v4290 = vpack.c.b16 %v4286, %v4285
    %v4296 = vsel %vm2158, %v4262, 0
    %4298 = vmatprep.subr.bf16.mxu0 0
    %4299 = vmatpush1.bf16.msra.mxu0 %v4287
    %4300 = vmatprep.subr.bf16.mxu0 0
    %4301 = vmatpush1.bf16.msra.mxu0 %v4288
    %4302 = vmatprep.subr.bf16.mxu0 0
    %4303 = vmatpush1.bf16.msra.mxu0 %v4289
    %4304 = vmatprep.subr.bf16.mxu0 0
    %4305 = vmatpush1.bf16.msra.mxu0 %v4290
    %4306 = vmatprep.subr.bf16.mxu0 0
    %4307 = vmatpush1.bf16.msra.mxu0 0
    %4308 = vmatprep.subr.bf16.mxu0 0
    %4309 = vmatpush1.bf16.msra.mxu0 0
    %4310 = vmatprep.subr.bf16.mxu0 0
    %4311 = vmatpush1.bf16.msra.mxu0 0
    %4312 = vmatprep.subr.bf16.mxu0 0
    %4313 = vmatpush1.bf16.msra.mxu0 0
    %4314 = vmatprep.subr.bf16.mxu0 0
    %4315 = vmatpush1.bf16.msra.mxu0 0
    %4316 = vmatprep.subr.bf16.mxu0 0
    %4317 = vmatpush1.bf16.msra.mxu0 0
    %4318 = vmatprep.subr.bf16.mxu0 0
    %4319 = vmatpush1.bf16.msra.mxu0 0
    %4320 = vmatprep.subr.bf16.mxu0 0
    %4321 = vmatpush1.bf16.msra.mxu0 0
    %4322 = vmatprep.subr.bf16.mxu0 0
    %4323 = vmatpush1.bf16.msra.mxu0 0
    %4324 = vmatprep.subr.bf16.mxu0 0
    %4325 = vmatpush1.bf16.msra.mxu0 0
    %4326 = vmatprep.subr.bf16.mxu0 0
    %4327 = vmatpush1.bf16.msra.mxu0 0
    %4328 = vmatprep.subr.bf16.mxu0 0
    %4329 = vmatpush1.bf16.msra.mxu0 0
    %4330 = vmatprep.mubr.bf16.mxu0 0
    %4331 = vmatmul.mubr.bf16.gmra.mrb[0].mxu0 %v4296
    %v4332 = vpop.f32.mrb[0].mxu0
    %v4333 = vadd.f32 %v4269, %v4332
    %v4334 = vpop.f32.mrb[0].mxu0
    %v4335 = vpop.f32.mrb[0].mxu0
    %v4336 = vadd.f32 %v4269, %v4335
    %v4337 = vpop.f32.mrb[0].mxu0
    %4338 = vdwg.mxu0
    %v4339 = vadd.f32 %v4163, %v4333
    %v4340 = vadd.f32 %v4164, %v4336
    %s4341 = scalar_lea.vmem %s17, 1
    %v4342 = vld [vmem:[%s4341] sm:$0x1]
    %s4343 = scalar_lea.vmem %s18, 1
    %v4344 = vld [vmem:[%s4343] sm:$0x1]
    %v4345 = vsel %vm80, %v4339, 0.0
    %4346 = vadd.xlane.f32.xlu0 %v4345
    %v4347 = vpop.xlane.xlu0 %4346
    %v4348 = vsel %vm80, %v4340, 0.0
    %4349 = vadd.xlane.f32.xlu0 %v4348
    %v4350 = vpop.xlane.xlu0 %4349
    %v4351 = vmul.f32 %v4347, %v87
    %v4352 = vmul.f32 %v4350, %v87
    %v4353 = vsub.f32 %v4339, %v4351
    %v4354 = vsub.f32 %v4340, %v4352
    %v4355 = vmul.f32 %v4353, %v4353
    %v4356 = vmul.f32 %v4354, %v4354
    %v4357 = vsel %vm80, %v4355, 0.0
    %4358 = vadd.xlane.f32.xlu0 %v4357
    %v4359 = vpop.xlane.xlu0 %4358
    %v4360 = vsel %vm80, %v4356, 0.0
    %4361 = vadd.xlane.f32.xlu0 %v4360
    %v4362 = vpop.xlane.xlu0 %4361
    %v4363 = vmul.f32 %v4359, %v87
    %v4364 = vmul.f32 %v4362, %v87
    %v4365 = vadd.f32 %v4363, 1e-12
    %v4366 = vadd.f32 %v4364, 1e-12
    %v4367 = vrsqrt.pop %v4365
    %v4368 = vrsqrt.pop %v4366
    %v4369 = vmul.f32 %v4353, %v4367
    %v4370 = vmul.f32 %v4354, %v4368
    %v4372 = vlaneseq
    %v4373 = vshrl.u32 %v4372, 7
    %v4374 = vsub.s32 0, %v4373
    %v4375 = vrot.slane %v4342, %v4374
    %v4377 = vmul.f32 %v4375, %v4369
    %v4378 = vmul.f32 %v4375, %v4370
    %v4380 = vlaneseq
    %v4381 = vshrl.u32 %v4380, 7
    %v4382 = vsub.s32 0, %v4381
    %v4383 = vrot.slane %v4344, %v4382
    %v4385 = vadd.f32 %v4377, %v4383
    %v4386 = vadd.f32 %v4378, %v4383
    %v4387 = vld [vmem:[%s19] sm:$0xf]
    %v4388 = vld [vmem:[%s19 + $0x4] sm:$0xf]
    %v4389 = vld [vmem:[%s19 + $0x8] sm:$0xf]
    %v4390 = vld [vmem:[%s19 + $0xc] sm:$0xf]
    %v4391 = vpack.c.bf16 %v4385, %v4385
    %v4392 = vpack.c.bf16 %v4386, %v4386
    %v4393 = vld [vmem:[%s20] sm:$0x1]
    %v4395 = vlaneseq
    %v4396 = vshrl.u32 %v4395, 7
    %v4397 = vsub.s32 0, %v4396
    %v4398 = vrot.slane %v4393, %v4397
    %v4402 = vunpack.c.l.b16 %v4391
    %v4403 = vunpack.c.l.b16 %v4392
    %v4404 = vrot.slane %v4403, 7
    %vm4405 = vcmask 1041409
    %v4406 = vsel %vm4405, %v4404, %v4402
    %v4407 = vpack.c.b16 %v4406, %v4406
    %v4412 = vunpack.c.l.b16 %v4387
    %v4413 = vunpack.c.l.b16 %v4388
    %v4414 = vunpack.c.l.b16 %v4389
    %v4415 = vunpack.c.l.b16 %v4390
    %v4416 = vpack.c.b16 %v4413, %v4412
    %v4417 = vpack.c.b16 %v4415, %v4414
    %v4421 = vsel %vm80, %v4407, 0
    %4423 = vmatprep.subr.bf16.mxu0 0
    %4424 = vmatpush1.bf16.msra.mxu0 %v4416
    %4425 = vmatprep.subr.bf16.mxu0 0
    %4426 = vmatpush1.bf16.msra.mxu0 %v4417
    %4427 = vmatprep.subr.bf16.mxu0 0
    %4428 = vmatpush1.bf16.msra.mxu0 0
    %4429 = vmatprep.subr.bf16.mxu0 0
    %4430 = vmatpush1.bf16.msra.mxu0 0
    %4431 = vmatprep.subr.bf16.mxu0 0
    %4432 = vmatpush1.bf16.msra.mxu0 0
    %4433 = vmatprep.subr.bf16.mxu0 0
    %4434 = vmatpush1.bf16.msra.mxu0 0
    %4435 = vmatprep.subr.bf16.mxu0 0
    %4436 = vmatpush1.bf16.msra.mxu0 0
    %4437 = vmatprep.subr.bf16.mxu0 0
    %4438 = vmatpush1.bf16.msra.mxu0 0
    %4439 = vmatprep.subr.bf16.mxu0 0
    %4440 = vmatpush1.bf16.msra.mxu0 0
    %4441 = vmatprep.subr.bf16.mxu0 0
    %4442 = vmatpush1.bf16.msra.mxu0 0
    %4443 = vmatprep.subr.bf16.mxu0 0
    %4444 = vmatpush1.bf16.msra.mxu0 0
    %4445 = vmatprep.subr.bf16.mxu0 0
    %4446 = vmatpush1.bf16.msra.mxu0 0
    %4447 = vmatprep.subr.bf16.mxu0 0
    %4448 = vmatpush1.bf16.msra.mxu0 0
    %4449 = vmatprep.subr.bf16.mxu0 0
    %4450 = vmatpush1.bf16.msra.mxu0 0
    %4451 = vmatprep.subr.bf16.mxu0 0
    %4452 = vmatpush1.bf16.msra.mxu0 0
    %4453 = vmatprep.subr.bf16.mxu0 0
    %4454 = vmatpush1.bf16.msra.mxu0 0
    %4455 = vmatprep.mubr.bf16.mxu0 0
    %4456 = vmatmul.mubr.bf16.gmra.mrb[0].mxu0 %v4421
    %v4457 = vpop.f32.mrb[0].mxu0
    %v4458 = vadd.f32 %v4398, %v4457
    %v4459 = vpop.f32.mrb[0].mxu0
    %v4460 = vpop.f32.mrb[0].mxu0
    %v4461 = vpop.f32.mrb[0].mxu0
    %4462 = vdwg.mxu0
    %v4463 = vtanh.pop %v4458
    %v4464 = vld [vmem:[%s21] sm:$0xf]
    %v4465 = vld [vmem:[%s21 + $0x4] sm:$0xf]
    %v4466 = vld [vmem:[%s21 + $0x8] sm:$0xf]
    %v4467 = vld [vmem:[%s21 + $0xc] sm:$0xf]
    %v4468 = vpack.c.bf16 %v4463, %v4463
    %v4469 = vld [vmem:[%s22] sm:$0x1]
    %v4471 = vlaneseq
    %v4472 = vshrl.u32 %v4471, 7
    %v4473 = vsub.s32 0, %v4472
    %v4474 = vrot.slane %v4469, %v4473
    %v4480 = vunpack.c.l.b16 %v4464
    %v4481 = vunpack.c.l.b16 %v4465
    %v4482 = vunpack.c.l.b16 %v4466
    %v4483 = vunpack.c.l.b16 %v4467
    %v4484 = vpack.c.b16 %v4481, %v4480
    %v4485 = vpack.c.b16 %v4483, %v4482
    %v4489 = vsel %vm80, %v4468, 0
    %4491 = vmatprep.subr.bf16.mxu0 0
    %4492 = vmatpush1.bf16.msra.mxu0 %v4484
    %4493 = vmatprep.subr.bf16.mxu0 0
    %4494 = vmatpush1.bf16.msra.mxu0 %v4485
    %4495 = vmatprep.subr.bf16.mxu0 0
    %4496 = vmatpush1.bf16.msra.mxu0 0
    %4497 = vmatprep.subr.bf16.mxu0 0
    %4498 = vmatpush1.bf16.msra.mxu0 0
    %4499 = vmatprep.subr.bf16.mxu0 0
    %4500 = vmatpush1.bf16.msra.mxu0 0
    %4501 = vmatprep.subr.bf16.mxu0 0
    %4502 = vmatpush1.bf16.msra.mxu0 0
    %4503 = vmatprep.subr.bf16.mxu0 0
    %4504 = vmatpush1.bf16.msra.mxu0 0
    %4505 = vmatprep.subr.bf16.mxu0 0
    %4506 = vmatpush1.bf16.msra.mxu0 0
    %4507 = vmatprep.subr.bf16.mxu0 0
    %4508 = vmatpush1.bf16.msra.mxu0 0
    %4509 = vmatprep.subr.bf16.mxu0 0
    %4510 = vmatpush1.bf16.msra.mxu0 0
    %4511 = vmatprep.subr.bf16.mxu0 0
    %4512 = vmatpush1.bf16.msra.mxu0 0
    %4513 = vmatprep.subr.bf16.mxu0 0
    %4514 = vmatpush1.bf16.msra.mxu0 0
    %4515 = vmatprep.subr.bf16.mxu0 0
    %4516 = vmatpush1.bf16.msra.mxu0 0
    %4517 = vmatprep.subr.bf16.mxu0 0
    %4518 = vmatpush1.bf16.msra.mxu0 0
    %4519 = vmatprep.subr.bf16.mxu0 0
    %4520 = vmatpush1.bf16.msra.mxu0 0
    %4521 = vmatprep.subr.bf16.mxu0 0
    %4522 = vmatpush1.bf16.msra.mxu0 0
    %4523 = vmatprep.mubr.bf16.mxu0 0
    %4524 = vmatmul.mubr.bf16.gmra.mrb[0].mxu0 %v4489
    %v4525 = vpop.f32.mrb[0].mxu0
    %v4526 = vadd.f32 %v4474, %v4525
    %v4527 = vpop.f32.mrb[0].mxu0
    %v4528 = vpop.f32.mrb[0].mxu0
    %v4529 = vpop.f32.mrb[0].mxu0
    %4530 = vdwg.mxu0
    %4531 = vst [vmem:[#allocation2] sm:$0x3] %v4526
    // Predicated region
    $region94: #{bert_forward.1} parent=1 // pred_check
      _
    $region95: #{bert_forward.1} parent=1 // pred_check_branch
      %4533 = sbr.rel (0) target = $region97
    $region96: #{bert_forward.1} parent=1 // pred_region
      %s4535 = ssub.s32 32, 32
      %4536 = vsyncadd [#allocation3], %s4535
      %s4538 = sshll.u32 [#allocation2], 4
      %s4539 = int_to_ptr.vmem [resolvable:$true] %s4538
      %4541 = dma.vmem_to_hbm [thread:$0]  %s4539, 32, %s23, [#allocation3]
    $region97: #{bert_forward.1} parent=1 // pred_fallthru
      _
    // Predicated region
    $region98: #{bert_forward.1} parent=1 // pred_check
      _
    $region99: #{bert_forward.1} parent=1 // pred_check_branch
      %4543 = sbr.rel (0) target = $region101
    $region100: #{bert_forward.1} parent=1 // pred_region
      %4544 = dma.done [#allocation3], 32
    $region101: #{bert_forward.1} parent=1 // pred_fallthru
      _
    %4545 = vsyncpa [#allocation3], 1

</llo_original>
